<compile_context>
chip_gen: v6e
topology: v6e:2x2x1
jax: 0.10.0
libtpu: 0.0.40
codegen_flags: <defaults>
</compile_context>

<pallas_src>
import functools

import jax
import jax.numpy as jnp
import numpy as np
from jax.experimental import pallas as pl
from jax.experimental.pallas import tpu as pltpu

# ----------------------------- configuration -----------------------------
NUM_AGENTS = 5
ACTION_DIM = 3
IN_CHANNELS = 4
HIDDEN = 16                       # hidden_channels
HEADS = 8
HC = HIDDEN * HEADS               # 128 (per-layer output width, concat=True)
NODES = 8                         # nodes per graph (>= NUM_AGENTS)
NUM_GRAPHS = 4                    # small batch of graphs
ACT = NUM_AGENTS * ACTION_DIM     # 15
ACT_PAD = 16                      # lane-friendly padding of the action vector
INPUT_DIM = HC * (NUM_AGENTS + 1) + ACT   # 783
FC1_OUT = HIDDEN * 4              # 64


def _dot(a, b):
    return jnp.dot(a, b, preferred_element_type=jnp.float32)


# ------------------------------ kernel body -------------------------------
def gat_critic_kernel(x_ref, adjea_ref, act_ref,
                      w1_ref, w23_ref, asd_ref, ecl_ref, bias_ref,
                      wag_ref, wgr_ref, wact_ref, f1b_ref, f2w_ref, f2b_ref,
                      expand_ref, repmask_ref, hselmask_ref, sumsel_ref, rsel_ref,
                      q_ref):
    x = x_ref[0]                      # [MLOC, IN_CHANNELS]
    act = act_ref[0]                  # [G, ACT_PAD]
    expand = expand_ref[...]          # [MLOC, S]  expand[n, s] = (s//HEADS == n)
    repmask = repmask_ref[...]        # [S, MLOC]  repmask[s, n] = (s//HEADS == n)
    hselmask = hselmask_ref[...]      # [S, HC]    (s % HEADS == c // HIDDEN)
    sumsel = sumsel_ref[...]          # [S, S]     (s % HEADS == s' % HEADS)
    S = expand.shape[1]
    G = act.shape[0]

    adj_l1 = adjea_ref[0, 0]          # [MLOC, S] lane-expanded, lane = src*HEADS+head
    ea_l1 = adjea_ref[0, 1]
    adj_l2 = adjea_ref[0, 2]
    ea_l2 = adjea_ref[0, 3]

    def gat_layer(hin, w, l, adj_l, ea_l):
        """Dense GATConv (heads=HEADS, concat=True, edge_dim=1) + ReLU,
        all heads at once in a lane-packed [dst, src*HEADS+head] slab."""
        h = _dot(hin, w)                                   # [MLOC, HC]
        both = _dot(h, asd_ref[l])                         # [MLOC, 2S] (src | dst terms)
        src_t = both[:, :S]                                # a_src[i, s % HEADS]
        dst_t = both[:, S:]                                # a_dst[i, s % HEADS]
        # fold the source term to a per-lane row: a_src[s//HEADS, s%HEADS]
        a_s = jnp.sum(expand * src_t, axis=0, keepdims=True)       # [1, S]
        lg = a_s + dst_t + ea_l * ecl_ref[l]                       # [MLOC, S]
        lg = jnp.where(lg > 0, lg, 0.2 * lg)                       # LeakyReLU(0.2)
        lg = jnp.where(adj_l > 0, lg, -1e30)                       # mask BEFORE max
        m = jnp.max(lg, axis=1, keepdims=True)
        p = jnp.exp(lg - m) * adj_l                                # masked, unnormalized
        den = _dot(p, sumsel)                                      # per-head sums, lane-expanded
        pn = p * (1.0 / jnp.maximum(den, 1e-16))                   # normalized attention
        hsel = _dot(repmask, h) * hselmask                         # [S, HC] head-masked features
        out = _dot(pn, hsel) + bias_ref[l]                         # [MLOC, HC]
        return jnp.maximum(out, 0.0)

    h1 = gat_layer(x, w1_ref[...], 0, adj_l1, ea_l1)
    h2 = gat_layer(h1, w23_ref[0], 1, adj_l2, ea_l2)
    h3 = gat_layer(h2, w23_ref[1], 2, adj_l2, ea_l2)

    # ---- readout: one selector matmul gives mean-pool + every agent row ----
    R = _dot(rsel_ref[...], h3)                                    # [(A+1)*G, HC]
    graph_emb = R[:G]                                              # [G, HC]
    acc = _dot(graph_emb, wgr_ref[...]) + _dot(act, wact_ref[...]) + f1b_ref[...]
    parts = [_dot(R[G + a * G:G + (a + 1) * G], wag_ref[a])
             for a in range(NUM_AGENTS)]                           # independent partials
    while len(parts) > 1:                                          # tree sum (no serial chain)
        nxt = [parts[i] + parts[i + 1] for i in range(0, len(parts) - 1, 2)]
        if len(parts) % 2:
            nxt.append(parts[-1])
        parts = nxt
    hid = jnp.maximum(acc + parts[0], 0.0)                         # [G, FC1_OUT]
    q_ref[0] = _dot(hid, f2w_ref[...]) + f2b_ref[...]              # [G, 1]


# ------------------------- host-side preparation ---------------------------
def pick_graphs_per_block(batch):
    """v5e/v6e: one block with all graphs (single TC). v7x: 2 'parallel' grid
    steps, each with the largest possible block (one per TensorCore)."""
    try:
        kind = jax.devices()[0].device_kind.lower()
    except Exception:
        kind = ""
    if "v7" in kind and batch % 2 == 0 and batch >= 2:
        return batch // 2
    return batch


def prepare_constants(graphs_per_block):
    """Selector matrices, built once with numpy (no in-kernel iota chains)."""
    G = graphs_per_block
    MLOC = G * NODES
    S = MLOC * HEADS
    s = np.arange(S)
    n = np.arange(MLOC)
    c = np.arange(HC)
    expand = (s[None, :] // HEADS == n[:, None]).astype(np.float32)        # [MLOC, S]
    repmask = (s[:, None] // HEADS == n[None, :]).astype(np.float32)       # [S, MLOC]
    hselmask = (s[:, None] % HEADS == c[None, :] // HIDDEN).astype(np.float32)  # [S, HC]
    sumsel = (s[:, None] % HEADS == s[None, :] % HEADS).astype(np.float32)  # [S, S]
    rsel = np.zeros(((NUM_AGENTS + 1) * G, MLOC), np.float32)
    for g in range(G):
        rsel[g, g * NODES:(g + 1) * NODES] = 1.0 / NODES                   # mean pool rows
    for a in range(NUM_AGENTS):
        for g in range(G):
            rsel[G + a * G + g, g * NODES + a] = 1.0                       # agent rows
    return tuple(jnp.asarray(m) for m in (expand, repmask, hselmask, sumsel, rsel))


def prepare_params(params, graphs_per_block):
    """One-time parameter re-layout (done outside the jitted forward)."""
    (w1, s1, d1, e1, b1, w2, s2, d2, e2, b2, w3, s3, d3, e3, b3,
     f1w, f1b, f2w, f2b) = params
    G = graphs_per_block
    MLOC = G * NODES
    S = MLOC * HEADS

    def asd_lane(asrc, adst):         # fused, lane-tiled attention weight [HC, 2S]
        return jnp.concatenate(
            [jnp.tile(asrc, (1, MLOC)), jnp.tile(adst, (1, MLOC))], axis=1)

    def ecoef_lane(e):                # [HEADS] -> [1, S], lane s holds e[s % HEADS]
        return jnp.tile(e, MLOC).reshape(1, S)

    asd = jnp.stack([asd_lane(s1, d1), asd_lane(s2, d2), asd_lane(s3, d3)])   # [3, HC, 2S]
    ecl = jnp.stack([ecoef_lane(e1), ecoef_lane(e2), ecoef_lane(e3)])         # [3, 1, S]
    bias = jnp.stack([b1.reshape(1, HC), b2.reshape(1, HC), b3.reshape(1, HC)])
    w23 = jnp.stack([w2, w3])                                                 # [2, HC, HC]

    wag = f1w[:NUM_AGENTS * HC].reshape(NUM_AGENTS, HC, FC1_OUT)              # agent blocks
    wgr = f1w[NUM_AGENTS * HC:(NUM_AGENTS + 1) * HC]                          # graph block
    wact = jnp.zeros((ACT_PAD, FC1_OUT), jnp.float32).at[:ACT].set(
        f1w[(NUM_AGENTS + 1) * HC:])                                          # padded action block
    return (w1, w23, asd, ecl, bias, wag, wgr, wact,
            f1b.reshape(1, FC1_OUT), f2w, f2b.reshape(1, 1))


# ------------------------------ wrapper ------------------------------------
@functools.partial(jax.jit, static_argnames=("graphs_per_block",))
def gat_critic_forward(x, adj, ea, actions, kparams, consts, *, graphs_per_block):
    B = x.shape[0]
    G = graphs_per_block
    assert B % G == 0
    NB = B // G
    MLOC = G * NODES
    S = MLOC * HEADS
    f32 = jnp.float32

    # ---- data prep: block-diagonal packing, self-loops, lane expansion -----
    x_r = x.reshape(NB, MLOC, IN_CHANNELS)
    adj_g = adj.reshape(NB, G, NODES, NODES)
    ea_g = ea.reshape(NB, G, NODES, NODES)
    adj_bd = jnp.zeros((NB, MLOC, MLOC), f32)
    ea_bd = jnp.zeros((NB, MLOC, MLOC), f32)
    for g in range(G):
        sl = slice(g * NODES, (g + 1) * NODES)
        adj_bd = adj_bd.at[:, sl, sl].set(adj_g[:, g])
        ea_bd = ea_bd.at[:, sl, sl].set(ea_g[:, g])

    eye = jnp.eye(MLOC, dtype=f32)
    adj_ns = adj_bd * (1.0 - eye)
    deg = jnp.sum(adj_ns, axis=2, keepdims=True)
    loop_attr = jnp.sum(adj_ns * ea_bd, axis=2, keepdims=True) / jnp.maximum(deg, 1.0)
    adj_sl = jnp.maximum(adj_ns, eye)                 # self loops, fill_value='mean'
    ea_sl = ea_bd * adj_ns + eye * loop_attr

    def lane(m):                                      # repeat each src column HEADS times
        return jnp.repeat(m, HEADS, axis=-1)          # [NB, MLOC, S]

    adjea = jnp.stack([lane(adj_bd), lane(ea_bd), lane(adj_sl), lane(ea_sl)], axis=1)

    act_pad = jnp.zeros((B, ACT_PAD), f32).at[:, :ACT].set(actions)
    act_r = act_pad.reshape(NB, G, ACT_PAD)

    statics = list(kparams) + list(consts)
    data_specs = [
        pl.BlockSpec((1, MLOC, IN_CHANNELS), lambda nb: (nb, 0, 0)),
        pl.BlockSpec((1, 4, MLOC, S), lambda nb: (nb, 0, 0, 0)),
        pl.BlockSpec((1, G, ACT_PAD), lambda nb: (nb, 0, 0)),
    ]
    static_specs = [pl.BlockSpec(p.shape, (lambda nb, n=p.ndim: (0,) * n))
                    for p in statics]

    out = pl.pallas_call(
        gat_critic_kernel,
        out_shape=jax.ShapeDtypeStruct((NB, G, 1), jnp.float32),
        grid_spec=pltpu.PrefetchScalarGridSpec(
            num_scalar_prefetch=0,
            grid=(NB,),
            in_specs=data_specs + static_specs,
            out_specs=pl.BlockSpec((1, G, 1), lambda nb: (nb, 0, 0)),
        ),
        compiler_params=pltpu.CompilerParams(dimension_semantics=("parallel",)),
    )(x_r, adjea, act_r, *statics)
    return out.reshape(B, 1)


# ------------------------- deterministic parameters -------------------------
def init_params(key):
    keys = jax.random.split(key, 32)
    it = iter(keys)

    def nrm(shape, scale=0.1):
        return (scale * jax.random.normal(next(it), shape)).astype(jnp.float32)

    eyeH = jnp.eye(HEADS, dtype=jnp.float32)
    params = []
    fin = IN_CHANNELS
    for _ in range(3):
        w = nrm((fin, HC))                       # lin.weight^T
        att_src = nrm((HEADS, HIDDEN))
        att_dst = nrm((HEADS, HIDDEN))
        att_edge = nrm((HEADS, HIDDEN))
        lin_edge = nrm((HC,))                    # Linear(1, HC).weight (flattened)
        bias = nrm((HC,))
        # block-diag embeddings so per-head dot products become plain matmuls
        asrc = (att_src[:, :, None] * eyeH[:, None, :]).reshape(HC, HEADS)
        adst = (att_dst[:, :, None] * eyeH[:, None, :]).reshape(HC, HEADS)
        ecoef = (lin_edge.reshape(HEADS, HIDDEN) * att_edge).sum(-1)   # [HEADS]
        params += [w, asrc, adst, ecoef, bias]
        fin = HC
    params += [nrm((INPUT_DIM, FC1_OUT)), nrm((FC1_OUT,)), nrm((FC1_OUT, 1)), nrm((1,))]
    return params


# ------------------------------ pure-JAX reference --------------------------
def ref_forward(x, adj, ea, actions, params):
    B = x.shape[0]
    (w1, s1, d1, e1, b1, w2, s2, d2, e2, b2, w3, s3, d3, e3, b3,
     f1w, f1b, f2w, f2b) = params

    def layer(xx, aa, ee, w, asrc, adst, ecoef, bias):
        h = xx @ w
        a_s, a_d = h @ asrc, h @ adst
        logits = (a_s[:, None, :, :] + a_d[:, :, None, :]
                  + ee[..., None] * ecoef[None, None, None, :])
        logits = jnp.where(logits > 0, logits, 0.2 * logits)
        mask = aa[..., None] > 0
        logits = jnp.where(mask, logits, -1e30)
        m = jnp.max(logits, axis=2, keepdims=True)
        p = jnp.exp(logits - m) * mask.astype(jnp.float32)
        alpha = p / jnp.maximum(jnp.sum(p, axis=2, keepdims=True), 1e-16)
        h4 = h.reshape(B, NODES, HEADS, HIDDEN)
        out = jnp.einsum('bijh,bjhc->bihc', alpha, h4).reshape(B, NODES, HC)
        return out + bias

    h1 = jax.nn.relu(layer(x, adj, ea, w1, s1, d1, e1, b1))
    eye = jnp.eye(NODES, dtype=jnp.float32)
    adj_ns = adj * (1 - eye)
    deg = adj_ns.sum(axis=2, keepdims=True)
    loop_attr = (adj_ns * ea).sum(axis=2, keepdims=True) / jnp.maximum(deg, 1.0)
    adj_sl = jnp.maximum(adj_ns, eye)
    ea_sl = ea * adj_ns + eye * loop_attr
    h2 = jax.nn.relu(layer(h1, adj_sl, ea_sl, w2, s2, d2, e2, b2))
    h3 = jax.nn.relu(layer(h2, adj_sl, ea_sl, w3, s3, d3, e3, b3))
    graph_emb = h3.mean(axis=1)
    agent_flat = h3[:, :NUM_AGENTS, :].reshape(B, NUM_AGENTS * HC)
    act_flat = actions.reshape(B, NUM_AGENTS * ACTION_DIM)
    combined = jnp.concatenate([agent_flat, graph_emb, act_flat], axis=1)
    hid = jax.nn.relu(combined @ f1w + f1b)
    return hid @ f2w + f2b


# ---------------------------------- main -------------------------------------
if __name__ == "__main__":
    key = jax.random.PRNGKey(0)
    k1, k2, k3, k4, kp = jax.random.split(key, 5)
    B = NUM_GRAPHS

    x = jax.random.normal(k1, (B, NODES, IN_CHANNELS), dtype=jnp.float32)
    eye = jnp.eye(NODES, dtype=jnp.float32)
    adj = (jax.random.uniform(k2, (B, NODES, NODES)) < 0.4).astype(jnp.float32)
    adj = adj * (1.0 - eye)                            # no self loops in the input graph
    ea = jax.random.uniform(k3, (B, NODES, NODES), dtype=jnp.float32) * adj
    actions = jax.random.normal(k4, (B, NUM_AGENTS * ACTION_DIM), dtype=jnp.float32)

    params = init_params(kp)

    gpb = pick_graphs_per_block(B)                     # generation-aware grid sizing
    consts = prepare_constants(gpb)                    # host-built selector matrices
    kparams = prepare_params(params, gpb)              # one-time parameter re-layout

    q = gat_critic_forward(x, adj, ea, actions, kparams, consts, graphs_per_block=gpb)
    q = jax.block_until_ready(q)

    q_ref = ref_forward(x, adj, ea, actions, params)
    assert q.shape == (B, 1)
    np.testing.assert_allclose(np.asarray(q), np.asarray(q_ref), rtol=2e-3, atol=2e-3)
    print("KERNEL_OK")
</pallas_src>

<mosaic_0001>
module attributes {stable_mosaic.version = 11 : i64} {
  func.func @gat_critic_kernel(%arg0: i32, %arg1: memref<1x32x4xf32, #tpu.memory_space<vmem>>, %arg2: memref<1x4x32x256xf32, #tpu.memory_space<vmem>>, %arg3: memref<1x4x16xf32, #tpu.memory_space<vmem>>, %arg4: memref<4x128xf32, #tpu.memory_space<vmem>>, %arg5: memref<2x128x128xf32, #tpu.memory_space<vmem>>, %arg6: memref<3x128x512xf32, #tpu.memory_space<vmem>>, %arg7: memref<3x1x256xf32, #tpu.memory_space<vmem>>, %arg8: memref<3x1x128xf32, #tpu.memory_space<vmem>>, %arg9: memref<5x128x64xf32, #tpu.memory_space<vmem>>, %arg10: memref<128x64xf32, #tpu.memory_space<vmem>>, %arg11: memref<16x64xf32, #tpu.memory_space<vmem>>, %arg12: memref<1x64xf32, #tpu.memory_space<vmem>>, %arg13: memref<64x1xf32, #tpu.memory_space<vmem>>, %arg14: memref<1x1xf32, #tpu.memory_space<vmem>>, %arg15: memref<32x256xf32, #tpu.memory_space<vmem>>, %arg16: memref<256x32xf32, #tpu.memory_space<vmem>>, %arg17: memref<256x128xf32, #tpu.memory_space<vmem>>, %arg18: memref<256x256xf32, #tpu.memory_space<vmem>>, %arg19: memref<24x32xf32, #tpu.memory_space<vmem>>, %arg20: memref<1x4x1xf32, #tpu.memory_space<vmem>>) attributes {dimension_semantics = [#tpu.dimension_semantics<parallel>], iteration_bounds = array<i64: 1>, scalar_prefetch = 0 : i64, scratch_operands = 0 : i64, tpu.core_type = #tpu.core_type<tc>, window_params = [{transform_indices = @transform_0, window_bounds = array<i64: 1, 32, 4>}, {transform_indices = @transform_1, window_bounds = array<i64: 1, 4, 32, 256>}, {transform_indices = @transform_2, window_bounds = array<i64: 1, 4, 16>}, {pipeline_mode = #tpu.pipeline_mode<synchronous>, transform_indices = @transform_3, window_bounds = array<i64: 4, 128>}, {pipeline_mode = #tpu.pipeline_mode<synchronous>, transform_indices = @transform_4, window_bounds = array<i64: 2, 128, 128>}, {pipeline_mode = #tpu.pipeline_mode<synchronous>, transform_indices = @transform_5, window_bounds = array<i64: 3, 128, 512>}, {pipeline_mode = #tpu.pipeline_mode<synchronous>, transform_indices = @transform_6, window_bounds = array<i64: 3, 1, 256>}, {pipeline_mode = #tpu.pipeline_mode<synchronous>, transform_indices = @transform_7, window_bounds = array<i64: 3, 1, 128>}, {pipeline_mode = #tpu.pipeline_mode<synchronous>, transform_indices = @transform_8, window_bounds = array<i64: 5, 128, 64>}, {pipeline_mode = #tpu.pipeline_mode<synchronous>, transform_indices = @transform_9, window_bounds = array<i64: 128, 64>}, {pipeline_mode = #tpu.pipeline_mode<synchronous>, transform_indices = @transform_10, window_bounds = array<i64: 16, 64>}, {pipeline_mode = #tpu.pipeline_mode<synchronous>, transform_indices = @transform_11, window_bounds = array<i64: 1, 64>}, {pipeline_mode = #tpu.pipeline_mode<synchronous>, transform_indices = @transform_12, window_bounds = array<i64: 64, 1>}, {pipeline_mode = #tpu.pipeline_mode<synchronous>, transform_indices = @transform_13, window_bounds = array<i64: 1, 1>}, {pipeline_mode = #tpu.pipeline_mode<synchronous>, transform_indices = @transform_14, window_bounds = array<i64: 32, 256>}, {pipeline_mode = #tpu.pipeline_mode<synchronous>, transform_indices = @transform_15, window_bounds = array<i64: 256, 32>}, {pipeline_mode = #tpu.pipeline_mode<synchronous>, transform_indices = @transform_16, window_bounds = array<i64: 256, 128>}, {pipeline_mode = #tpu.pipeline_mode<synchronous>, transform_indices = @transform_17, window_bounds = array<i64: 256, 256>}, {pipeline_mode = #tpu.pipeline_mode<synchronous>, transform_indices = @transform_18, window_bounds = array<i64: 24, 32>}, {transform_indices = @transform_19, window_bounds = array<i64: 1, 4, 1>}]} {
    %c0 = arith.constant 0 : index
    %c0_0 = arith.constant 0 : index
    %c0_1 = arith.constant 0 : index
    %0 = vector.load %arg1[%c0, %c0_0, %c0_1] : memref<1x32x4xf32, #tpu.memory_space<vmem>>, vector<1x32x4xf32>
    %1 = vector.shape_cast %0 : vector<1x32x4xf32> to vector<32x4xf32>
    %c0_2 = arith.constant 0 : index
    %c0_3 = arith.constant 0 : index
    %c0_4 = arith.constant 0 : index
    %2 = vector.load %arg3[%c0_2, %c0_3, %c0_4] : memref<1x4x16xf32, #tpu.memory_space<vmem>>, vector<1x4x16xf32>
    %3 = vector.shape_cast %2 : vector<1x4x16xf32> to vector<4x16xf32>
    %c0_5 = arith.constant 0 : index
    %c0_6 = arith.constant 0 : index
    %4 = vector.load %arg15[%c0_5, %c0_6] : memref<32x256xf32, #tpu.memory_space<vmem>>, vector<32x256xf32>
    %c0_7 = arith.constant 0 : index
    %c0_8 = arith.constant 0 : index
    %5 = vector.load %arg16[%c0_7, %c0_8] : memref<256x32xf32, #tpu.memory_space<vmem>>, vector<256x32xf32>
    %c0_9 = arith.constant 0 : index
    %c0_10 = arith.constant 0 : index
    %6 = vector.load %arg17[%c0_9, %c0_10] : memref<256x128xf32, #tpu.memory_space<vmem>>, vector<256x128xf32>
    %c0_11 = arith.constant 0 : index
    %c0_12 = arith.constant 0 : index
    %7 = vector.load %arg18[%c0_11, %c0_12] : memref<256x256xf32, #tpu.memory_space<vmem>>, vector<256x256xf32>
    %c0_13 = arith.constant 0 : index
    %c0_14 = arith.constant 0 : index
    %c0_15 = arith.constant 0 : index
    %c0_16 = arith.constant 0 : index
    %8 = vector.load %arg2[%c0_13, %c0_14, %c0_15, %c0_16] : memref<1x4x32x256xf32, #tpu.memory_space<vmem>>, vector<1x1x32x256xf32>
    %9 = vector.shape_cast %8 : vector<1x1x32x256xf32> to vector<32x256xf32>
    %c0_17 = arith.constant 0 : index
    %c1 = arith.constant 1 : index
    %c0_18 = arith.constant 0 : index
    %c0_19 = arith.constant 0 : index
    %10 = vector.load %arg2[%c0_17, %c1, %c0_18, %c0_19] : memref<1x4x32x256xf32, #tpu.memory_space<vmem>>, vector<1x1x32x256xf32>
    %11 = vector.shape_cast %10 : vector<1x1x32x256xf32> to vector<32x256xf32>
    %c0_20 = arith.constant 0 : index
    %c2 = arith.constant 2 : index
    %c0_21 = arith.constant 0 : index
    %c0_22 = arith.constant 0 : index
    %12 = vector.load %arg2[%c0_20, %c2, %c0_21, %c0_22] : memref<1x4x32x256xf32, #tpu.memory_space<vmem>>, vector<1x1x32x256xf32>
    %13 = vector.shape_cast %12 : vector<1x1x32x256xf32> to vector<32x256xf32>
    %c0_23 = arith.constant 0 : index
    %c3 = arith.constant 3 : index
    %c0_24 = arith.constant 0 : index
    %c0_25 = arith.constant 0 : index
    %14 = vector.load %arg2[%c0_23, %c3, %c0_24, %c0_25] : memref<1x4x32x256xf32, #tpu.memory_space<vmem>>, vector<1x1x32x256xf32>
    %15 = vector.shape_cast %14 : vector<1x1x32x256xf32> to vector<32x256xf32>
    %c0_26 = arith.constant 0 : index
    %c0_27 = arith.constant 0 : index
    %16 = vector.load %arg4[%c0_26, %c0_27] : memref<4x128xf32, #tpu.memory_space<vmem>>, vector<4x128xf32>
    %cst = arith.constant dense<0.000000e+00> : vector<32x128xf32>
    %17 = tpu.matmul %1, %16, %cst {dimension_numbers = #tpu.dot_dimension_numbers<[1], [0], [0], [1], [0, 0, 1, 1], [], []>} : vector<32x4xf32>, vector<4x128xf32>, vector<32x128xf32> -> vector<32x128xf32>
    %c0_28 = arith.constant 0 : index
    %c0_29 = arith.constant 0 : index
    %c0_30 = arith.constant 0 : index
    %18 = vector.load %arg6[%c0_28, %c0_29, %c0_30] : memref<3x128x512xf32, #tpu.memory_space<vmem>>, vector<1x128x512xf32>
    %19 = vector.shape_cast %18 : vector<1x128x512xf32> to vector<128x512xf32>
    %cst_31 = arith.constant dense<0.000000e+00> : vector<32x512xf32>
    %20 = tpu.matmul %17, %19, %cst_31 {dimension_numbers = #tpu.dot_dimension_numbers<[1], [0], [0], [1], [0, 0, 1, 1], [], []>} : vector<32x128xf32>, vector<128x512xf32>, vector<32x512xf32> -> vector<32x512xf32>
    %21 = vector.extract_strided_slice %20 {offsets = [0, 0], sizes = [32, 256], strides = [1, 1]} : vector<32x512xf32> to vector<32x256xf32>
    %22 = vector.extract_strided_slice %20 {offsets = [0, 256], sizes = [32, 256], strides = [1, 1]} : vector<32x512xf32> to vector<32x256xf32>
    %23 = arith.mulf %4, %21 : vector<32x256xf32>
    %cst_32 = arith.constant dense<0.000000e+00> : vector<256xf32>
    %24 = vector.multi_reduction <add>, %23, %cst_32 [0] : vector<32x256xf32> to vector<256xf32>
    %25 = vector.shape_cast %24 : vector<256xf32> to vector<1x256xf32>
    %26 = vector.broadcast %25 : vector<1x256xf32> to vector<32x256xf32>
    %27 = arith.addf %26, %22 : vector<32x256xf32>
    %c0_33 = arith.constant 0 : index
    %c0_34 = arith.constant 0 : index
    %c0_35 = arith.constant 0 : index
    %28 = vector.load %arg7[%c0_33, %c0_34, %c0_35] : memref<3x1x256xf32, #tpu.memory_space<vmem>>, vector<1x1x256xf32>
    %29 = vector.shape_cast %28 : vector<1x1x256xf32> to vector<1x256xf32>
    %30 = vector.broadcast %29 : vector<1x256xf32> to vector<32x256xf32>
    %31 = arith.mulf %11, %30 : vector<32x256xf32>
    %32 = arith.addf %27, %31 : vector<32x256xf32>
    %cst_36 = arith.constant 0.000000e+00 : f32
    %33 = vector.broadcast %cst_36 : f32 to vector<32x256xf32>
    %34 = arith.cmpf ogt, %32, %33 : vector<32x256xf32>
    %cst_37 = arith.constant 2.000000e-01 : f32
    %35 = vector.broadcast %cst_37 : f32 to vector<32x256xf32>
    %36 = arith.mulf %35, %32 : vector<32x256xf32>
    %37 = arith.select %34, %32, %36 : vector<32x256xi1>, vector<32x256xf32>
    %cst_38 = arith.constant 0.000000e+00 : f32
    %38 = vector.broadcast %cst_38 : f32 to vector<32x256xf32>
    %39 = arith.cmpf ogt, %9, %38 : vector<32x256xf32>
    %cst_39 = arith.constant -1.000000e+30 : f32
    %40 = vector.broadcast %cst_39 : f32 to vector<32x256xf32>
    %41 = arith.select %39, %37, %40 : vector<32x256xi1>, vector<32x256xf32>
    %cst_40 = arith.constant dense<0xFF800000> : vector<32xf32>
    %42 = vector.multi_reduction <maximumf>, %41, %cst_40 [1] : vector<32x256xf32> to vector<32xf32>
    %43 = vector.shape_cast %42 : vector<32xf32> to vector<32x1xf32>
    %44 = vector.broadcast %43 : vector<32x1xf32> to vector<32x256xf32>
    %45 = arith.subf %41, %44 : vector<32x256xf32>
    %46 = math.exp %45 : vector<32x256xf32>
    %47 = arith.mulf %46, %9 : vector<32x256xf32>
    %cst_41 = arith.constant dense<0.000000e+00> : vector<32x256xf32>
    %48 = tpu.matmul %47, %7, %cst_41 {dimension_numbers = #tpu.dot_dimension_numbers<[1], [0], [0], [1], [0, 0, 1, 1], [], []>} : vector<32x256xf32>, vector<256x256xf32>, vector<32x256xf32> -> vector<32x256xf32>
    %cst_42 = arith.constant 1.000000e-16 : f32
    %49 = vector.broadcast %cst_42 : f32 to vector<32x256xf32>
    %50 = arith.maximumf %48, %49 : vector<32x256xf32>
    %cst_43 = arith.constant 1.000000e+00 : f32
    %51 = vector.broadcast %cst_43 : f32 to vector<32x256xf32>
    %52 = arith.divf %51, %50 : vector<32x256xf32>
    %53 = arith.mulf %47, %52 : vector<32x256xf32>
    %cst_44 = arith.constant dense<0.000000e+00> : vector<256x128xf32>
    %54 = tpu.matmul %5, %17, %cst_44 {dimension_numbers = #tpu.dot_dimension_numbers<[1], [0], [0], [1], [0, 0, 1, 1], [], []>} : vector<256x32xf32>, vector<32x128xf32>, vector<256x128xf32> -> vector<256x128xf32>
    %55 = arith.mulf %54, %6 : vector<256x128xf32>
    %cst_45 = arith.constant dense<0.000000e+00> : vector<32x128xf32>
    %56 = tpu.matmul %53, %55, %cst_45 {dimension_numbers = #tpu.dot_dimension_numbers<[1], [0], [0], [1], [0, 0, 1, 1], [], []>} : vector<32x256xf32>, vector<256x128xf32>, vector<32x128xf32> -> vector<32x128xf32>
    %c0_46 = arith.constant 0 : index
    %c0_47 = arith.constant 0 : index
    %c0_48 = arith.constant 0 : index
    %57 = vector.load %arg8[%c0_46, %c0_47, %c0_48] : memref<3x1x128xf32, #tpu.memory_space<vmem>>, vector<1x1x128xf32>
    %58 = vector.shape_cast %57 : vector<1x1x128xf32> to vector<1x128xf32>
    %59 = vector.broadcast %58 : vector<1x128xf32> to vector<32x128xf32>
    %60 = arith.addf %56, %59 : vector<32x128xf32>
    %cst_49 = arith.constant 0.000000e+00 : f32
    %61 = vector.broadcast %cst_49 : f32 to vector<32x128xf32>
    %62 = arith.maximumf %60, %61 : vector<32x128xf32>
    %c0_50 = arith.constant 0 : index
    %c0_51 = arith.constant 0 : index
    %c0_52 = arith.constant 0 : index
    %63 = vector.load %arg5[%c0_50, %c0_51, %c0_52] : memref<2x128x128xf32, #tpu.memory_space<vmem>>, vector<1x128x128xf32>
    %64 = vector.shape_cast %63 : vector<1x128x128xf32> to vector<128x128xf32>
    %cst_53 = arith.constant dense<0.000000e+00> : vector<32x128xf32>
    %65 = tpu.matmul %62, %64, %cst_53 {dimension_numbers = #tpu.dot_dimension_numbers<[1], [0], [0], [1], [0, 0, 1, 1], [], []>} : vector<32x128xf32>, vector<128x128xf32>, vector<32x128xf32> -> vector<32x128xf32>
    %c1_54 = arith.constant 1 : index
    %c0_55 = arith.constant 0 : index
    %c0_56 = arith.constant 0 : index
    %66 = vector.load %arg6[%c1_54, %c0_55, %c0_56] : memref<3x128x512xf32, #tpu.memory_space<vmem>>, vector<1x128x512xf32>
    %67 = vector.shape_cast %66 : vector<1x128x512xf32> to vector<128x512xf32>
    %cst_57 = arith.constant dense<0.000000e+00> : vector<32x512xf32>
    %68 = tpu.matmul %65, %67, %cst_57 {dimension_numbers = #tpu.dot_dimension_numbers<[1], [0], [0], [1], [0, 0, 1, 1], [], []>} : vector<32x128xf32>, vector<128x512xf32>, vector<32x512xf32> -> vector<32x512xf32>
    %69 = vector.extract_strided_slice %68 {offsets = [0, 0], sizes = [32, 256], strides = [1, 1]} : vector<32x512xf32> to vector<32x256xf32>
    %70 = vector.extract_strided_slice %68 {offsets = [0, 256], sizes = [32, 256], strides = [1, 1]} : vector<32x512xf32> to vector<32x256xf32>
    %71 = arith.mulf %4, %69 : vector<32x256xf32>
    %cst_58 = arith.constant dense<0.000000e+00> : vector<256xf32>
    %72 = vector.multi_reduction <add>, %71, %cst_58 [0] : vector<32x256xf32> to vector<256xf32>
    %73 = vector.shape_cast %72 : vector<256xf32> to vector<1x256xf32>
    %74 = vector.broadcast %73 : vector<1x256xf32> to vector<32x256xf32>
    %75 = arith.addf %74, %70 : vector<32x256xf32>
    %c1_59 = arith.constant 1 : index
    %c0_60 = arith.constant 0 : index
    %c0_61 = arith.constant 0 : index
    %76 = vector.load %arg7[%c1_59, %c0_60, %c0_61] : memref<3x1x256xf32, #tpu.memory_space<vmem>>, vector<1x1x256xf32>
    %77 = vector.shape_cast %76 : vector<1x1x256xf32> to vector<1x256xf32>
    %78 = vector.broadcast %77 : vector<1x256xf32> to vector<32x256xf32>
    %79 = arith.mulf %15, %78 : vector<32x256xf32>
    %80 = arith.addf %75, %79 : vector<32x256xf32>
    %cst_62 = arith.constant 0.000000e+00 : f32
    %81 = vector.broadcast %cst_62 : f32 to vector<32x256xf32>
    %82 = arith.cmpf ogt, %80, %81 : vector<32x256xf32>
    %cst_63 = arith.constant 2.000000e-01 : f32
    %83 = vector.broadcast %cst_63 : f32 to vector<32x256xf32>
    %84 = arith.mulf %83, %80 : vector<32x256xf32>
    %85 = arith.select %82, %80, %84 : vector<32x256xi1>, vector<32x256xf32>
    %cst_64 = arith.constant 0.000000e+00 : f32
    %86 = vector.broadcast %cst_64 : f32 to vector<32x256xf32>
    %87 = arith.cmpf ogt, %13, %86 : vector<32x256xf32>
    %cst_65 = arith.constant -1.000000e+30 : f32
    %88 = vector.broadcast %cst_65 : f32 to vector<32x256xf32>
    %89 = arith.select %87, %85, %88 : vector<32x256xi1>, vector<32x256xf32>
    %cst_66 = arith.constant dense<0xFF800000> : vector<32xf32>
    %90 = vector.multi_reduction <maximumf>, %89, %cst_66 [1] : vector<32x256xf32> to vector<32xf32>
    %91 = vector.shape_cast %90 : vector<32xf32> to vector<32x1xf32>
    %92 = vector.broadcast %91 : vector<32x1xf32> to vector<32x256xf32>
    %93 = arith.subf %89, %92 : vector<32x256xf32>
    %94 = math.exp %93 : vector<32x256xf32>
    %95 = arith.mulf %94, %13 : vector<32x256xf32>
    %cst_67 = arith.constant dense<0.000000e+00> : vector<32x256xf32>
    %96 = tpu.matmul %95, %7, %cst_67 {dimension_numbers = #tpu.dot_dimension_numbers<[1], [0], [0], [1], [0, 0, 1, 1], [], []>} : vector<32x256xf32>, vector<256x256xf32>, vector<32x256xf32> -> vector<32x256xf32>
    %cst_68 = arith.constant 1.000000e-16 : f32
    %97 = vector.broadcast %cst_68 : f32 to vector<32x256xf32>
    %98 = arith.maximumf %96, %97 : vector<32x256xf32>
    %cst_69 = arith.constant 1.000000e+00 : f32
    %99 = vector.broadcast %cst_69 : f32 to vector<32x256xf32>
    %100 = arith.divf %99, %98 : vector<32x256xf32>
    %101 = arith.mulf %95, %100 : vector<32x256xf32>
    %cst_70 = arith.constant dense<0.000000e+00> : vector<256x128xf32>
    %102 = tpu.matmul %5, %65, %cst_70 {dimension_numbers = #tpu.dot_dimension_numbers<[1], [0], [0], [1], [0, 0, 1, 1], [], []>} : vector<256x32xf32>, vector<32x128xf32>, vector<256x128xf32> -> vector<256x128xf32>
    %103 = arith.mulf %102, %6 : vector<256x128xf32>
    %cst_71 = arith.constant dense<0.000000e+00> : vector<32x128xf32>
    %104 = tpu.matmul %101, %103, %cst_71 {dimension_numbers = #tpu.dot_dimension_numbers<[1], [0], [0], [1], [0, 0, 1, 1], [], []>} : vector<32x256xf32>, vector<256x128xf32>, vector<32x128xf32> -> vector<32x128xf32>
    %c1_72 = arith.constant 1 : index
    %c0_73 = arith.constant 0 : index
    %c0_74 = arith.constant 0 : index
    %105 = vector.load %arg8[%c1_72, %c0_73, %c0_74] : memref<3x1x128xf32, #tpu.memory_space<vmem>>, vector<1x1x128xf32>
    %106 = vector.shape_cast %105 : vector<1x1x128xf32> to vector<1x128xf32>
    %107 = vector.broadcast %106 : vector<1x128xf32> to vector<32x128xf32>
    %108 = arith.addf %104, %107 : vector<32x128xf32>
    %cst_75 = arith.constant 0.000000e+00 : f32
    %109 = vector.broadcast %cst_75 : f32 to vector<32x128xf32>
    %110 = arith.maximumf %108, %109 : vector<32x128xf32>
    %c1_76 = arith.constant 1 : index
    %c0_77 = arith.constant 0 : index
    %c0_78 = arith.constant 0 : index
    %111 = vector.load %arg5[%c1_76, %c0_77, %c0_78] : memref<2x128x128xf32, #tpu.memory_space<vmem>>, vector<1x128x128xf32>
    %112 = vector.shape_cast %111 : vector<1x128x128xf32> to vector<128x128xf32>
    %cst_79 = arith.constant dense<0.000000e+00> : vector<32x128xf32>
    %113 = tpu.matmul %110, %112, %cst_79 {dimension_numbers = #tpu.dot_dimension_numbers<[1], [0], [0], [1], [0, 0, 1, 1], [], []>} : vector<32x128xf32>, vector<128x128xf32>, vector<32x128xf32> -> vector<32x128xf32>
    %c2_80 = arith.constant 2 : index
    %c0_81 = arith.constant 0 : index
    %c0_82 = arith.constant 0 : index
    %114 = vector.load %arg6[%c2_80, %c0_81, %c0_82] : memref<3x128x512xf32, #tpu.memory_space<vmem>>, vector<1x128x512xf32>
    %115 = vector.shape_cast %114 : vector<1x128x512xf32> to vector<128x512xf32>
    %cst_83 = arith.constant dense<0.000000e+00> : vector<32x512xf32>
    %116 = tpu.matmul %113, %115, %cst_83 {dimension_numbers = #tpu.dot_dimension_numbers<[1], [0], [0], [1], [0, 0, 1, 1], [], []>} : vector<32x128xf32>, vector<128x512xf32>, vector<32x512xf32> -> vector<32x512xf32>
    %117 = vector.extract_strided_slice %116 {offsets = [0, 0], sizes = [32, 256], strides = [1, 1]} : vector<32x512xf32> to vector<32x256xf32>
    %118 = vector.extract_strided_slice %116 {offsets = [0, 256], sizes = [32, 256], strides = [1, 1]} : vector<32x512xf32> to vector<32x256xf32>
    %119 = arith.mulf %4, %117 : vector<32x256xf32>
    %cst_84 = arith.constant dense<0.000000e+00> : vector<256xf32>
    %120 = vector.multi_reduction <add>, %119, %cst_84 [0] : vector<32x256xf32> to vector<256xf32>
    %121 = vector.shape_cast %120 : vector<256xf32> to vector<1x256xf32>
    %122 = vector.broadcast %121 : vector<1x256xf32> to vector<32x256xf32>
    %123 = arith.addf %122, %118 : vector<32x256xf32>
    %c2_85 = arith.constant 2 : index
    %c0_86 = arith.constant 0 : index
    %c0_87 = arith.constant 0 : index
    %124 = vector.load %arg7[%c2_85, %c0_86, %c0_87] : memref<3x1x256xf32, #tpu.memory_space<vmem>>, vector<1x1x256xf32>
    %125 = vector.shape_cast %124 : vector<1x1x256xf32> to vector<1x256xf32>
    %126 = vector.broadcast %125 : vector<1x256xf32> to vector<32x256xf32>
    %127 = arith.mulf %15, %126 : vector<32x256xf32>
    %128 = arith.addf %123, %127 : vector<32x256xf32>
    %cst_88 = arith.constant 0.000000e+00 : f32
    %129 = vector.broadcast %cst_88 : f32 to vector<32x256xf32>
    %130 = arith.cmpf ogt, %128, %129 : vector<32x256xf32>
    %cst_89 = arith.constant 2.000000e-01 : f32
    %131 = vector.broadcast %cst_89 : f32 to vector<32x256xf32>
    %132 = arith.mulf %131, %128 : vector<32x256xf32>
    %133 = arith.select %130, %128, %132 : vector<32x256xi1>, vector<32x256xf32>
    %cst_90 = arith.constant 0.000000e+00 : f32
    %134 = vector.broadcast %cst_90 : f32 to vector<32x256xf32>
    %135 = arith.cmpf ogt, %13, %134 : vector<32x256xf32>
    %cst_91 = arith.constant -1.000000e+30 : f32
    %136 = vector.broadcast %cst_91 : f32 to vector<32x256xf32>
    %137 = arith.select %135, %133, %136 : vector<32x256xi1>, vector<32x256xf32>
    %cst_92 = arith.constant dense<0xFF800000> : vector<32xf32>
    %138 = vector.multi_reduction <maximumf>, %137, %cst_92 [1] : vector<32x256xf32> to vector<32xf32>
    %139 = vector.shape_cast %138 : vector<32xf32> to vector<32x1xf32>
    %140 = vector.broadcast %139 : vector<32x1xf32> to vector<32x256xf32>
    %141 = arith.subf %137, %140 : vector<32x256xf32>
    %142 = math.exp %141 : vector<32x256xf32>
    %143 = arith.mulf %142, %13 : vector<32x256xf32>
    %cst_93 = arith.constant dense<0.000000e+00> : vector<32x256xf32>
    %144 = tpu.matmul %143, %7, %cst_93 {dimension_numbers = #tpu.dot_dimension_numbers<[1], [0], [0], [1], [0, 0, 1, 1], [], []>} : vector<32x256xf32>, vector<256x256xf32>, vector<32x256xf32> -> vector<32x256xf32>
    %cst_94 = arith.constant 1.000000e-16 : f32
    %145 = vector.broadcast %cst_94 : f32 to vector<32x256xf32>
    %146 = arith.maximumf %144, %145 : vector<32x256xf32>
    %cst_95 = arith.constant 1.000000e+00 : f32
    %147 = vector.broadcast %cst_95 : f32 to vector<32x256xf32>
    %148 = arith.divf %147, %146 : vector<32x256xf32>
    %149 = arith.mulf %143, %148 : vector<32x256xf32>
    %cst_96 = arith.constant dense<0.000000e+00> : vector<256x128xf32>
    %150 = tpu.matmul %5, %113, %cst_96 {dimension_numbers = #tpu.dot_dimension_numbers<[1], [0], [0], [1], [0, 0, 1, 1], [], []>} : vector<256x32xf32>, vector<32x128xf32>, vector<256x128xf32> -> vector<256x128xf32>
    %151 = arith.mulf %150, %6 : vector<256x128xf32>
    %cst_97 = arith.constant dense<0.000000e+00> : vector<32x128xf32>
    %152 = tpu.matmul %149, %151, %cst_97 {dimension_numbers = #tpu.dot_dimension_numbers<[1], [0], [0], [1], [0, 0, 1, 1], [], []>} : vector<32x256xf32>, vector<256x128xf32>, vector<32x128xf32> -> vector<32x128xf32>
    %c2_98 = arith.constant 2 : index
    %c0_99 = arith.constant 0 : index
    %c0_100 = arith.constant 0 : index
    %153 = vector.load %arg8[%c2_98, %c0_99, %c0_100] : memref<3x1x128xf32, #tpu.memory_space<vmem>>, vector<1x1x128xf32>
    %154 = vector.shape_cast %153 : vector<1x1x128xf32> to vector<1x128xf32>
    %155 = vector.broadcast %154 : vector<1x128xf32> to vector<32x128xf32>
    %156 = arith.addf %152, %155 : vector<32x128xf32>
    %cst_101 = arith.constant 0.000000e+00 : f32
    %157 = vector.broadcast %cst_101 : f32 to vector<32x128xf32>
    %158 = arith.maximumf %156, %157 : vector<32x128xf32>
    %c0_102 = arith.constant 0 : index
    %c0_103 = arith.constant 0 : index
    %159 = vector.load %arg19[%c0_102, %c0_103] : memref<24x32xf32, #tpu.memory_space<vmem>>, vector<24x32xf32>
    %cst_104 = arith.constant dense<0.000000e+00> : vector<24x128xf32>
    %160 = tpu.matmul %159, %158, %cst_104 {dimension_numbers = #tpu.dot_dimension_numbers<[1], [0], [0], [1], [0, 0, 1, 1], [], []>} : vector<24x32xf32>, vector<32x128xf32>, vector<24x128xf32> -> vector<24x128xf32>
    %161 = vector.extract_strided_slice %160 {offsets = [0, 0], sizes = [4, 128], strides = [1, 1]} : vector<24x128xf32> to vector<4x128xf32>
    %c0_105 = arith.constant 0 : index
    %c0_106 = arith.constant 0 : index
    %162 = vector.load %arg10[%c0_105, %c0_106] : memref<128x64xf32, #tpu.memory_space<vmem>>, vector<128x64xf32>
    %cst_107 = arith.constant dense<0.000000e+00> : vector<4x64xf32>
    %163 = tpu.matmul %161, %162, %cst_107 {dimension_numbers = #tpu.dot_dimension_numbers<[1], [0], [0], [1], [0, 0, 1, 1], [], []>} : vector<4x128xf32>, vector<128x64xf32>, vector<4x64xf32> -> vector<4x64xf32>
    %c0_108 = arith.constant 0 : index
    %c0_109 = arith.constant 0 : index
    %164 = vector.load %arg11[%c0_108, %c0_109] : memref<16x64xf32, #tpu.memory_space<vmem>>, vector<16x64xf32>
    %cst_110 = arith.constant dense<0.000000e+00> : vector<4x64xf32>
    %165 = tpu.matmul %3, %164, %cst_110 {dimension_numbers = #tpu.dot_dimension_numbers<[1], [0], [0], [1], [0, 0, 1, 1], [], []>} : vector<4x16xf32>, vector<16x64xf32>, vector<4x64xf32> -> vector<4x64xf32>
    %166 = arith.addf %163, %165 : vector<4x64xf32>
    %c0_111 = arith.constant 0 : index
    %c0_112 = arith.constant 0 : index
    %167 = vector.load %arg12[%c0_111, %c0_112] : memref<1x64xf32, #tpu.memory_space<vmem>>, vector<1x64xf32>
    %168 = vector.broadcast %167 : vector<1x64xf32> to vector<4x64xf32>
    %169 = arith.addf %166, %168 : vector<4x64xf32>
    %170 = vector.extract_strided_slice %160 {offsets = [4, 0], sizes = [4, 128], strides = [1, 1]} : vector<24x128xf32> to vector<4x128xf32>
    %c0_113 = arith.constant 0 : index
    %c0_114 = arith.constant 0 : index
    %c0_115 = arith.constant 0 : index
    %171 = vector.load %arg9[%c0_113, %c0_114, %c0_115] : memref<5x128x64xf32, #tpu.memory_space<vmem>>, vector<1x128x64xf32>
    %172 = vector.shape_cast %171 : vector<1x128x64xf32> to vector<128x64xf32>
    %cst_116 = arith.constant dense<0.000000e+00> : vector<4x64xf32>
    %173 = tpu.matmul %170, %172, %cst_116 {dimension_numbers = #tpu.dot_dimension_numbers<[1], [0], [0], [1], [0, 0, 1, 1], [], []>} : vector<4x128xf32>, vector<128x64xf32>, vector<4x64xf32> -> vector<4x64xf32>
    %174 = vector.extract_strided_slice %160 {offsets = [8, 0], sizes = [4, 128], strides = [1, 1]} : vector<24x128xf32> to vector<4x128xf32>
    %c1_117 = arith.constant 1 : index
    %c0_118 = arith.constant 0 : index
    %c0_119 = arith.constant 0 : index
    %175 = vector.load %arg9[%c1_117, %c0_118, %c0_119] : memref<5x128x64xf32, #tpu.memory_space<vmem>>, vector<1x128x64xf32>
    %176 = vector.shape_cast %175 : vector<1x128x64xf32> to vector<128x64xf32>
    %cst_120 = arith.constant dense<0.000000e+00> : vector<4x64xf32>
    %177 = tpu.matmul %174, %176, %cst_120 {dimension_numbers = #tpu.dot_dimension_numbers<[1], [0], [0], [1], [0, 0, 1, 1], [], []>} : vector<4x128xf32>, vector<128x64xf32>, vector<4x64xf32> -> vector<4x64xf32>
    %178 = vector.extract_strided_slice %160 {offsets = [12, 0], sizes = [4, 128], strides = [1, 1]} : vector<24x128xf32> to vector<4x128xf32>
    %c2_121 = arith.constant 2 : index
    %c0_122 = arith.constant 0 : index
    %c0_123 = arith.constant 0 : index
    %179 = vector.load %arg9[%c2_121, %c0_122, %c0_123] : memref<5x128x64xf32, #tpu.memory_space<vmem>>, vector<1x128x64xf32>
    %180 = vector.shape_cast %179 : vector<1x128x64xf32> to vector<128x64xf32>
    %cst_124 = arith.constant dense<0.000000e+00> : vector<4x64xf32>
    %181 = tpu.matmul %178, %180, %cst_124 {dimension_numbers = #tpu.dot_dimension_numbers<[1], [0], [0], [1], [0, 0, 1, 1], [], []>} : vector<4x128xf32>, vector<128x64xf32>, vector<4x64xf32> -> vector<4x64xf32>
    %182 = vector.extract_strided_slice %160 {offsets = [16, 0], sizes = [4, 128], strides = [1, 1]} : vector<24x128xf32> to vector<4x128xf32>
    %c3_125 = arith.constant 3 : index
    %c0_126 = arith.constant 0 : index
    %c0_127 = arith.constant 0 : index
    %183 = vector.load %arg9[%c3_125, %c0_126, %c0_127] : memref<5x128x64xf32, #tpu.memory_space<vmem>>, vector<1x128x64xf32>
    %184 = vector.shape_cast %183 : vector<1x128x64xf32> to vector<128x64xf32>
    %cst_128 = arith.constant dense<0.000000e+00> : vector<4x64xf32>
    %185 = tpu.matmul %182, %184, %cst_128 {dimension_numbers = #tpu.dot_dimension_numbers<[1], [0], [0], [1], [0, 0, 1, 1], [], []>} : vector<4x128xf32>, vector<128x64xf32>, vector<4x64xf32> -> vector<4x64xf32>
    %186 = vector.extract_strided_slice %160 {offsets = [20, 0], sizes = [4, 128], strides = [1, 1]} : vector<24x128xf32> to vector<4x128xf32>
    %c4 = arith.constant 4 : index
    %c0_129 = arith.constant 0 : index
    %c0_130 = arith.constant 0 : index
    %187 = vector.load %arg9[%c4, %c0_129, %c0_130] : memref<5x128x64xf32, #tpu.memory_space<vmem>>, vector<1x128x64xf32>
    %188 = vector.shape_cast %187 : vector<1x128x64xf32> to vector<128x64xf32>
    %cst_131 = arith.constant dense<0.000000e+00> : vector<4x64xf32>
    %189 = tpu.matmul %186, %188, %cst_131 {dimension_numbers = #tpu.dot_dimension_numbers<[1], [0], [0], [1], [0, 0, 1, 1], [], []>} : vector<4x128xf32>, vector<128x64xf32>, vector<4x64xf32> -> vector<4x64xf32>
    %190 = arith.addf %173, %177 : vector<4x64xf32>
    %191 = arith.addf %181, %185 : vector<4x64xf32>
    %192 = arith.addf %190, %191 : vector<4x64xf32>
    %193 = arith.addf %192, %189 : vector<4x64xf32>
    %194 = arith.addf %169, %193 : vector<4x64xf32>
    %cst_132 = arith.constant 0.000000e+00 : f32
    %195 = vector.broadcast %cst_132 : f32 to vector<4x64xf32>
    %196 = arith.maximumf %194, %195 : vector<4x64xf32>
    %c0_133 = arith.constant 0 : index
    %c0_134 = arith.constant 0 : index
    %197 = vector.load %arg13[%c0_133, %c0_134] : memref<64x1xf32, #tpu.memory_space<vmem>>, vector<64x1xf32>
    %cst_135 = arith.constant dense<0.000000e+00> : vector<4x1xf32>
    %198 = tpu.matmul %196, %197, %cst_135 {dimension_numbers = #tpu.dot_dimension_numbers<[1], [0], [0], [1], [0, 0, 1, 1], [], []>} : vector<4x64xf32>, vector<64x1xf32>, vector<4x1xf32> -> vector<4x1xf32>
    %c0_136 = arith.constant 0 : index
    %c0_137 = arith.constant 0 : index
    %199 = vector.load %arg14[%c0_136, %c0_137] : memref<1x1xf32, #tpu.memory_space<vmem>>, vector<1x1xf32>
    %200 = vector.broadcast %199 : vector<1x1xf32> to vector<4x1xf32>
    %201 = arith.addf %198, %200 : vector<4x1xf32>
    %c0_138 = arith.constant 0 : index
    %c0_139 = arith.constant 0 : index
    %c0_140 = arith.constant 0 : index
    %202 = vector.load %arg20[%c0_138, %c0_139, %c0_140] : memref<1x4x1xf32, #tpu.memory_space<vmem>>, vector<1x4x1xf32>
    %203 = vector.shape_cast %202 : vector<1x4x1xf32> to vector<4x1xf32>
    %204 = vector.shape_cast %201 : vector<4x1xf32> to vector<1x4x1xf32>
    tpu.vector_store %arg20[%c0_138, %c0_139, %c0_140], %204 {strides = array<i32>} : memref<1x4x1xf32, #tpu.memory_space<vmem>>, vector<1x4x1xf32>,
    return
  }
  func.func @transform_0(%arg0: i32) -> (i32, i32, i32) {
    %c0_i32 = arith.constant 0 : i32
    %c0_i32_0 = arith.constant 0 : i32
    %c0_i32_1 = arith.constant 0 : i32
    return %arg0, %c0_i32, %c0_i32_0 : i32, i32, i32
  }
  func.func @transform_1(%arg0: i32) -> (i32, i32, i32, i32) {
    %c0_i32 = arith.constant 0 : i32
    %c0_i32_0 = arith.constant 0 : i32
    %c0_i32_1 = arith.constant 0 : i32
    %c0_i32_2 = arith.constant 0 : i32
    return %arg0, %c0_i32, %c0_i32_0, %c0_i32_1 : i32, i32, i32, i32
  }
  func.func @transform_2(%arg0: i32) -> (i32, i32, i32) {
    %c0_i32 = arith.constant 0 : i32
    %c0_i32_0 = arith.constant 0 : i32
    %c0_i32_1 = arith.constant 0 : i32
    return %arg0, %c0_i32, %c0_i32_0 : i32, i32, i32
  }
  func.func @transform_3(%arg0: i32) -> (i32, i32) {
    %c0_i32 = arith.constant 0 : i32
    %c0_i32_0 = arith.constant 0 : i32
    %c0_i32_1 = arith.constant 0 : i32
    return %c0_i32, %c0_i32_0 : i32, i32
  }
  func.func @transform_4(%arg0: i32) -> (i32, i32, i32) {
    %c0_i32 = arith.constant 0 : i32
    %c0_i32_0 = arith.constant 0 : i32
    %c0_i32_1 = arith.constant 0 : i32
    %c0_i32_2 = arith.constant 0 : i32
    return %c0_i32, %c0_i32_0, %c0_i32_1 : i32, i32, i32
  }
  func.func @transform_5(%arg0: i32) -> (i32, i32, i32) {
    %c0_i32 = arith.constant 0 : i32
    %c0_i32_0 = arith.constant 0 : i32
    %c0_i32_1 = arith.constant 0 : i32
    %c0_i32_2 = arith.constant 0 : i32
    return %c0_i32, %c0_i32_0, %c0_i32_1 : i32, i32, i32
  }
  func.func @transform_6(%arg0: i32) -> (i32, i32, i32) {
    %c0_i32 = arith.constant 0 : i32
    %c0_i32_0 = arith.constant 0 : i32
    %c0_i32_1 = arith.constant 0 : i32
    %c0_i32_2 = arith.constant 0 : i32
    return %c0_i32, %c0_i32_0, %c0_i32_1 : i32, i32, i32
  }
  func.func @transform_7(%arg0: i32) -> (i32, i32, i32) {
    %c0_i32 = arith.constant 0 : i32
    %c0_i32_0 = arith.constant 0 : i32
    %c0_i32_1 = arith.constant 0 : i32
    %c0_i32_2 = arith.constant 0 : i32
    return %c0_i32, %c0_i32_0, %c0_i32_1 : i32, i32, i32
  }
  func.func @transform_8(%arg0: i32) -> (i32, i32, i32) {
    %c0_i32 = arith.constant 0 : i32
    %c0_i32_0 = arith.constant 0 : i32
    %c0_i32_1 = arith.constant 0 : i32
    %c0_i32_2 = arith.constant 0 : i32
    return %c0_i32, %c0_i32_0, %c0_i32_1 : i32, i32, i32
  }
  func.func @transform_9(%arg0: i32) -> (i32, i32) {
    %c0_i32 = arith.constant 0 : i32
    %c0_i32_0 = arith.constant 0 : i32
    %c0_i32_1 = arith.constant 0 : i32
    return %c0_i32, %c0_i32_0 : i32, i32
  }
  func.func @transform_10(%arg0: i32) -> (i32, i32) {
    %c0_i32 = arith.constant 0 : i32
    %c0_i32_0 = arith.constant 0 : i32
    %c0_i32_1 = arith.constant 0 : i32
    return %c0_i32, %c0_i32_0 : i32, i32
  }
  func.func @transform_11(%arg0: i32) -> (i32, i32) {
    %c0_i32 = arith.constant 0 : i32
    %c0_i32_0 = arith.constant 0 : i32
    %c0_i32_1 = arith.constant 0 : i32
    return %c0_i32, %c0_i32_0 : i32, i32
  }
  func.func @transform_12(%arg0: i32) -> (i32, i32) {
    %c0_i32 = arith.constant 0 : i32
    %c0_i32_0 = arith.constant 0 : i32
    %c0_i32_1 = arith.constant 0 : i32
    return %c0_i32, %c0_i32_0 : i32, i32
  }
  func.func @transform_13(%arg0: i32) -> (i32, i32) {
    %c0_i32 = arith.constant 0 : i32
    %c0_i32_0 = arith.constant 0 : i32
    %c0_i32_1 = arith.constant 0 : i32
    return %c0_i32, %c0_i32_0 : i32, i32
  }
  func.func @transform_14(%arg0: i32) -> (i32, i32) {
    %c0_i32 = arith.constant 0 : i32
    %c0_i32_0 = arith.constant 0 : i32
    %c0_i32_1 = arith.constant 0 : i32
    return %c0_i32, %c0_i32_0 : i32, i32
  }
  func.func @transform_15(%arg0: i32) -> (i32, i32) {
    %c0_i32 = arith.constant 0 : i32
    %c0_i32_0 = arith.constant 0 : i32
    %c0_i32_1 = arith.constant 0 : i32
    return %c0_i32, %c0_i32_0 : i32, i32
  }
  func.func @transform_16(%arg0: i32) -> (i32, i32) {
    %c0_i32 = arith.constant 0 : i32
    %c0_i32_0 = arith.constant 0 : i32
    %c0_i32_1 = arith.constant 0 : i32
    return %c0_i32, %c0_i32_0 : i32, i32
  }
  func.func @transform_17(%arg0: i32) -> (i32, i32) {
    %c0_i32 = arith.constant 0 : i32
    %c0_i32_0 = arith.constant 0 : i32
    %c0_i32_1 = arith.constant 0 : i32
    return %c0_i32, %c0_i32_0 : i32, i32
  }
  func.func @transform_18(%arg0: i32) -> (i32, i32) {
    %c0_i32 = arith.constant 0 : i32
    %c0_i32_0 = arith.constant 0 : i32
    %c0_i32_1 = arith.constant 0 : i32
    return %c0_i32, %c0_i32_0 : i32, i32
  }
  func.func @transform_19(%arg0: i32) -> (i32, i32, i32) {
    %c0_i32 = arith.constant 0 : i32
    %c0_i32_0 = arith.constant 0 : i32
    %c0_i32_1 = arith.constant 0 : i32
    return %arg0, %c0_i32, %c0_i32_0 : i32, i32, i32
  }
}

</mosaic_0001>

<llo_original>
// kernel: gat_critic_forward.1
$region0: #{gat_critic_forward.1}
  #allocation0 [shape = 'u32[]', space=smem, size = 0x4, offset = 0x4, fixed_abs, tag = 'smem constant byte address 0x4 - core index']
  #allocation1 [shape = 'u32[144,128]{1,0:T(1,128)}', space=vmem, size = 0x12000, scoped, tag = 'internal scratch']
  #allocation2 [shape = 'f32[1,1]{1,0:T(1,128)S(1)}', space=vmem, size = 0x200, scoped, tag = 'scoped memory for gat_critic_forward.1']
  %s0 = inlined_call_operand.vmem [shape: f32[1,32,4], index: 0, kind: input, shape index: {}]
  %s1 = inlined_call_operand.vmem [shape: f32[1,4,32,256], index: 1, kind: input, shape index: {}]
  %s2 = inlined_call_operand.vmem [shape: f32[1,4,16], index: 2, kind: input, shape index: {}]
  %s3 = inlined_call_operand.vmem [shape: f32[4,128], index: 3, kind: input, shape index: {}]
  %s4 = inlined_call_operand.vmem [shape: f32[2,128,128], index: 4, kind: input, shape index: {}]
  %s5 = inlined_call_operand.vmem [shape: f32[3,128,512], index: 5, kind: input, shape index: {}]
  %s6 = inlined_call_operand.vmem [shape: f32[3,1,256], index: 6, kind: input, shape index: {}]
  %s7 = inlined_call_operand.vmem [shape: f32[3,1,128], index: 7, kind: input, shape index: {}]
  %s8 = inlined_call_operand.vmem [shape: f32[5,128,64], index: 8, kind: input, shape index: {}]
  %s9 = inlined_call_operand.vmem [shape: f32[128,64], index: 9, kind: input, shape index: {}]
  %s10 = inlined_call_operand.vmem [shape: f32[16,64], index: 10, kind: input, shape index: {}]
  %s11 = inlined_call_operand.vmem [shape: f32[1,64], index: 11, kind: input, shape index: {}]
  %s12 = inlined_call_operand.vmem [shape: f32[64,1], index: 12, kind: input, shape index: {}]
  %s13 = inlined_call_operand.<no memory space> [shape: f32[1,1], index: 13, kind: input, shape index: {}]
  %s14 = inlined_call_operand.vmem [shape: f32[32,256], index: 14, kind: input, shape index: {}]
  %s15 = inlined_call_operand.vmem [shape: f32[256,32], index: 15, kind: input, shape index: {}]
  %s16 = inlined_call_operand.vmem [shape: f32[256,128], index: 16, kind: input, shape index: {}]
  %s17 = inlined_call_operand.vmem [shape: f32[256,256], index: 17, kind: input, shape index: {}]
  %s18 = inlined_call_operand.vmem [shape: f32[24,32], index: 18, kind: input, shape index: {}]
  %s19 = inlined_call_operand.vmem [shape: f32[1,4,1], index: 19, kind: output, shape index: {}]
  %s20 = sld [smem:[#allocation0]]
  $region86: #{gat_critic_forward.1} parent=0
    _
  %s22 = ssub.s32 1, %s20
  %s23 = scalar_select 0, %s22, %s20
  %v24 = vstv %s13
  %25 = vst [vmem:[#allocation2] sm:$0x1] %v24
  // Predicated region
  $region2: #{gat_critic_forward.1} parent=0 // pred_check
    _
  $region3: #{gat_critic_forward.1} parent=0 // pred_check_branch
    %27 = sbr.rel (0) target = $region5
  $region4: #{gat_critic_forward.1} parent=0 // pred_region
    _
  $region5: #{gat_critic_forward.1} parent=0 // pred_fallthru
    _
  // Predicated region
  $region6: #{gat_critic_forward.1} parent=0 // pred_check
    _
  $region7: #{gat_critic_forward.1} parent=0 // pred_check_branch
    %29 = sbr.rel (0) target = $region9
  $region8: #{gat_critic_forward.1} parent=0 // pred_region
    _
  $region9: #{gat_critic_forward.1} parent=0 // pred_fallthru
    _
  // Predicated region
  $region10: #{gat_critic_forward.1} parent=0 // pred_check
    _
  $region11: #{gat_critic_forward.1} parent=0 // pred_check_branch
    %31 = sbr.rel (0) target = $region13
  $region12: #{gat_critic_forward.1} parent=0 // pred_region
    _
  $region13: #{gat_critic_forward.1} parent=0 // pred_fallthru
    _
  // Predicated region
  $region14: #{gat_critic_forward.1} parent=0 // pred_check
    _
  $region15: #{gat_critic_forward.1} parent=0 // pred_check_branch
    %33 = sbr.rel (0) target = $region17
  $region16: #{gat_critic_forward.1} parent=0 // pred_region
    _
  $region17: #{gat_critic_forward.1} parent=0 // pred_fallthru
    _
  // Predicated region
  $region18: #{gat_critic_forward.1} parent=0 // pred_check
    _
  $region19: #{gat_critic_forward.1} parent=0 // pred_check_branch
    %35 = sbr.rel (0) target = $region21
  $region20: #{gat_critic_forward.1} parent=0 // pred_region
    _
  $region21: #{gat_critic_forward.1} parent=0 // pred_fallthru
    _
  // Predicated region
  $region22: #{gat_critic_forward.1} parent=0 // pred_check
    _
  $region23: #{gat_critic_forward.1} parent=0 // pred_check_branch
    %37 = sbr.rel (0) target = $region25
  $region24: #{gat_critic_forward.1} parent=0 // pred_region
    _
  $region25: #{gat_critic_forward.1} parent=0 // pred_fallthru
    _
  // Predicated region
  $region26: #{gat_critic_forward.1} parent=0 // pred_check
    _
  $region27: #{gat_critic_forward.1} parent=0 // pred_check_branch
    %39 = sbr.rel (0) target = $region29
  $region28: #{gat_critic_forward.1} parent=0 // pred_region
    _
  $region29: #{gat_critic_forward.1} parent=0 // pred_fallthru
    _
  // Predicated region
  $region30: #{gat_critic_forward.1} parent=0 // pred_check
    _
  $region31: #{gat_critic_forward.1} parent=0 // pred_check_branch
    %41 = sbr.rel (0) target = $region33
  $region32: #{gat_critic_forward.1} parent=0 // pred_region
    _
  $region33: #{gat_critic_forward.1} parent=0 // pred_fallthru
    _
  // Predicated region
  $region34: #{gat_critic_forward.1} parent=0 // pred_check
    _
  $region35: #{gat_critic_forward.1} parent=0 // pred_check_branch
    %43 = sbr.rel (0) target = $region37
  $region36: #{gat_critic_forward.1} parent=0 // pred_region
    _
  $region37: #{gat_critic_forward.1} parent=0 // pred_fallthru
    _
  // Predicated region
  $region38: #{gat_critic_forward.1} parent=0 // pred_check
    _
  $region39: #{gat_critic_forward.1} parent=0 // pred_check_branch
    %45 = sbr.rel (0) target = $region41
  $region40: #{gat_critic_forward.1} parent=0 // pred_region
    _
  $region41: #{gat_critic_forward.1} parent=0 // pred_fallthru
    _
  // Predicated region
  $region42: #{gat_critic_forward.1} parent=0 // pred_check
    _
  $region43: #{gat_critic_forward.1} parent=0 // pred_check_branch
    %47 = sbr.rel (0) target = $region45
  $region44: #{gat_critic_forward.1} parent=0 // pred_region
    _
  $region45: #{gat_critic_forward.1} parent=0 // pred_fallthru
    _
  // Predicated region
  $region46: #{gat_critic_forward.1} parent=0 // pred_check
    _
  $region47: #{gat_critic_forward.1} parent=0 // pred_check_branch
    %49 = sbr.rel (0) target = $region49
  $region48: #{gat_critic_forward.1} parent=0 // pred_region
    _
  $region49: #{gat_critic_forward.1} parent=0 // pred_fallthru
    _
  // Predicated region
  $region50: #{gat_critic_forward.1} parent=0 // pred_check
    _
  $region51: #{gat_critic_forward.1} parent=0 // pred_check_branch
    %51 = sbr.rel (0) target = $region53
  $region52: #{gat_critic_forward.1} parent=0 // pred_region
    _
  $region53: #{gat_critic_forward.1} parent=0 // pred_fallthru
    _
  // Predicated region
  $region54: #{gat_critic_forward.1} parent=0 // pred_check
    _
  $region55: #{gat_critic_forward.1} parent=0 // pred_check_branch
    %53 = sbr.rel (0) target = $region57
  $region56: #{gat_critic_forward.1} parent=0 // pred_region
    _
  $region57: #{gat_critic_forward.1} parent=0 // pred_fallthru
    _
  // Predicated region
  $region58: #{gat_critic_forward.1} parent=0 // pred_check
    _
  $region59: #{gat_critic_forward.1} parent=0 // pred_check_branch
    %55 = sbr.rel (0) target = $region61
  $region60: #{gat_critic_forward.1} parent=0 // pred_region
    _
  $region61: #{gat_critic_forward.1} parent=0 // pred_fallthru
    _
  // Predicated region
  $region62: #{gat_critic_forward.1} parent=0 // pred_check
    _
  $region63: #{gat_critic_forward.1} parent=0 // pred_check_branch
    %57 = sbr.rel (0) target = $region65
  $region64: #{gat_critic_forward.1} parent=0 // pred_region
    _
  $region65: #{gat_critic_forward.1} parent=0 // pred_fallthru
    _
  // Predicated region
  $region66: #{gat_critic_forward.1} parent=0 // pred_check
    _
  $region67: #{gat_critic_forward.1} parent=0 // pred_check_branch
    %59 = sbr.rel (0) target = $region69
  $region68: #{gat_critic_forward.1} parent=0 // pred_region
    _
  $region69: #{gat_critic_forward.1} parent=0 // pred_fallthru
    _
  // Predicated region
  $region70: #{gat_critic_forward.1} parent=0 // pred_check
    _
  $region71: #{gat_critic_forward.1} parent=0 // pred_check_branch
    %61 = sbr.rel (0) target = $region73
  $region72: #{gat_critic_forward.1} parent=0 // pred_region
    _
  $region73: #{gat_critic_forward.1} parent=0 // pred_fallthru
    _
  // Predicated region
  $region74: #{gat_critic_forward.1} parent=0 // pred_check
    _
  $region75: #{gat_critic_forward.1} parent=0 // pred_check_branch
    %63 = sbr.rel (0) target = $region77
  $region76: #{gat_critic_forward.1} parent=0 // pred_region
    _
  $region77: #{gat_critic_forward.1} parent=0 // pred_fallthru
    _
  %v64 = vld [vmem:[%s0] sm:$0xff]
  %v65 = vld [vmem:[%s0 + $0x8] sm:$0xff]
  %v66 = vld [vmem:[%s0 + $0x10] sm:$0xff]
  %v67 = vld [vmem:[%s0 + $0x18] sm:$0xff]
  %v68 = vld [vmem:[%s2] sm:$0xf]
  %v69 = vld [vmem:[%s14] sm:$0xff]
  %v70 = vld [vmem:[%s14 + $0x8] sm:$0xff]
  %v71 = vld [vmem:[%s14 + $0x10] sm:$0xff]
  %v72 = vld [vmem:[%s14 + $0x18] sm:$0xff]
  %v73 = vld [vmem:[%s14 + $0x20] sm:$0xff]
  %v74 = vld [vmem:[%s14 + $0x28] sm:$0xff]
  %v75 = vld [vmem:[%s14 + $0x30] sm:$0xff]
  %v76 = vld [vmem:[%s14 + $0x38] sm:$0xff]
  %v77 = vld [vmem:[%s15] sm:$0xff]
  %v78 = vld [vmem:[%s15 + $0x8] sm:$0xff]
  %v79 = vld [vmem:[%s15 + $0x10] sm:$0xff]
  %v80 = vld [vmem:[%s15 + $0x18] sm:$0xff]
  %v81 = vld [vmem:[%s15 + $0x20] sm:$0xff]
  %v82 = vld [vmem:[%s15 + $0x28] sm:$0xff]
  %v83 = vld [vmem:[%s15 + $0x30] sm:$0xff]
  %v84 = vld [vmem:[%s15 + $0x38] sm:$0xff]
  %v85 = vld [vmem:[%s15 + $0x40] sm:$0xff]
  %v86 = vld [vmem:[%s15 + $0x48] sm:$0xff]
  %v87 = vld [vmem:[%s15 + $0x50] sm:$0xff]
  %v88 = vld [vmem:[%s15 + $0x58] sm:$0xff]
  %v89 = vld [vmem:[%s15 + $0x60] sm:$0xff]
  %v90 = vld [vmem:[%s15 + $0x68] sm:$0xff]
  %v91 = vld [vmem:[%s15 + $0x70] sm:$0xff]
  %v92 = vld [vmem:[%s15 + $0x78] sm:$0xff]
  %v93 = vld [vmem:[%s15 + $0x80] sm:$0xff]
  %v94 = vld [vmem:[%s15 + $0x88] sm:$0xff]
  %v95 = vld [vmem:[%s15 + $0x90] sm:$0xff]
  %v96 = vld [vmem:[%s15 + $0x98] sm:$0xff]
  %v97 = vld [vmem:[%s15 + $0xa0] sm:$0xff]
  %v98 = vld [vmem:[%s15 + $0xa8] sm:$0xff]
  %v99 = vld [vmem:[%s15 + $0xb0] sm:$0xff]
  %v100 = vld [vmem:[%s15 + $0xb8] sm:$0xff]
  %v101 = vld [vmem:[%s15 + $0xc0] sm:$0xff]
  %v102 = vld [vmem:[%s15 + $0xc8] sm:$0xff]
  %v103 = vld [vmem:[%s15 + $0xd0] sm:$0xff]
  %v104 = vld [vmem:[%s15 + $0xd8] sm:$0xff]
  %v105 = vld [vmem:[%s15 + $0xe0] sm:$0xff]
  %v106 = vld [vmem:[%s15 + $0xe8] sm:$0xff]
  %v107 = vld [vmem:[%s15 + $0xf0] sm:$0xff]
  %v108 = vld [vmem:[%s15 + $0xf8] sm:$0xff]
  %v109 = vld [vmem:[%s16] sm:$0xff]
  %v110 = vld [vmem:[%s16 + $0x8] sm:$0xff]
  %v111 = vld [vmem:[%s16 + $0x10] sm:$0xff]
  %v112 = vld [vmem:[%s16 + $0x18] sm:$0xff]
  %v113 = vld [vmem:[%s16 + $0x20] sm:$0xff]
  %v114 = vld [vmem:[%s16 + $0x28] sm:$0xff]
  %v115 = vld [vmem:[%s16 + $0x30] sm:$0xff]
  %v116 = vld [vmem:[%s16 + $0x38] sm:$0xff]
  %v117 = vld [vmem:[%s16 + $0x40] sm:$0xff]
  %v118 = vld [vmem:[%s16 + $0x48] sm:$0xff]
  %v119 = vld [vmem:[%s16 + $0x50] sm:$0xff]
  %v120 = vld [vmem:[%s16 + $0x58] sm:$0xff]
  %v121 = vld [vmem:[%s16 + $0x60] sm:$0xff]
  %v122 = vld [vmem:[%s16 + $0x68] sm:$0xff]
  %v123 = vld [vmem:[%s16 + $0x70] sm:$0xff]
  %v124 = vld [vmem:[%s16 + $0x78] sm:$0xff]
  %v125 = vld [vmem:[%s16 + $0x80] sm:$0xff]
  %v126 = vld [vmem:[%s16 + $0x88] sm:$0xff]
  %v127 = vld [vmem:[%s16 + $0x90] sm:$0xff]
  %v128 = vld [vmem:[%s16 + $0x98] sm:$0xff]
  %v129 = vld [vmem:[%s16 + $0xa0] sm:$0xff]
  %v130 = vld [vmem:[%s16 + $0xa8] sm:$0xff]
  %v131 = vld [vmem:[%s16 + $0xb0] sm:$0xff]
  %v132 = vld [vmem:[%s16 + $0xb8] sm:$0xff]
  %v133 = vld [vmem:[%s16 + $0xc0] sm:$0xff]
  %v134 = vld [vmem:[%s16 + $0xc8] sm:$0xff]
  %v135 = vld [vmem:[%s16 + $0xd0] sm:$0xff]
  %v136 = vld [vmem:[%s16 + $0xd8] sm:$0xff]
  %v137 = vld [vmem:[%s16 + $0xe0] sm:$0xff]
  %v138 = vld [vmem:[%s16 + $0xe8] sm:$0xff]
  %v139 = vld [vmem:[%s16 + $0xf0] sm:$0xff]
  %v140 = vld [vmem:[%s16 + $0xf8] sm:$0xff]
  %v141 = vld [vmem:[%s17] sm:$0xff]
  %v142 = vld [vmem:[%s17 + $0x8] sm:$0xff]
  %v143 = vld [vmem:[%s17 + $0x10] sm:$0xff]
  %v144 = vld [vmem:[%s17 + $0x18] sm:$0xff]
  %v145 = vld [vmem:[%s17 + $0x20] sm:$0xff]
  %v146 = vld [vmem:[%s17 + $0x28] sm:$0xff]
  %v147 = vld [vmem:[%s17 + $0x30] sm:$0xff]
  %v148 = vld [vmem:[%s17 + $0x38] sm:$0xff]
  %v149 = vld [vmem:[%s17 + $0x40] sm:$0xff]
  %v150 = vld [vmem:[%s17 + $0x48] sm:$0xff]
  %v151 = vld [vmem:[%s17 + $0x50] sm:$0xff]
  %v152 = vld [vmem:[%s17 + $0x58] sm:$0xff]
  %v153 = vld [vmem:[%s17 + $0x60] sm:$0xff]
  %v154 = vld [vmem:[%s17 + $0x68] sm:$0xff]
  %v155 = vld [vmem:[%s17 + $0x70] sm:$0xff]
  %v156 = vld [vmem:[%s17 + $0x78] sm:$0xff]
  %v157 = vld [vmem:[%s17 + $0x80] sm:$0xff]
  %v158 = vld [vmem:[%s17 + $0x88] sm:$0xff]
  %v159 = vld [vmem:[%s17 + $0x90] sm:$0xff]
  %v160 = vld [vmem:[%s17 + $0x98] sm:$0xff]
  %v161 = vld [vmem:[%s17 + $0xa0] sm:$0xff]
  %v162 = vld [vmem:[%s17 + $0xa8] sm:$0xff]
  %v163 = vld [vmem:[%s17 + $0xb0] sm:$0xff]
  %v164 = vld [vmem:[%s17 + $0xb8] sm:$0xff]
  %v165 = vld [vmem:[%s17 + $0xc0] sm:$0xff]
  %v166 = vld [vmem:[%s17 + $0xc8] sm:$0xff]
  %v167 = vld [vmem:[%s17 + $0xd0] sm:$0xff]
  %v168 = vld [vmem:[%s17 + $0xd8] sm:$0xff]
  %v169 = vld [vmem:[%s17 + $0xe0] sm:$0xff]
  %v170 = vld [vmem:[%s17 + $0xe8] sm:$0xff]
  %v171 = vld [vmem:[%s17 + $0xf0] sm:$0xff]
  %v172 = vld [vmem:[%s17 + $0xf8] sm:$0xff]
  %v173 = vld [vmem:[%s17 + $0x100] sm:$0xff]
  %v174 = vld [vmem:[%s17 + $0x108] sm:$0xff]
  %v175 = vld [vmem:[%s17 + $0x110] sm:$0xff]
  %v176 = vld [vmem:[%s17 + $0x118] sm:$0xff]
  %v177 = vld [vmem:[%s17 + $0x120] sm:$0xff]
  %v178 = vld [vmem:[%s17 + $0x128] sm:$0xff]
  %v179 = vld [vmem:[%s17 + $0x130] sm:$0xff]
  %v180 = vld [vmem:[%s17 + $0x138] sm:$0xff]
  %v181 = vld [vmem:[%s17 + $0x140] sm:$0xff]
  %v182 = vld [vmem:[%s17 + $0x148] sm:$0xff]
  %v183 = vld [vmem:[%s17 + $0x150] sm:$0xff]
  %v184 = vld [vmem:[%s17 + $0x158] sm:$0xff]
  %v185 = vld [vmem:[%s17 + $0x160] sm:$0xff]
  %v186 = vld [vmem:[%s17 + $0x168] sm:$0xff]
  %v187 = vld [vmem:[%s17 + $0x170] sm:$0xff]
  %v188 = vld [vmem:[%s17 + $0x178] sm:$0xff]
  %v189 = vld [vmem:[%s17 + $0x180] sm:$0xff]
  %v190 = vld [vmem:[%s17 + $0x188] sm:$0xff]
  %v191 = vld [vmem:[%s17 + $0x190] sm:$0xff]
  %v192 = vld [vmem:[%s17 + $0x198] sm:$0xff]
  %v193 = vld [vmem:[%s17 + $0x1a0] sm:$0xff]
  %v194 = vld [vmem:[%s17 + $0x1a8] sm:$0xff]
  %v195 = vld [vmem:[%s17 + $0x1b0] sm:$0xff]
  %v196 = vld [vmem:[%s17 + $0x1b8] sm:$0xff]
  %v197 = vld [vmem:[%s17 + $0x1c0] sm:$0xff]
  %v198 = vld [vmem:[%s17 + $0x1c8] sm:$0xff]
  %v199 = vld [vmem:[%s17 + $0x1d0] sm:$0xff]
  %v200 = vld [vmem:[%s17 + $0x1d8] sm:$0xff]
  %v201 = vld [vmem:[%s17 + $0x1e0] sm:$0xff]
  %v202 = vld [vmem:[%s17 + $0x1e8] sm:$0xff]
  %v203 = vld [vmem:[%s17 + $0x1f0] sm:$0xff]
  %v204 = vld [vmem:[%s17 + $0x1f8] sm:$0xff]
  %v205 = vld [vmem:[%s1] sm:$0xff]
  %v206 = vld [vmem:[%s1 + $0x8] sm:$0xff]
  %v207 = vld [vmem:[%s1 + $0x10] sm:$0xff]
  %v208 = vld [vmem:[%s1 + $0x18] sm:$0xff]
  %v209 = vld [vmem:[%s1 + $0x20] sm:$0xff]
  %v210 = vld [vmem:[%s1 + $0x28] sm:$0xff]
  %v211 = vld [vmem:[%s1 + $0x30] sm:$0xff]
  %v212 = vld [vmem:[%s1 + $0x38] sm:$0xff]
  %s213 = scalar_lea.vmem %s1, 64
  %v214 = vld [vmem:[%s213] sm:$0xff]
  %v215 = vld [vmem:[%s213 + $0x8] sm:$0xff]
  %v216 = vld [vmem:[%s213 + $0x10] sm:$0xff]
  %v217 = vld [vmem:[%s213 + $0x18] sm:$0xff]
  %v218 = vld [vmem:[%s213 + $0x20] sm:$0xff]
  %v219 = vld [vmem:[%s213 + $0x28] sm:$0xff]
  %v220 = vld [vmem:[%s213 + $0x30] sm:$0xff]
  %v221 = vld [vmem:[%s213 + $0x38] sm:$0xff]
  %s222 = scalar_lea.vmem %s1, 128
  %v223 = vld [vmem:[%s222] sm:$0xff]
  %v224 = vld [vmem:[%s222 + $0x8] sm:$0xff]
  %v225 = vld [vmem:[%s222 + $0x10] sm:$0xff]
  %v226 = vld [vmem:[%s222 + $0x18] sm:$0xff]
  %v227 = vld [vmem:[%s222 + $0x20] sm:$0xff]
  %v228 = vld [vmem:[%s222 + $0x28] sm:$0xff]
  %v229 = vld [vmem:[%s222 + $0x30] sm:$0xff]
  %v230 = vld [vmem:[%s222 + $0x38] sm:$0xff]
  %s231 = scalar_lea.vmem %s1, 192
  %v232 = vld [vmem:[%s231] sm:$0xff]
  %v233 = vld [vmem:[%s231 + $0x8] sm:$0xff]
  %v234 = vld [vmem:[%s231 + $0x10] sm:$0xff]
  %v235 = vld [vmem:[%s231 + $0x18] sm:$0xff]
  %v236 = vld [vmem:[%s231 + $0x20] sm:$0xff]
  %v237 = vld [vmem:[%s231 + $0x28] sm:$0xff]
  %v238 = vld [vmem:[%s231 + $0x30] sm:$0xff]
  %v239 = vld [vmem:[%s231 + $0x38] sm:$0xff]
  %v240 = vld [vmem:[%s3] sm:$0xf]
  %vm241 = vcmask 31744
  %v243 = vsel %vm241, %v64, 0
  %v246 = vsel %vm241, %v65, 0
  %v249 = vsel %vm241, %v66, 0
  %v252 = vsel %vm241, %v67, 0
  %vm254 = vcmask 1043456
  %v256 = vsel %vm254, %v240, 0
  %258 = vmatprep.subr.mxu0 0.0
  %259 = vmatpush1.msra.mxu0 0.0
  %260 = vmatprep.subr.mxu0 0.0
  %261 = vmatpush1.msra.mxu0 0.0
  %262 = vmatprep.subr.mxu0 0.0
  %263 = vmatpush1.msra.mxu0 0.0
  %264 = vmatprep.subr.mxu0 0.0
  %265 = vmatpush1.msra.mxu0 0.0
  %266 = vmatprep.subr.mxu0 0.0
  %267 = vmatpush1.msra.mxu0 0.0
  %268 = vmatprep.subr.mxu0 0.0
  %269 = vmatpush1.msra.mxu0 0.0
  %270 = vmatprep.subr.mxu0 0.0
  %271 = vmatpush1.msra.mxu0 0.0
  %272 = vmatprep.subr.mxu0 0.0
  %273 = vmatpush1.msra.mxu0 0.0
  %274 = vmatprep.subr.mxu0 0.0
  %275 = vmatpush1.msra.mxu0 0.0
  %276 = vmatprep.subr.mxu0 0.0
  %277 = vmatpush1.msra.mxu0 0.0
  %278 = vmatprep.subr.mxu0 0.0
  %279 = vmatpush1.msra.mxu0 0.0
  %280 = vmatprep.subr.mxu0 0.0
  %281 = vmatpush1.msra.mxu0 0.0
  %282 = vmatprep.subr.mxu0 0.0
  %283 = vmatpush1.msra.mxu0 0.0
  %284 = vmatprep.subr.mxu0 0.0
  %285 = vmatpush1.msra.mxu0 0.0
  %286 = vmatprep.subr.mxu0 0.0
  %287 = vmatpush1.msra.mxu0 0.0
  %288 = vmatprep.subr.mxu0 0.0
  %289 = vmatpush1.msra.mxu0 %v256
  %290 = vmatprep.subr.mxu0 0.0
  %291 = vmatpush2.msra.mxu0 0.0
  %292 = vmatprep.subr.mxu0 0.0
  %293 = vmatpush2.msra.mxu0 0.0
  %294 = vmatprep.subr.mxu0 0.0
  %295 = vmatpush2.msra.mxu0 0.0
  %296 = vmatprep.subr.mxu0 0.0
  %297 = vmatpush2.msra.mxu0 0.0
  %298 = vmatprep.subr.mxu0 0.0
  %299 = vmatpush2.msra.mxu0 0.0
  %300 = vmatprep.subr.mxu0 0.0
  %301 = vmatpush2.msra.mxu0 0.0
  %302 = vmatprep.subr.mxu0 0.0
  %303 = vmatpush2.msra.mxu0 0.0
  %304 = vmatprep.subr.mxu0 0.0
  %305 = vmatpush2.msra.mxu0 0.0
  %306 = vmatprep.subr.mxu0 0.0
  %307 = vmatpush2.msra.mxu0 0.0
  %308 = vmatprep.subr.mxu0 0.0
  %309 = vmatpush2.msra.mxu0 0.0
  %310 = vmatprep.subr.mxu0 0.0
  %311 = vmatpush2.msra.mxu0 0.0
  %312 = vmatprep.subr.mxu0 0.0
  %313 = vmatpush2.msra.mxu0 0.0
  %314 = vmatprep.subr.mxu0 0.0
  %315 = vmatpush2.msra.mxu0 0.0
  %316 = vmatprep.subr.mxu0 0.0
  %317 = vmatpush2.msra.mxu0 0.0
  %318 = vmatprep.subr.mxu0 0.0
  %319 = vmatpush2.msra.mxu0 0.0
  %320 = vmatprep.subr.mxu0 0.0
  %321 = vmatpush2.msra.mxu0 0.0
  %322 = vmatprep.mubr.f32.mxu0 0.0
  %323 = vmatmul.mubr.f32.gmra.mxu0 %v243
  %v324 = vpop.f32.mrf.mxu0
  %v325 = vadd.f32 0.0, %v324
  %v326 = vpop.f32.mrf.mxu0
  %327 = vmatprep.mubr.f32.mxu0 0.0
  %328 = vmatmul.mubr.f32.gmra.mxu0 %v246
  %v329 = vpop.f32.mrf.mxu0
  %v330 = vadd.f32 0.0, %v329
  %v331 = vpop.f32.mrf.mxu0
  %332 = vmatprep.mubr.f32.mxu0 0.0
  %333 = vmatmul.mubr.f32.gmra.mxu0 %v249
  %v334 = vpop.f32.mrf.mxu0
  %v335 = vadd.f32 0.0, %v334
  %v336 = vpop.f32.mrf.mxu0
  %337 = vmatprep.mubr.f32.mxu0 0.0
  %338 = vmatmul.mubr.f32.gmra.mxu0 %v252
  %v339 = vpop.f32.mrf.mxu0
  %v340 = vadd.f32 0.0, %v339
  %v341 = vpop.f32.mrf.mxu0
  %342 = vdwg.mxu0
  %v343 = vld [vmem:[%s5] sm:$0xff]
  %v344 = vld [vmem:[%s5 + $0x8] sm:$0xff]
  %v345 = vld [vmem:[%s5 + $0x10] sm:$0xff]
  %v346 = vld [vmem:[%s5 + $0x18] sm:$0xff]
  %v347 = vld [vmem:[%s5 + $0x20] sm:$0xff]
  %v348 = vld [vmem:[%s5 + $0x28] sm:$0xff]
  %v349 = vld [vmem:[%s5 + $0x30] sm:$0xff]
  %v350 = vld [vmem:[%s5 + $0x38] sm:$0xff]
  %v351 = vld [vmem:[%s5 + $0x40] sm:$0xff]
  %v352 = vld [vmem:[%s5 + $0x48] sm:$0xff]
  %v353 = vld [vmem:[%s5 + $0x50] sm:$0xff]
  %v354 = vld [vmem:[%s5 + $0x58] sm:$0xff]
  %v355 = vld [vmem:[%s5 + $0x60] sm:$0xff]
  %v356 = vld [vmem:[%s5 + $0x68] sm:$0xff]
  %v357 = vld [vmem:[%s5 + $0x70] sm:$0xff]
  %v358 = vld [vmem:[%s5 + $0x78] sm:$0xff]
  %v359 = vld [vmem:[%s5 + $0x80] sm:$0xff]
  %v360 = vld [vmem:[%s5 + $0x88] sm:$0xff]
  %v361 = vld [vmem:[%s5 + $0x90] sm:$0xff]
  %v362 = vld [vmem:[%s5 + $0x98] sm:$0xff]
  %v363 = vld [vmem:[%s5 + $0xa0] sm:$0xff]
  %v364 = vld [vmem:[%s5 + $0xa8] sm:$0xff]
  %v365 = vld [vmem:[%s5 + $0xb0] sm:$0xff]
  %v366 = vld [vmem:[%s5 + $0xb8] sm:$0xff]
  %v367 = vld [vmem:[%s5 + $0xc0] sm:$0xff]
  %v368 = vld [vmem:[%s5 + $0xc8] sm:$0xff]
  %v369 = vld [vmem:[%s5 + $0xd0] sm:$0xff]
  %v370 = vld [vmem:[%s5 + $0xd8] sm:$0xff]
  %v371 = vld [vmem:[%s5 + $0xe0] sm:$0xff]
  %v372 = vld [vmem:[%s5 + $0xe8] sm:$0xff]
  %v373 = vld [vmem:[%s5 + $0xf0] sm:$0xff]
  %v374 = vld [vmem:[%s5 + $0xf8] sm:$0xff]
  %v375 = vld [vmem:[%s5 + $0x100] sm:$0xff]
  %v376 = vld [vmem:[%s5 + $0x108] sm:$0xff]
  %v377 = vld [vmem:[%s5 + $0x110] sm:$0xff]
  %v378 = vld [vmem:[%s5 + $0x118] sm:$0xff]
  %v379 = vld [vmem:[%s5 + $0x120] sm:$0xff]
  %v380 = vld [vmem:[%s5 + $0x128] sm:$0xff]
  %v381 = vld [vmem:[%s5 + $0x130] sm:$0xff]
  %v382 = vld [vmem:[%s5 + $0x138] sm:$0xff]
  %v383 = vld [vmem:[%s5 + $0x140] sm:$0xff]
  %v384 = vld [vmem:[%s5 + $0x148] sm:$0xff]
  %v385 = vld [vmem:[%s5 + $0x150] sm:$0xff]
  %v386 = vld [vmem:[%s5 + $0x158] sm:$0xff]
  %v387 = vld [vmem:[%s5 + $0x160] sm:$0xff]
  %v388 = vld [vmem:[%s5 + $0x168] sm:$0xff]
  %v389 = vld [vmem:[%s5 + $0x170] sm:$0xff]
  %v390 = vld [vmem:[%s5 + $0x178] sm:$0xff]
  %v391 = vld [vmem:[%s5 + $0x180] sm:$0xff]
  %v392 = vld [vmem:[%s5 + $0x188] sm:$0xff]
  %v393 = vld [vmem:[%s5 + $0x190] sm:$0xff]
  %v394 = vld [vmem:[%s5 + $0x198] sm:$0xff]
  %v395 = vld [vmem:[%s5 + $0x1a0] sm:$0xff]
  %v396 = vld [vmem:[%s5 + $0x1a8] sm:$0xff]
  %v397 = vld [vmem:[%s5 + $0x1b0] sm:$0xff]
  %v398 = vld [vmem:[%s5 + $0x1b8] sm:$0xff]
  %v399 = vld [vmem:[%s5 + $0x1c0] sm:$0xff]
  %v400 = vld [vmem:[%s5 + $0x1c8] sm:$0xff]
  %v401 = vld [vmem:[%s5 + $0x1d0] sm:$0xff]
  %v402 = vld [vmem:[%s5 + $0x1d8] sm:$0xff]
  %v403 = vld [vmem:[%s5 + $0x1e0] sm:$0xff]
  %v404 = vld [vmem:[%s5 + $0x1e8] sm:$0xff]
  %v405 = vld [vmem:[%s5 + $0x1f0] sm:$0xff]
  %v406 = vld [vmem:[%s5 + $0x1f8] sm:$0xff]
  %407 = vmatprep.subr.mxu0 %v404
  %408 = vmatpush1.msra.mxu0 %v403
  %409 = vmatprep.subr.mxu0 %v400
  %410 = vmatpush1.msra.mxu0 %v399
  %411 = vmatprep.subr.mxu0 %v396
  %412 = vmatpush1.msra.mxu0 %v395
  %413 = vmatprep.subr.mxu0 %v392
  %414 = vmatpush1.msra.mxu0 %v391
  %415 = vmatprep.subr.mxu0 %v388
  %416 = vmatpush1.msra.mxu0 %v387
  %417 = vmatprep.subr.mxu0 %v384
  %418 = vmatpush1.msra.mxu0 %v383
  %419 = vmatprep.subr.mxu0 %v380
  %420 = vmatpush1.msra.mxu0 %v379
  %421 = vmatprep.subr.mxu0 %v376
  %422 = vmatpush1.msra.mxu0 %v375
  %423 = vmatprep.subr.mxu0 %v372
  %424 = vmatpush1.msra.mxu0 %v371
  %425 = vmatprep.subr.mxu0 %v368
  %426 = vmatpush1.msra.mxu0 %v367
  %427 = vmatprep.subr.mxu0 %v364
  %428 = vmatpush1.msra.mxu0 %v363
  %429 = vmatprep.subr.mxu0 %v360
  %430 = vmatpush1.msra.mxu0 %v359
  %431 = vmatprep.subr.mxu0 %v356
  %432 = vmatpush1.msra.mxu0 %v355
  %433 = vmatprep.subr.mxu0 %v352
  %434 = vmatpush1.msra.mxu0 %v351
  %435 = vmatprep.subr.mxu0 %v348
  %436 = vmatpush1.msra.mxu0 %v347
  %437 = vmatprep.subr.mxu0 %v344
  %438 = vmatpush1.msra.mxu0 %v343
  %439 = vmatprep.subr.mxu0 0.0
  %440 = vmatpush2.msra.mxu0 0.0
  %441 = vmatprep.subr.mxu0 0.0
  %442 = vmatpush2.msra.mxu0 0.0
  %443 = vmatprep.subr.mxu0 0.0
  %444 = vmatpush2.msra.mxu0 0.0
  %445 = vmatprep.subr.mxu0 0.0
  %446 = vmatpush2.msra.mxu0 0.0
  %447 = vmatprep.subr.mxu0 0.0
  %448 = vmatpush2.msra.mxu0 0.0
  %449 = vmatprep.subr.mxu0 0.0
  %450 = vmatpush2.msra.mxu0 0.0
  %451 = vmatprep.subr.mxu0 0.0
  %452 = vmatpush2.msra.mxu0 0.0
  %453 = vmatprep.subr.mxu0 0.0
  %454 = vmatpush2.msra.mxu0 0.0
  %455 = vmatprep.subr.mxu0 0.0
  %456 = vmatpush2.msra.mxu0 0.0
  %457 = vmatprep.subr.mxu0 0.0
  %458 = vmatpush2.msra.mxu0 0.0
  %459 = vmatprep.subr.mxu0 0.0
  %460 = vmatpush2.msra.mxu0 0.0
  %461 = vmatprep.subr.mxu0 0.0
  %462 = vmatpush2.msra.mxu0 0.0
  %463 = vmatprep.subr.mxu0 0.0
  %464 = vmatpush2.msra.mxu0 0.0
  %465 = vmatprep.subr.mxu0 0.0
  %466 = vmatpush2.msra.mxu0 0.0
  %467 = vmatprep.subr.mxu0 0.0
  %468 = vmatpush2.msra.mxu0 0.0
  %469 = vmatprep.subr.mxu0 0.0
  %470 = vmatpush2.msra.mxu0 0.0
  %471 = vmatprep.mubr.f32.mxu0 0.0
  %472 = vmatmul.mubr.f32.gmra.mxu0 %v325
  %v473 = vpop.f32.mrf.mxu0
  %v474 = vadd.f32 0.0, %v473
  %v475 = vpop.f32.mrf.mxu0
  %v476 = vadd.f32 0.0, %v475
  %477 = vmatprep.mubr.f32.mxu0 0.0
  %478 = vmatmul.mubr.f32.gmra.mxu0 %v330
  %v479 = vpop.f32.mrf.mxu0
  %v480 = vadd.f32 0.0, %v479
  %v481 = vpop.f32.mrf.mxu0
  %v482 = vadd.f32 0.0, %v481
  %483 = vmatprep.mubr.f32.mxu0 0.0
  %484 = vmatmul.mubr.f32.gmra.mxu0 %v335
  %v485 = vpop.f32.mrf.mxu0
  %v486 = vadd.f32 0.0, %v485
  %v487 = vpop.f32.mrf.mxu0
  %v488 = vadd.f32 0.0, %v487
  %489 = vmatprep.mubr.f32.mxu0 0.0
  %490 = vmatmul.mubr.f32.gmra.mxu0 %v340
  %v491 = vpop.f32.mrf.mxu0
  %v492 = vadd.f32 0.0, %v491
  %v493 = vpop.f32.mrf.mxu0
  %v494 = vadd.f32 0.0, %v493
  %495 = vdwg.mxu0
  %496 = vmatprep.subr.mxu0 %v406
  %497 = vmatpush1.msra.mxu0 %v405
  %498 = vmatprep.subr.mxu0 %v402
  %499 = vmatpush1.msra.mxu0 %v401
  %500 = vmatprep.subr.mxu0 %v398
  %501 = vmatpush1.msra.mxu0 %v397
  %502 = vmatprep.subr.mxu0 %v394
  %503 = vmatpush1.msra.mxu0 %v393
  %504 = vmatprep.subr.mxu0 %v390
  %505 = vmatpush1.msra.mxu0 %v389
  %506 = vmatprep.subr.mxu0 %v386
  %507 = vmatpush1.msra.mxu0 %v385
  %508 = vmatprep.subr.mxu0 %v382
  %509 = vmatpush1.msra.mxu0 %v381
  %510 = vmatprep.subr.mxu0 %v378
  %511 = vmatpush1.msra.mxu0 %v377
  %512 = vmatprep.subr.mxu0 %v374
  %513 = vmatpush1.msra.mxu0 %v373
  %514 = vmatprep.subr.mxu0 %v370
  %515 = vmatpush1.msra.mxu0 %v369
  %516 = vmatprep.subr.mxu0 %v366
  %517 = vmatpush1.msra.mxu0 %v365
  %518 = vmatprep.subr.mxu0 %v362
  %519 = vmatpush1.msra.mxu0 %v361
  %520 = vmatprep.subr.mxu0 %v358
  %521 = vmatpush1.msra.mxu0 %v357
  %522 = vmatprep.subr.mxu0 %v354
  %523 = vmatpush1.msra.mxu0 %v353
  %524 = vmatprep.subr.mxu0 %v350
  %525 = vmatpush1.msra.mxu0 %v349
  %526 = vmatprep.subr.mxu0 %v346
  %527 = vmatpush1.msra.mxu0 %v345
  %528 = vmatprep.subr.mxu0 0.0
  %529 = vmatpush2.msra.mxu0 0.0
  %530 = vmatprep.subr.mxu0 0.0
  %531 = vmatpush2.msra.mxu0 0.0
  %532 = vmatprep.subr.mxu0 0.0
  %533 = vmatpush2.msra.mxu0 0.0
  %534 = vmatprep.subr.mxu0 0.0
  %535 = vmatpush2.msra.mxu0 0.0
  %536 = vmatprep.subr.mxu0 0.0
  %537 = vmatpush2.msra.mxu0 0.0
  %538 = vmatprep.subr.mxu0 0.0
  %539 = vmatpush2.msra.mxu0 0.0
  %540 = vmatprep.subr.mxu0 0.0
  %541 = vmatpush2.msra.mxu0 0.0
  %542 = vmatprep.subr.mxu0 0.0
  %543 = vmatpush2.msra.mxu0 0.0
  %544 = vmatprep.subr.mxu0 0.0
  %545 = vmatpush2.msra.mxu0 0.0
  %546 = vmatprep.subr.mxu0 0.0
  %547 = vmatpush2.msra.mxu0 0.0
  %548 = vmatprep.subr.mxu0 0.0
  %549 = vmatpush2.msra.mxu0 0.0
  %550 = vmatprep.subr.mxu0 0.0
  %551 = vmatpush2.msra.mxu0 0.0
  %552 = vmatprep.subr.mxu0 0.0
  %553 = vmatpush2.msra.mxu0 0.0
  %554 = vmatprep.subr.mxu0 0.0
  %555 = vmatpush2.msra.mxu0 0.0
  %556 = vmatprep.subr.mxu0 0.0
  %557 = vmatpush2.msra.mxu0 0.0
  %558 = vmatprep.subr.mxu0 0.0
  %559 = vmatpush2.msra.mxu0 0.0
  %560 = vmatprep.mubr.f32.mxu0 0.0
  %561 = vmatmul.mubr.f32.gmra.mxu0 %v325
  %v562 = vpop.f32.mrf.mxu0
  %v563 = vadd.f32 0.0, %v562
  %v564 = vpop.f32.mrf.mxu0
  %v565 = vadd.f32 0.0, %v564
  %566 = vmatprep.mubr.f32.mxu0 0.0
  %567 = vmatmul.mubr.f32.gmra.mxu0 %v330
  %v568 = vpop.f32.mrf.mxu0
  %v569 = vadd.f32 0.0, %v568
  %v570 = vpop.f32.mrf.mxu0
  %v571 = vadd.f32 0.0, %v570
  %572 = vmatprep.mubr.f32.mxu0 0.0
  %573 = vmatmul.mubr.f32.gmra.mxu0 %v335
  %v574 = vpop.f32.mrf.mxu0
  %v575 = vadd.f32 0.0, %v574
  %v576 = vpop.f32.mrf.mxu0
  %v577 = vadd.f32 0.0, %v576
  %578 = vmatprep.mubr.f32.mxu0 0.0
  %579 = vmatmul.mubr.f32.gmra.mxu0 %v340
  %v580 = vpop.f32.mrf.mxu0
  %v581 = vadd.f32 0.0, %v580
  %v582 = vpop.f32.mrf.mxu0
  %v583 = vadd.f32 0.0, %v582
  %584 = vdwg.mxu0
  %v585 = vmul.f32 %v69, %v474
  %v586 = vmul.f32 %v70, %v476
  %v587 = vmul.f32 %v71, %v480
  %v588 = vmul.f32 %v72, %v482
  %v589 = vmul.f32 %v73, %v486
  %v590 = vmul.f32 %v74, %v488
  %v591 = vmul.f32 %v75, %v492
  %v592 = vmul.f32 %v76, %v494
  %v593 = vadd.f32 %v585, %v587
  %v594 = vadd.f32 %v593, %v589
  %v595 = vadd.f32 %v594, %v591
  %v596 = vrot.slane %v595, 4
  %v597 = vadd.f32 %v595, %v596
  %v598 = vrot.slane %v597, 2
  %v599 = vadd.f32 %v597, %v598
  %v600 = vrot.slane %v599, 1
  %v601 = vadd.f32 %v599, %v600
  %v602 = vadd.f32 %v586, %v588
  %v603 = vadd.f32 %v602, %v590
  %v604 = vadd.f32 %v603, %v592
  %v605 = vrot.slane %v604, 4
  %v606 = vadd.f32 %v604, %v605
  %v607 = vrot.slane %v606, 2
  %v608 = vadd.f32 %v606, %v607
  %v609 = vrot.slane %v608, 1
  %v610 = vadd.f32 %v608, %v609
  %v611 = vadd.f32 %v601, %v563
  %v612 = vadd.f32 %v610, %v565
  %v613 = vadd.f32 %v601, %v569
  %v614 = vadd.f32 %v610, %v571
  %v615 = vadd.f32 %v601, %v575
  %v616 = vadd.f32 %v610, %v577
  %v617 = vadd.f32 %v601, %v581
  %v618 = vadd.f32 %v610, %v583
  %v619 = vld [vmem:[%s6] sm:$0x3]
  %v621 = vlaneseq
  %v622 = vshrl.u32 %v621, 7
  %v623 = vsub.s32 0, %v622
  %v624 = vrot.slane %v619, %v623
  %v625 = vlaneseq
  %v626 = vshrl.u32 %v625, 7
  %v627 = vsub.s32 1, %v626
  %v628 = vrot.slane %v619, %v627
  %v631 = vmul.f32 %v214, %v624
  %v632 = vmul.f32 %v215, %v628
  %v633 = vmul.f32 %v216, %v624
  %v634 = vmul.f32 %v217, %v628
  %v635 = vmul.f32 %v218, %v624
  %v636 = vmul.f32 %v219, %v628
  %v637 = vmul.f32 %v220, %v624
  %v638 = vmul.f32 %v221, %v628
  %v639 = vadd.f32 %v611, %v631
  %v640 = vadd.f32 %v612, %v632
  %v641 = vadd.f32 %v613, %v633
  %v642 = vadd.f32 %v614, %v634
  %v643 = vadd.f32 %v615, %v635
  %v644 = vadd.f32 %v616, %v636
  %v645 = vadd.f32 %v617, %v637
  %v646 = vadd.f32 %v618, %v638
  %vm647 = vcmp.gt.f32.partialorder %v639, 0.0
  %vm648 = vcmp.gt.f32.partialorder %v640, 0.0
  %vm649 = vcmp.gt.f32.partialorder %v641, 0.0
  %vm650 = vcmp.gt.f32.partialorder %v642, 0.0
  %vm651 = vcmp.gt.f32.partialorder %v643, 0.0
  %vm652 = vcmp.gt.f32.partialorder %v644, 0.0
  %vm653 = vcmp.gt.f32.partialorder %v645, 0.0
  %vm654 = vcmp.gt.f32.partialorder %v646, 0.0
  %v655 = vmul.f32 %v639, 0.2
  %v656 = vmul.f32 %v640, 0.2
  %v657 = vmul.f32 %v641, 0.2
  %v658 = vmul.f32 %v642, 0.2
  %v659 = vmul.f32 %v643, 0.2
  %v660 = vmul.f32 %v644, 0.2
  %v661 = vmul.f32 %v645, 0.2
  %v662 = vmul.f32 %v646, 0.2
  %v663 = vsel %vm647, %v639, %v655
  %v664 = vsel %vm648, %v640, %v656
  %v665 = vsel %vm649, %v641, %v657
  %v666 = vsel %vm650, %v642, %v658
  %v667 = vsel %vm651, %v643, %v659
  %v668 = vsel %vm652, %v644, %v660
  %v669 = vsel %vm653, %v645, %v661
  %v670 = vsel %vm654, %v646, %v662
  %vm671 = vcmp.gt.f32.partialorder %v205, 0.0
  %vm672 = vcmp.gt.f32.partialorder %v206, 0.0
  %vm673 = vcmp.gt.f32.partialorder %v207, 0.0
  %vm674 = vcmp.gt.f32.partialorder %v208, 0.0
  %vm675 = vcmp.gt.f32.partialorder %v209, 0.0
  %vm676 = vcmp.gt.f32.partialorder %v210, 0.0
  %vm677 = vcmp.gt.f32.partialorder %v211, 0.0
  %vm678 = vcmp.gt.f32.partialorder %v212, 0.0
  %v679 = vsel %vm671, %v663, -1e+30
  %v680 = vsel %vm672, %v664, -1e+30
  %v681 = vsel %vm673, %v665, -1e+30
  %v682 = vsel %vm674, %v666, -1e+30
  %v683 = vsel %vm675, %v667, -1e+30
  %v684 = vsel %vm676, %v668, -1e+30
  %v685 = vsel %vm677, %v669, -1e+30
  %v686 = vsel %vm678, %v670, -1e+30
  %v687 = vmax.f32 %v679, %v680
  %688 = vmax.xlane.f32.xlu0 %v687
  %v689 = vpop.xlane.xlu0 %688
  %v690 = vmax.f32 %v681, %v682
  %691 = vmax.xlane.f32.xlu0 %v690
  %v692 = vpop.xlane.xlu0 %691
  %v693 = vmax.f32 %v683, %v684
  %694 = vmax.xlane.f32.xlu0 %v693
  %v695 = vpop.xlane.xlu0 %694
  %v696 = vmax.f32 %v685, %v686
  %697 = vmax.xlane.f32.xlu0 %v696
  %v698 = vpop.xlane.xlu0 %697
  %v699 = vsub.f32 %v679, %v689
  %v700 = vsub.f32 %v680, %v689
  %v701 = vsub.f32 %v681, %v692
  %v702 = vsub.f32 %v682, %v692
  %v703 = vsub.f32 %v683, %v695
  %v704 = vsub.f32 %v684, %v695
  %v705 = vsub.f32 %v685, %v698
  %v706 = vsub.f32 %v686, %v698
  %v707 = vmul.f32 %v699, 1.442695
  %v708 = vpow.pop %v707
  %v709 = vmul.f32 %v700, 1.442695
  %v710 = vpow.pop %v709
  %v711 = vmul.f32 %v701, 1.442695
  %v712 = vpow.pop %v711
  %v713 = vmul.f32 %v702, 1.442695
  %v714 = vpow.pop %v713
  %v715 = vmul.f32 %v703, 1.442695
  %v716 = vpow.pop %v715
  %v717 = vmul.f32 %v704, 1.442695
  %v718 = vpow.pop %v717
  %v719 = vmul.f32 %v705, 1.442695
  %v720 = vpow.pop %v719
  %v721 = vmul.f32 %v706, 1.442695
  %v722 = vpow.pop %v721
  %v723 = vmul.f32 %v708, %v205
  %v724 = vmul.f32 %v710, %v206
  %v725 = vmul.f32 %v712, %v207
  %v726 = vmul.f32 %v714, %v208
  %v727 = vmul.f32 %v716, %v209
  %v728 = vmul.f32 %v718, %v210
  %v729 = vmul.f32 %v720, %v211
  %v730 = vmul.f32 %v722, %v212
  %731 = vmatprep.subr.mxu0 %v172
  %732 = vmatpush1.msra.mxu0 %v171
  %733 = vmatprep.subr.mxu0 %v170
  %734 = vmatpush1.msra.mxu0 %v169
  %735 = vmatprep.subr.mxu0 %v168
  %736 = vmatpush1.msra.mxu0 %v167
  %737 = vmatprep.subr.mxu0 %v166
  %738 = vmatpush1.msra.mxu0 %v165
  %739 = vmatprep.subr.mxu0 %v164
  %740 = vmatpush1.msra.mxu0 %v163
  %741 = vmatprep.subr.mxu0 %v162
  %742 = vmatpush1.msra.mxu0 %v161
  %743 = vmatprep.subr.mxu0 %v160
  %744 = vmatpush1.msra.mxu0 %v159
  %745 = vmatprep.subr.mxu0 %v158
  %746 = vmatpush1.msra.mxu0 %v157
  %747 = vmatprep.subr.mxu0 %v156
  %748 = vmatpush1.msra.mxu0 %v155
  %749 = vmatprep.subr.mxu0 %v154
  %750 = vmatpush1.msra.mxu0 %v153
  %751 = vmatprep.subr.mxu0 %v152
  %752 = vmatpush1.msra.mxu0 %v151
  %753 = vmatprep.subr.mxu0 %v150
  %754 = vmatpush1.msra.mxu0 %v149
  %755 = vmatprep.subr.mxu0 %v148
  %756 = vmatpush1.msra.mxu0 %v147
  %757 = vmatprep.subr.mxu0 %v146
  %758 = vmatpush1.msra.mxu0 %v145
  %759 = vmatprep.subr.mxu0 %v144
  %760 = vmatpush1.msra.mxu0 %v143
  %761 = vmatprep.subr.mxu0 %v142
  %762 = vmatpush1.msra.mxu0 %v141
  %763 = vmatprep.subr.mxu0 %v204
  %764 = vmatpush2.msra.mxu0 %v203
  %765 = vmatprep.subr.mxu0 %v202
  %766 = vmatpush2.msra.mxu0 %v201
  %767 = vmatprep.subr.mxu0 %v200
  %768 = vmatpush2.msra.mxu0 %v199
  %769 = vmatprep.subr.mxu0 %v198
  %770 = vmatpush2.msra.mxu0 %v197
  %771 = vmatprep.subr.mxu0 %v196
  %772 = vmatpush2.msra.mxu0 %v195
  %773 = vmatprep.subr.mxu0 %v194
  %774 = vmatpush2.msra.mxu0 %v193
  %775 = vmatprep.subr.mxu0 %v192
  %776 = vmatpush2.msra.mxu0 %v191
  %777 = vmatprep.subr.mxu0 %v190
  %778 = vmatpush2.msra.mxu0 %v189
  %779 = vmatprep.subr.mxu0 %v188
  %780 = vmatpush2.msra.mxu0 %v187
  %781 = vmatprep.subr.mxu0 %v186
  %782 = vmatpush2.msra.mxu0 %v185
  %783 = vmatprep.subr.mxu0 %v184
  %784 = vmatpush2.msra.mxu0 %v183
  %785 = vmatprep.subr.mxu0 %v182
  %786 = vmatpush2.msra.mxu0 %v181
  %787 = vmatprep.subr.mxu0 %v180
  %788 = vmatpush2.msra.mxu0 %v179
  %789 = vmatprep.subr.mxu0 %v178
  %790 = vmatpush2.msra.mxu0 %v177
  %791 = vmatprep.subr.mxu0 %v176
  %792 = vmatpush2.msra.mxu0 %v175
  %793 = vmatprep.subr.mxu0 %v174
  %794 = vmatpush2.msra.mxu0 %v173
  %795 = vmatprep.mubr.f32.mxu0 %v724
  %796 = vmatmul.mubr.f32.gmra.mxu0 %v723
  %v797 = vpop.f32.mrf.mxu0
  %v798 = vadd.f32 0.0, %v797
  %v799 = vpop.f32.mrf.mxu0
  %v800 = vadd.f32 0.0, %v799
  %801 = vmatprep.mubr.f32.mxu0 %v726
  %802 = vmatmul.mubr.f32.gmra.mxu0 %v725
  %v803 = vpop.f32.mrf.mxu0
  %v804 = vadd.f32 0.0, %v803
  %v805 = vpop.f32.mrf.mxu0
  %v806 = vadd.f32 0.0, %v805
  %807 = vmatprep.mubr.f32.mxu0 %v728
  %808 = vmatmul.mubr.f32.gmra.mxu0 %v727
  %v809 = vpop.f32.mrf.mxu0
  %v810 = vadd.f32 0.0, %v809
  %v811 = vpop.f32.mrf.mxu0
  %v812 = vadd.f32 0.0, %v811
  %813 = vmatprep.mubr.f32.mxu0 %v730
  %814 = vmatmul.mubr.f32.gmra.mxu0 %v729
  %v815 = vpop.f32.mrf.mxu0
  %v816 = vadd.f32 0.0, %v815
  %v817 = vpop.f32.mrf.mxu0
  %v818 = vadd.f32 0.0, %v817
  %819 = vdwg.mxu0
  %v820 = vmax.f32 %v798, 1e-16
  %v821 = vmax.f32 %v800, 1e-16
  %v822 = vmax.f32 %v804, 1e-16
  %v823 = vmax.f32 %v806, 1e-16
  %v824 = vmax.f32 %v810, 1e-16
  %v825 = vmax.f32 %v812, 1e-16
  %v826 = vmax.f32 %v816, 1e-16
  %v827 = vmax.f32 %v818, 1e-16
  %v828 = vrcp.pop %v820
  %v829 = vmul.f32 1.0, %v828
  %v830 = vrcp.pop %v821
  %v831 = vmul.f32 1.0, %v830
  %v832 = vrcp.pop %v822
  %v833 = vmul.f32 1.0, %v832
  %v834 = vrcp.pop %v823
  %v835 = vmul.f32 1.0, %v834
  %v836 = vrcp.pop %v824
  %v837 = vmul.f32 1.0, %v836
  %v838 = vrcp.pop %v825
  %v839 = vmul.f32 1.0, %v838
  %v840 = vrcp.pop %v826
  %v841 = vmul.f32 1.0, %v840
  %v842 = vrcp.pop %v827
  %v843 = vmul.f32 1.0, %v842
  %v844 = vmul.f32 %v723, %v829
  %v845 = vmul.f32 %v724, %v831
  %v846 = vmul.f32 %v725, %v833
  %v847 = vmul.f32 %v726, %v835
  %v848 = vmul.f32 %v727, %v837
  %v849 = vmul.f32 %v728, %v839
  %v850 = vmul.f32 %v729, %v841
  %v851 = vmul.f32 %v730, %v843
  %vm852 = vcmask 261120
  %v854 = vsel %vm852, %v77, 0
  %v857 = vsel %vm852, %v78, 0
  %v860 = vsel %vm852, %v79, 0
  %v863 = vsel %vm852, %v80, 0
  %v866 = vsel %vm852, %v81, 0
  %v869 = vsel %vm852, %v82, 0
  %v872 = vsel %vm852, %v83, 0
  %v875 = vsel %vm852, %v84, 0
  %v878 = vsel %vm852, %v85, 0
  %v881 = vsel %vm852, %v86, 0
  %v884 = vsel %vm852, %v87, 0
  %v887 = vsel %vm852, %v88, 0
  %v890 = vsel %vm852, %v89, 0
  %v893 = vsel %vm852, %v90, 0
  %v896 = vsel %vm852, %v91, 0
  %v899 = vsel %vm852, %v92, 0
  %v902 = vsel %vm852, %v93, 0
  %v905 = vsel %vm852, %v94, 0
  %v908 = vsel %vm852, %v95, 0
  %v911 = vsel %vm852, %v96, 0
  %v914 = vsel %vm852, %v97, 0
  %v917 = vsel %vm852, %v98, 0
  %v920 = vsel %vm852, %v99, 0
  %v923 = vsel %vm852, %v100, 0
  %v926 = vsel %vm852, %v101, 0
  %v929 = vsel %vm852, %v102, 0
  %v932 = vsel %vm852, %v103, 0
  %v935 = vsel %vm852, %v104, 0
  %v938 = vsel %vm852, %v105, 0
  %v941 = vsel %vm852, %v106, 0
  %v944 = vsel %vm852, %v107, 0
  %v947 = vsel %vm852, %v108, 0
  %949 = vmatprep.subr.mxu0 0.0
  %950 = vmatpush1.msra.mxu0 0.0
  %951 = vmatprep.subr.mxu0 0.0
  %952 = vmatpush1.msra.mxu0 0.0
  %953 = vmatprep.subr.mxu0 0.0
  %954 = vmatpush1.msra.mxu0 0.0
  %955 = vmatprep.subr.mxu0 0.0
  %956 = vmatpush1.msra.mxu0 0.0
  %957 = vmatprep.subr.mxu0 0.0
  %958 = vmatpush1.msra.mxu0 0.0
  %959 = vmatprep.subr.mxu0 0.0
  %960 = vmatpush1.msra.mxu0 0.0
  %961 = vmatprep.subr.mxu0 0.0
  %962 = vmatpush1.msra.mxu0 0.0
  %963 = vmatprep.subr.mxu0 0.0
  %964 = vmatpush1.msra.mxu0 0.0
  %965 = vmatprep.subr.mxu0 0.0
  %966 = vmatpush1.msra.mxu0 0.0
  %967 = vmatprep.subr.mxu0 0.0
  %968 = vmatpush1.msra.mxu0 0.0
  %969 = vmatprep.subr.mxu0 0.0
  %970 = vmatpush1.msra.mxu0 0.0
  %971 = vmatprep.subr.mxu0 0.0
  %972 = vmatpush1.msra.mxu0 0.0
  %973 = vmatprep.subr.mxu0 0.0
  %974 = vmatpush1.msra.mxu0 %v340
  %975 = vmatprep.subr.mxu0 0.0
  %976 = vmatpush1.msra.mxu0 %v335
  %977 = vmatprep.subr.mxu0 0.0
  %978 = vmatpush1.msra.mxu0 %v330
  %979 = vmatprep.subr.mxu0 0.0
  %980 = vmatpush1.msra.mxu0 %v325
  %981 = vmatprep.subr.mxu0 0.0
  %982 = vmatpush2.msra.mxu0 0.0
  %983 = vmatprep.subr.mxu0 0.0
  %984 = vmatpush2.msra.mxu0 0.0
  %985 = vmatprep.subr.mxu0 0.0
  %986 = vmatpush2.msra.mxu0 0.0
  %987 = vmatprep.subr.mxu0 0.0
  %988 = vmatpush2.msra.mxu0 0.0
  %989 = vmatprep.subr.mxu0 0.0
  %990 = vmatpush2.msra.mxu0 0.0
  %991 = vmatprep.subr.mxu0 0.0
  %992 = vmatpush2.msra.mxu0 0.0
  %993 = vmatprep.subr.mxu0 0.0
  %994 = vmatpush2.msra.mxu0 0.0
  %995 = vmatprep.subr.mxu0 0.0
  %996 = vmatpush2.msra.mxu0 0.0
  %997 = vmatprep.subr.mxu0 0.0
  %998 = vmatpush2.msra.mxu0 0.0
  %999 = vmatprep.subr.mxu0 0.0
  %1000 = vmatpush2.msra.mxu0 0.0
  %1001 = vmatprep.subr.mxu0 0.0
  %1002 = vmatpush2.msra.mxu0 0.0
  %1003 = vmatprep.subr.mxu0 0.0
  %1004 = vmatpush2.msra.mxu0 0.0
  %1005 = vmatprep.subr.mxu0 0.0
  %1006 = vmatpush2.msra.mxu0 0.0
  %1007 = vmatprep.subr.mxu0 0.0
  %1008 = vmatpush2.msra.mxu0 0.0
  %1009 = vmatprep.subr.mxu0 0.0
  %1010 = vmatpush2.msra.mxu0 0.0
  %1011 = vmatprep.subr.mxu0 0.0
  %1012 = vmatpush2.msra.mxu0 0.0
  %1013 = vmatprep.mubr.f32.mxu0 0.0
  %1014 = vmatmul.mubr.f32.gmra.mxu0 %v854
  %v1015 = vpop.f32.mrf.mxu0
  %v1016 = vadd.f32 0.0, %v1015
  %v1017 = vpop.f32.mrf.mxu0
  %1018 = vmatprep.mubr.f32.mxu0 0.0
  %1019 = vmatmul.mubr.f32.gmra.mxu0 %v857
  %v1020 = vpop.f32.mrf.mxu0
  %v1021 = vadd.f32 0.0, %v1020
  %v1022 = vpop.f32.mrf.mxu0
  %1023 = vmatprep.mubr.f32.mxu0 0.0
  %1024 = vmatmul.mubr.f32.gmra.mxu0 %v860
  %v1025 = vpop.f32.mrf.mxu0
  %v1026 = vadd.f32 0.0, %v1025
  %v1027 = vpop.f32.mrf.mxu0
  %1028 = vmatprep.mubr.f32.mxu0 0.0
  %1029 = vmatmul.mubr.f32.gmra.mxu0 %v863
  %v1030 = vpop.f32.mrf.mxu0
  %v1031 = vadd.f32 0.0, %v1030
  %v1032 = vpop.f32.mrf.mxu0
  %1033 = vmatprep.mubr.f32.mxu0 0.0
  %1034 = vmatmul.mubr.f32.gmra.mxu0 %v866
  %v1035 = vpop.f32.mrf.mxu0
  %v1036 = vadd.f32 0.0, %v1035
  %v1037 = vpop.f32.mrf.mxu0
  %1038 = vmatprep.mubr.f32.mxu0 0.0
  %1039 = vmatmul.mubr.f32.gmra.mxu0 %v869
  %v1040 = vpop.f32.mrf.mxu0
  %v1041 = vadd.f32 0.0, %v1040
  %v1042 = vpop.f32.mrf.mxu0
  %1043 = vmatprep.mubr.f32.mxu0 0.0
  %1044 = vmatmul.mubr.f32.gmra.mxu0 %v872
  %v1045 = vpop.f32.mrf.mxu0
  %v1046 = vadd.f32 0.0, %v1045
  %v1047 = vpop.f32.mrf.mxu0
  %1048 = vmatprep.mubr.f32.mxu0 0.0
  %1049 = vmatmul.mubr.f32.gmra.mxu0 %v875
  %v1050 = vpop.f32.mrf.mxu0
  %v1051 = vadd.f32 0.0, %v1050
  %v1052 = vpop.f32.mrf.mxu0
  %1053 = vmatprep.mubr.f32.mxu0 0.0
  %1054 = vmatmul.mubr.f32.gmra.mxu0 %v878
  %v1055 = vpop.f32.mrf.mxu0
  %v1056 = vadd.f32 0.0, %v1055
  %v1057 = vpop.f32.mrf.mxu0
  %1058 = vmatprep.mubr.f32.mxu0 0.0
  %1059 = vmatmul.mubr.f32.gmra.mxu0 %v881
  %v1060 = vpop.f32.mrf.mxu0
  %v1061 = vadd.f32 0.0, %v1060
  %v1062 = vpop.f32.mrf.mxu0
  %1063 = vmatprep.mubr.f32.mxu0 0.0
  %1064 = vmatmul.mubr.f32.gmra.mxu0 %v884
  %v1065 = vpop.f32.mrf.mxu0
  %v1066 = vadd.f32 0.0, %v1065
  %v1067 = vpop.f32.mrf.mxu0
  %1068 = vmatprep.mubr.f32.mxu0 0.0
  %1069 = vmatmul.mubr.f32.gmra.mxu0 %v887
  %v1070 = vpop.f32.mrf.mxu0
  %v1071 = vadd.f32 0.0, %v1070
  %v1072 = vpop.f32.mrf.mxu0
  %1073 = vmatprep.mubr.f32.mxu0 0.0
  %1074 = vmatmul.mubr.f32.gmra.mxu0 %v890
  %v1075 = vpop.f32.mrf.mxu0
  %v1076 = vadd.f32 0.0, %v1075
  %v1077 = vpop.f32.mrf.mxu0
  %1078 = vmatprep.mubr.f32.mxu0 0.0
  %1079 = vmatmul.mubr.f32.gmra.mxu0 %v893
  %v1080 = vpop.f32.mrf.mxu0
  %v1081 = vadd.f32 0.0, %v1080
  %v1082 = vpop.f32.mrf.mxu0
  %1083 = vmatprep.mubr.f32.mxu0 0.0
  %1084 = vmatmul.mubr.f32.gmra.mxu0 %v896
  %v1085 = vpop.f32.mrf.mxu0
  %v1086 = vadd.f32 0.0, %v1085
  %v1087 = vpop.f32.mrf.mxu0
  %1088 = vmatprep.mubr.f32.mxu0 0.0
  %1089 = vmatmul.mubr.f32.gmra.mxu0 %v899
  %v1090 = vpop.f32.mrf.mxu0
  %v1091 = vadd.f32 0.0, %v1090
  %v1092 = vpop.f32.mrf.mxu0
  %1093 = vmatprep.mubr.f32.mxu0 0.0
  %1094 = vmatmul.mubr.f32.gmra.mxu0 %v902
  %v1095 = vpop.f32.mrf.mxu0
  %v1096 = vadd.f32 0.0, %v1095
  %v1097 = vpop.f32.mrf.mxu0
  %1098 = vmatprep.mubr.f32.mxu0 0.0
  %1099 = vmatmul.mubr.f32.gmra.mxu0 %v905
  %v1100 = vpop.f32.mrf.mxu0
  %v1101 = vadd.f32 0.0, %v1100
  %v1102 = vpop.f32.mrf.mxu0
  %1103 = vmatprep.mubr.f32.mxu0 0.0
  %1104 = vmatmul.mubr.f32.gmra.mxu0 %v908
  %v1105 = vpop.f32.mrf.mxu0
  %v1106 = vadd.f32 0.0, %v1105
  %v1107 = vpop.f32.mrf.mxu0
  %1108 = vmatprep.mubr.f32.mxu0 0.0
  %1109 = vmatmul.mubr.f32.gmra.mxu0 %v911
  %v1110 = vpop.f32.mrf.mxu0
  %v1111 = vadd.f32 0.0, %v1110
  %v1112 = vpop.f32.mrf.mxu0
  %1113 = vmatprep.mubr.f32.mxu0 0.0
  %1114 = vmatmul.mubr.f32.gmra.mxu0 %v914
  %v1115 = vpop.f32.mrf.mxu0
  %v1116 = vadd.f32 0.0, %v1115
  %v1117 = vpop.f32.mrf.mxu0
  %1118 = vmatprep.mubr.f32.mxu0 0.0
  %1119 = vmatmul.mubr.f32.gmra.mxu0 %v917
  %v1120 = vpop.f32.mrf.mxu0
  %v1121 = vadd.f32 0.0, %v1120
  %v1122 = vpop.f32.mrf.mxu0
  %1123 = vmatprep.mubr.f32.mxu0 0.0
  %1124 = vmatmul.mubr.f32.gmra.mxu0 %v920
  %v1125 = vpop.f32.mrf.mxu0
  %v1126 = vadd.f32 0.0, %v1125
  %v1127 = vpop.f32.mrf.mxu0
  %1128 = vmatprep.mubr.f32.mxu0 0.0
  %1129 = vmatmul.mubr.f32.gmra.mxu0 %v923
  %v1130 = vpop.f32.mrf.mxu0
  %v1131 = vadd.f32 0.0, %v1130
  %v1132 = vpop.f32.mrf.mxu0
  %1133 = vmatprep.mubr.f32.mxu0 0.0
  %1134 = vmatmul.mubr.f32.gmra.mxu0 %v926
  %v1135 = vpop.f32.mrf.mxu0
  %v1136 = vadd.f32 0.0, %v1135
  %v1137 = vpop.f32.mrf.mxu0
  %1138 = vmatprep.mubr.f32.mxu0 0.0
  %1139 = vmatmul.mubr.f32.gmra.mxu0 %v929
  %v1140 = vpop.f32.mrf.mxu0
  %v1141 = vadd.f32 0.0, %v1140
  %v1142 = vpop.f32.mrf.mxu0
  %1143 = vmatprep.mubr.f32.mxu0 0.0
  %1144 = vmatmul.mubr.f32.gmra.mxu0 %v932
  %v1145 = vpop.f32.mrf.mxu0
  %v1146 = vadd.f32 0.0, %v1145
  %v1147 = vpop.f32.mrf.mxu0
  %1148 = vmatprep.mubr.f32.mxu0 0.0
  %1149 = vmatmul.mubr.f32.gmra.mxu0 %v935
  %v1150 = vpop.f32.mrf.mxu0
  %v1151 = vadd.f32 0.0, %v1150
  %v1152 = vpop.f32.mrf.mxu0
  %1153 = vmatprep.mubr.f32.mxu0 0.0
  %1154 = vmatmul.mubr.f32.gmra.mxu0 %v938
  %v1155 = vpop.f32.mrf.mxu0
  %v1156 = vadd.f32 0.0, %v1155
  %v1157 = vpop.f32.mrf.mxu0
  %1158 = vmatprep.mubr.f32.mxu0 0.0
  %1159 = vmatmul.mubr.f32.gmra.mxu0 %v941
  %v1160 = vpop.f32.mrf.mxu0
  %v1161 = vadd.f32 0.0, %v1160
  %v1162 = vpop.f32.mrf.mxu0
  %1163 = vmatprep.mubr.f32.mxu0 0.0
  %1164 = vmatmul.mubr.f32.gmra.mxu0 %v944
  %v1165 = vpop.f32.mrf.mxu0
  %v1166 = vadd.f32 0.0, %v1165
  %v1167 = vpop.f32.mrf.mxu0
  %1168 = vmatprep.mubr.f32.mxu0 0.0
  %1169 = vmatmul.mubr.f32.gmra.mxu0 %v947
  %v1170 = vpop.f32.mrf.mxu0
  %v1171 = vadd.f32 0.0, %v1170
  %v1172 = vpop.f32.mrf.mxu0
  %1173 = vdwg.mxu0
  %v1174 = vmul.f32 %v1016, %v109
  %v1175 = vmul.f32 %v1021, %v110
  %v1176 = vmul.f32 %v1026, %v111
  %v1177 = vmul.f32 %v1031, %v112
  %v1178 = vmul.f32 %v1036, %v113
  %v1179 = vmul.f32 %v1041, %v114
  %v1180 = vmul.f32 %v1046, %v115
  %v1181 = vmul.f32 %v1051, %v116
  %v1182 = vmul.f32 %v1056, %v117
  %v1183 = vmul.f32 %v1061, %v118
  %v1184 = vmul.f32 %v1066, %v119
  %v1185 = vmul.f32 %v1071, %v120
  %v1186 = vmul.f32 %v1076, %v121
  %v1187 = vmul.f32 %v1081, %v122
  %v1188 = vmul.f32 %v1086, %v123
  %v1189 = vmul.f32 %v1091, %v124
  %v1190 = vmul.f32 %v1096, %v125
  %v1191 = vmul.f32 %v1101, %v126
  %v1192 = vmul.f32 %v1106, %v127
  %v1193 = vmul.f32 %v1111, %v128
  %v1194 = vmul.f32 %v1116, %v129
  %v1195 = vmul.f32 %v1121, %v130
  %v1196 = vmul.f32 %v1126, %v131
  %v1197 = vmul.f32 %v1131, %v132
  %v1198 = vmul.f32 %v1136, %v133
  %v1199 = vmul.f32 %v1141, %v134
  %v1200 = vmul.f32 %v1146, %v135
  %v1201 = vmul.f32 %v1151, %v136
  %v1202 = vmul.f32 %v1156, %v137
  %v1203 = vmul.f32 %v1161, %v138
  %v1204 = vmul.f32 %v1166, %v139
  %v1205 = vmul.f32 %v1171, %v140
  %v1206 = vld [vmem:[%s7] sm:$0x1]
  %v1208 = vlaneseq
  %v1209 = vshrl.u32 %v1208, 7
  %v1210 = vsub.s32 0, %v1209
  %v1211 = vrot.slane %v1206, %v1210
  %1213 = vmatprep.subr.mxu0 0.0
  %1214 = vmatpush1.msra.mxu0 %v1189
  %1215 = vmatprep.subr.mxu0 0.0
  %1216 = vmatpush1.msra.mxu0 %v1188
  %1217 = vmatprep.subr.mxu0 0.0
  %1218 = vmatpush1.msra.mxu0 %v1187
  %1219 = vmatprep.subr.mxu0 0.0
  %1220 = vmatpush1.msra.mxu0 %v1186
  %1221 = vmatprep.subr.mxu0 0.0
  %1222 = vmatpush1.msra.mxu0 %v1185
  %1223 = vmatprep.subr.mxu0 0.0
  %1224 = vmatpush1.msra.mxu0 %v1184
  %1225 = vmatprep.subr.mxu0 0.0
  %1226 = vmatpush1.msra.mxu0 %v1183
  %1227 = vmatprep.subr.mxu0 0.0
  %1228 = vmatpush1.msra.mxu0 %v1182
  %1229 = vmatprep.subr.mxu0 0.0
  %1230 = vmatpush1.msra.mxu0 %v1181
  %1231 = vmatprep.subr.mxu0 0.0
  %1232 = vmatpush1.msra.mxu0 %v1180
  %1233 = vmatprep.subr.mxu0 0.0
  %1234 = vmatpush1.msra.mxu0 %v1179
  %1235 = vmatprep.subr.mxu0 0.0
  %1236 = vmatpush1.msra.mxu0 %v1178
  %1237 = vmatprep.subr.mxu0 0.0
  %1238 = vmatpush1.msra.mxu0 %v1177
  %1239 = vmatprep.subr.mxu0 0.0
  %1240 = vmatpush1.msra.mxu0 %v1176
  %1241 = vmatprep.subr.mxu0 0.0
  %1242 = vmatpush1.msra.mxu0 %v1175
  %1243 = vmatprep.subr.mxu0 0.0
  %1244 = vmatpush1.msra.mxu0 %v1174
  %1245 = vmatprep.subr.mxu0 0.0
  %1246 = vmatpush2.msra.mxu0 %v1205
  %1247 = vmatprep.subr.mxu0 0.0
  %1248 = vmatpush2.msra.mxu0 %v1204
  %1249 = vmatprep.subr.mxu0 0.0
  %1250 = vmatpush2.msra.mxu0 %v1203
  %1251 = vmatprep.subr.mxu0 0.0
  %1252 = vmatpush2.msra.mxu0 %v1202
  %1253 = vmatprep.subr.mxu0 0.0
  %1254 = vmatpush2.msra.mxu0 %v1201
  %1255 = vmatprep.subr.mxu0 0.0
  %1256 = vmatpush2.msra.mxu0 %v1200
  %1257 = vmatprep.subr.mxu0 0.0
  %1258 = vmatpush2.msra.mxu0 %v1199
  %1259 = vmatprep.subr.mxu0 0.0
  %1260 = vmatpush2.msra.mxu0 %v1198
  %1261 = vmatprep.subr.mxu0 0.0
  %1262 = vmatpush2.msra.mxu0 %v1197
  %1263 = vmatprep.subr.mxu0 0.0
  %1264 = vmatpush2.msra.mxu0 %v1196
  %1265 = vmatprep.subr.mxu0 0.0
  %1266 = vmatpush2.msra.mxu0 %v1195
  %1267 = vmatprep.subr.mxu0 0.0
  %1268 = vmatpush2.msra.mxu0 %v1194
  %1269 = vmatprep.subr.mxu0 0.0
  %1270 = vmatpush2.msra.mxu0 %v1193
  %1271 = vmatprep.subr.mxu0 0.0
  %1272 = vmatpush2.msra.mxu0 %v1192
  %1273 = vmatprep.subr.mxu0 0.0
  %1274 = vmatpush2.msra.mxu0 %v1191
  %1275 = vmatprep.subr.mxu0 0.0
  %1276 = vmatpush2.msra.mxu0 %v1190
  %1277 = vmatprep.mubr.f32.mxu0 %v845
  %1278 = vmatmul.mubr.f32.gmra.mxu0 %v844
  %v1279 = vpop.f32.mrf.mxu0
  %v1280 = vadd.f32 %v1211, %v1279
  %v1281 = vpop.f32.mrf.mxu0
  %1282 = vmatprep.mubr.f32.mxu0 %v847
  %1283 = vmatmul.mubr.f32.gmra.mxu0 %v846
  %v1284 = vpop.f32.mrf.mxu0
  %v1285 = vadd.f32 %v1211, %v1284
  %v1286 = vpop.f32.mrf.mxu0
  %1287 = vmatprep.mubr.f32.mxu0 %v849
  %1288 = vmatmul.mubr.f32.gmra.mxu0 %v848
  %v1289 = vpop.f32.mrf.mxu0
  %v1290 = vadd.f32 %v1211, %v1289
  %v1291 = vpop.f32.mrf.mxu0
  %1292 = vmatprep.mubr.f32.mxu0 %v851
  %1293 = vmatmul.mubr.f32.gmra.mxu0 %v850
  %v1294 = vpop.f32.mrf.mxu0
  %v1295 = vadd.f32 %v1211, %v1294
  %v1296 = vpop.f32.mrf.mxu0
  %1297 = vdwg.mxu0
  %v1298 = vmax.f32 %v1280, 0.0
  %v1299 = vmax.f32 %v1285, 0.0
  %v1300 = vmax.f32 %v1290, 0.0
  %v1301 = vmax.f32 %v1295, 0.0
  %v1302 = vld [vmem:[%s4] sm:$0xff]
  %v1303 = vld [vmem:[%s4 + $0x8] sm:$0xff]
  %v1304 = vld [vmem:[%s4 + $0x10] sm:$0xff]
  %v1305 = vld [vmem:[%s4 + $0x18] sm:$0xff]
  %v1306 = vld [vmem:[%s4 + $0x20] sm:$0xff]
  %v1307 = vld [vmem:[%s4 + $0x28] sm:$0xff]
  %v1308 = vld [vmem:[%s4 + $0x30] sm:$0xff]
  %v1309 = vld [vmem:[%s4 + $0x38] sm:$0xff]
  %v1310 = vld [vmem:[%s4 + $0x40] sm:$0xff]
  %v1311 = vld [vmem:[%s4 + $0x48] sm:$0xff]
  %v1312 = vld [vmem:[%s4 + $0x50] sm:$0xff]
  %v1313 = vld [vmem:[%s4 + $0x58] sm:$0xff]
  %v1314 = vld [vmem:[%s4 + $0x60] sm:$0xff]
  %v1315 = vld [vmem:[%s4 + $0x68] sm:$0xff]
  %v1316 = vld [vmem:[%s4 + $0x70] sm:$0xff]
  %v1317 = vld [vmem:[%s4 + $0x78] sm:$0xff]
  %1318 = vmatprep.subr.mxu0 0.0
  %1319 = vmatpush1.msra.mxu0 %v1317
  %1320 = vmatprep.subr.mxu0 0.0
  %1321 = vmatpush1.msra.mxu0 %v1316
  %1322 = vmatprep.subr.mxu0 0.0
  %1323 = vmatpush1.msra.mxu0 %v1315
  %1324 = vmatprep.subr.mxu0 0.0
  %1325 = vmatpush1.msra.mxu0 %v1314
  %1326 = vmatprep.subr.mxu0 0.0
  %1327 = vmatpush1.msra.mxu0 %v1313
  %1328 = vmatprep.subr.mxu0 0.0
  %1329 = vmatpush1.msra.mxu0 %v1312
  %1330 = vmatprep.subr.mxu0 0.0
  %1331 = vmatpush1.msra.mxu0 %v1311
  %1332 = vmatprep.subr.mxu0 0.0
  %1333 = vmatpush1.msra.mxu0 %v1310
  %1334 = vmatprep.subr.mxu0 0.0
  %1335 = vmatpush1.msra.mxu0 %v1309
  %1336 = vmatprep.subr.mxu0 0.0
  %1337 = vmatpush1.msra.mxu0 %v1308
  %1338 = vmatprep.subr.mxu0 0.0
  %1339 = vmatpush1.msra.mxu0 %v1307
  %1340 = vmatprep.subr.mxu0 0.0
  %1341 = vmatpush1.msra.mxu0 %v1306
  %1342 = vmatprep.subr.mxu0 0.0
  %1343 = vmatpush1.msra.mxu0 %v1305
  %1344 = vmatprep.subr.mxu0 0.0
  %1345 = vmatpush1.msra.mxu0 %v1304
  %1346 = vmatprep.subr.mxu0 0.0
  %1347 = vmatpush1.msra.mxu0 %v1303
  %1348 = vmatprep.subr.mxu0 0.0
  %1349 = vmatpush1.msra.mxu0 %v1302
  %1350 = vmatprep.subr.mxu0 0.0
  %1351 = vmatpush2.msra.mxu0 0.0
  %1352 = vmatprep.subr.mxu0 0.0
  %1353 = vmatpush2.msra.mxu0 0.0
  %1354 = vmatprep.subr.mxu0 0.0
  %1355 = vmatpush2.msra.mxu0 0.0
  %1356 = vmatprep.subr.mxu0 0.0
  %1357 = vmatpush2.msra.mxu0 0.0
  %1358 = vmatprep.subr.mxu0 0.0
  %1359 = vmatpush2.msra.mxu0 0.0
  %1360 = vmatprep.subr.mxu0 0.0
  %1361 = vmatpush2.msra.mxu0 0.0
  %1362 = vmatprep.subr.mxu0 0.0
  %1363 = vmatpush2.msra.mxu0 0.0
  %1364 = vmatprep.subr.mxu0 0.0
  %1365 = vmatpush2.msra.mxu0 0.0
  %1366 = vmatprep.subr.mxu0 0.0
  %1367 = vmatpush2.msra.mxu0 0.0
  %1368 = vmatprep.subr.mxu0 0.0
  %1369 = vmatpush2.msra.mxu0 0.0
  %1370 = vmatprep.subr.mxu0 0.0
  %1371 = vmatpush2.msra.mxu0 0.0
  %1372 = vmatprep.subr.mxu0 0.0
  %1373 = vmatpush2.msra.mxu0 0.0
  %1374 = vmatprep.subr.mxu0 0.0
  %1375 = vmatpush2.msra.mxu0 0.0
  %1376 = vmatprep.subr.mxu0 0.0
  %1377 = vmatpush2.msra.mxu0 0.0
  %1378 = vmatprep.subr.mxu0 0.0
  %1379 = vmatpush2.msra.mxu0 0.0
  %1380 = vmatprep.subr.mxu0 0.0
  %1381 = vmatpush2.msra.mxu0 0.0
  %1382 = vmatprep.mubr.f32.mxu0 0.0
  %1383 = vmatmul.mubr.f32.gmra.mxu0 %v1298
  %v1384 = vpop.f32.mrf.mxu0
  %v1385 = vadd.f32 0.0, %v1384
  %v1386 = vpop.f32.mrf.mxu0
  %1387 = vmatprep.mubr.f32.mxu0 0.0
  %1388 = vmatmul.mubr.f32.gmra.mxu0 %v1299
  %v1389 = vpop.f32.mrf.mxu0
  %v1390 = vadd.f32 0.0, %v1389
  %v1391 = vpop.f32.mrf.mxu0
  %1392 = vmatprep.mubr.f32.mxu0 0.0
  %1393 = vmatmul.mubr.f32.gmra.mxu0 %v1300
  %v1394 = vpop.f32.mrf.mxu0
  %v1395 = vadd.f32 0.0, %v1394
  %v1396 = vpop.f32.mrf.mxu0
  %1397 = vmatprep.mubr.f32.mxu0 0.0
  %1398 = vmatmul.mubr.f32.gmra.mxu0 %v1301
  %v1399 = vpop.f32.mrf.mxu0
  %v1400 = vadd.f32 0.0, %v1399
  %v1401 = vpop.f32.mrf.mxu0
  %1402 = vdwg.mxu0
  %s1403 = scalar_lea.vmem %s5, 512
  %v1404 = vld [vmem:[%s1403] sm:$0xff]
  %v1405 = vld [vmem:[%s1403 + $0x8] sm:$0xff]
  %v1406 = vld [vmem:[%s1403 + $0x10] sm:$0xff]
  %v1407 = vld [vmem:[%s1403 + $0x18] sm:$0xff]
  %v1408 = vld [vmem:[%s1403 + $0x20] sm:$0xff]
  %v1409 = vld [vmem:[%s1403 + $0x28] sm:$0xff]
  %v1410 = vld [vmem:[%s1403 + $0x30] sm:$0xff]
  %v1411 = vld [vmem:[%s1403 + $0x38] sm:$0xff]
  %v1412 = vld [vmem:[%s1403 + $0x40] sm:$0xff]
  %v1413 = vld [vmem:[%s1403 + $0x48] sm:$0xff]
  %v1414 = vld [vmem:[%s1403 + $0x50] sm:$0xff]
  %v1415 = vld [vmem:[%s1403 + $0x58] sm:$0xff]
  %v1416 = vld [vmem:[%s1403 + $0x60] sm:$0xff]
  %v1417 = vld [vmem:[%s1403 + $0x68] sm:$0xff]
  %v1418 = vld [vmem:[%s1403 + $0x70] sm:$0xff]
  %v1419 = vld [vmem:[%s1403 + $0x78] sm:$0xff]
  %v1420 = vld [vmem:[%s1403 + $0x80] sm:$0xff]
  %v1421 = vld [vmem:[%s1403 + $0x88] sm:$0xff]
  %v1422 = vld [vmem:[%s1403 + $0x90] sm:$0xff]
  %v1423 = vld [vmem:[%s1403 + $0x98] sm:$0xff]
  %v1424 = vld [vmem:[%s1403 + $0xa0] sm:$0xff]
  %v1425 = vld [vmem:[%s1403 + $0xa8] sm:$0xff]
  %v1426 = vld [vmem:[%s1403 + $0xb0] sm:$0xff]
  %v1427 = vld [vmem:[%s1403 + $0xb8] sm:$0xff]
  %v1428 = vld [vmem:[%s1403 + $0xc0] sm:$0xff]
  %v1429 = vld [vmem:[%s1403 + $0xc8] sm:$0xff]
  %v1430 = vld [vmem:[%s1403 + $0xd0] sm:$0xff]
  %v1431 = vld [vmem:[%s1403 + $0xd8] sm:$0xff]
  %v1432 = vld [vmem:[%s1403 + $0xe0] sm:$0xff]
  %v1433 = vld [vmem:[%s1403 + $0xe8] sm:$0xff]
  %v1434 = vld [vmem:[%s1403 + $0xf0] sm:$0xff]
  %v1435 = vld [vmem:[%s1403 + $0xf8] sm:$0xff]
  %v1436 = vld [vmem:[%s1403 + $0x100] sm:$0xff]
  %v1437 = vld [vmem:[%s1403 + $0x108] sm:$0xff]
  %v1438 = vld [vmem:[%s1403 + $0x110] sm:$0xff]
  %v1439 = vld [vmem:[%s1403 + $0x118] sm:$0xff]
  %v1440 = vld [vmem:[%s1403 + $0x120] sm:$0xff]
  %v1441 = vld [vmem:[%s1403 + $0x128] sm:$0xff]
  %v1442 = vld [vmem:[%s1403 + $0x130] sm:$0xff]
  %v1443 = vld [vmem:[%s1403 + $0x138] sm:$0xff]
  %v1444 = vld [vmem:[%s1403 + $0x140] sm:$0xff]
  %v1445 = vld [vmem:[%s1403 + $0x148] sm:$0xff]
  %v1446 = vld [vmem:[%s1403 + $0x150] sm:$0xff]
  %v1447 = vld [vmem:[%s1403 + $0x158] sm:$0xff]
  %v1448 = vld [vmem:[%s1403 + $0x160] sm:$0xff]
  %v1449 = vld [vmem:[%s1403 + $0x168] sm:$0xff]
  %v1450 = vld [vmem:[%s1403 + $0x170] sm:$0xff]
  %v1451 = vld [vmem:[%s1403 + $0x178] sm:$0xff]
  %v1452 = vld [vmem:[%s1403 + $0x180] sm:$0xff]
  %v1453 = vld [vmem:[%s1403 + $0x188] sm:$0xff]
  %v1454 = vld [vmem:[%s1403 + $0x190] sm:$0xff]
  %v1455 = vld [vmem:[%s1403 + $0x198] sm:$0xff]
  %v1456 = vld [vmem:[%s1403 + $0x1a0] sm:$0xff]
  %v1457 = vld [vmem:[%s1403 + $0x1a8] sm:$0xff]
  %v1458 = vld [vmem:[%s1403 + $0x1b0] sm:$0xff]
  %v1459 = vld [vmem:[%s1403 + $0x1b8] sm:$0xff]
  %v1460 = vld [vmem:[%s1403 + $0x1c0] sm:$0xff]
  %v1461 = vld [vmem:[%s1403 + $0x1c8] sm:$0xff]
  %v1462 = vld [vmem:[%s1403 + $0x1d0] sm:$0xff]
  %v1463 = vld [vmem:[%s1403 + $0x1d8] sm:$0xff]
  %v1464 = vld [vmem:[%s1403 + $0x1e0] sm:$0xff]
  %v1465 = vld [vmem:[%s1403 + $0x1e8] sm:$0xff]
  %v1466 = vld [vmem:[%s1403 + $0x1f0] sm:$0xff]
  %v1467 = vld [vmem:[%s1403 + $0x1f8] sm:$0xff]
  %1468 = vmatprep.subr.mxu0 %v1465
  %1469 = vmatpush1.msra.mxu0 %v1464
  %1470 = vmatprep.subr.mxu0 %v1461
  %1471 = vmatpush1.msra.mxu0 %v1460
  %1472 = vmatprep.subr.mxu0 %v1457
  %1473 = vmatpush1.msra.mxu0 %v1456
  %1474 = vmatprep.subr.mxu0 %v1453
  %1475 = vmatpush1.msra.mxu0 %v1452
  %1476 = vmatprep.subr.mxu0 %v1449
  %1477 = vmatpush1.msra.mxu0 %v1448
  %1478 = vmatprep.subr.mxu0 %v1445
  %1479 = vmatpush1.msra.mxu0 %v1444
  %1480 = vmatprep.subr.mxu0 %v1441
  %1481 = vmatpush1.msra.mxu0 %v1440
  %1482 = vmatprep.subr.mxu0 %v1437
  %1483 = vmatpush1.msra.mxu0 %v1436
  %1484 = vmatprep.subr.mxu0 %v1433
  %1485 = vmatpush1.msra.mxu0 %v1432
  %1486 = vmatprep.subr.mxu0 %v1429
  %1487 = vmatpush1.msra.mxu0 %v1428
  %1488 = vmatprep.subr.mxu0 %v1425
  %1489 = vmatpush1.msra.mxu0 %v1424
  %1490 = vmatprep.subr.mxu0 %v1421
  %1491 = vmatpush1.msra.mxu0 %v1420
  %1492 = vmatprep.subr.mxu0 %v1417
  %1493 = vmatpush1.msra.mxu0 %v1416
  %1494 = vmatprep.subr.mxu0 %v1413
  %1495 = vmatpush1.msra.mxu0 %v1412
  %1496 = vmatprep.subr.mxu0 %v1409
  %1497 = vmatpush1.msra.mxu0 %v1408
  %1498 = vmatprep.subr.mxu0 %v1405
  %1499 = vmatpush1.msra.mxu0 %v1404
  %1500 = vmatprep.subr.mxu0 0.0
  %1501 = vmatpush2.msra.mxu0 0.0
  %1502 = vmatprep.subr.mxu0 0.0
  %1503 = vmatpush2.msra.mxu0 0.0
  %1504 = vmatprep.subr.mxu0 0.0
  %1505 = vmatpush2.msra.mxu0 0.0
  %1506 = vmatprep.subr.mxu0 0.0
  %1507 = vmatpush2.msra.mxu0 0.0
  %1508 = vmatprep.subr.mxu0 0.0
  %1509 = vmatpush2.msra.mxu0 0.0
  %1510 = vmatprep.subr.mxu0 0.0
  %1511 = vmatpush2.msra.mxu0 0.0
  %1512 = vmatprep.subr.mxu0 0.0
  %1513 = vmatpush2.msra.mxu0 0.0
  %1514 = vmatprep.subr.mxu0 0.0
  %1515 = vmatpush2.msra.mxu0 0.0
  %1516 = vmatprep.subr.mxu0 0.0
  %1517 = vmatpush2.msra.mxu0 0.0
  %1518 = vmatprep.subr.mxu0 0.0
  %1519 = vmatpush2.msra.mxu0 0.0
  %1520 = vmatprep.subr.mxu0 0.0
  %1521 = vmatpush2.msra.mxu0 0.0
  %1522 = vmatprep.subr.mxu0 0.0
  %1523 = vmatpush2.msra.mxu0 0.0
  %1524 = vmatprep.subr.mxu0 0.0
  %1525 = vmatpush2.msra.mxu0 0.0
  %1526 = vmatprep.subr.mxu0 0.0
  %1527 = vmatpush2.msra.mxu0 0.0
  %1528 = vmatprep.subr.mxu0 0.0
  %1529 = vmatpush2.msra.mxu0 0.0
  %1530 = vmatprep.subr.mxu0 0.0
  %1531 = vmatpush2.msra.mxu0 0.0
  %1532 = vmatprep.mubr.f32.mxu0 0.0
  %1533 = vmatmul.mubr.f32.gmra.mxu0 %v1385
  %v1534 = vpop.f32.mrf.mxu0
  %v1535 = vadd.f32 0.0, %v1534
  %v1536 = vpop.f32.mrf.mxu0
  %v1537 = vadd.f32 0.0, %v1536
  %1538 = vmatprep.mubr.f32.mxu0 0.0
  %1539 = vmatmul.mubr.f32.gmra.mxu0 %v1390
  %v1540 = vpop.f32.mrf.mxu0
  %v1541 = vadd.f32 0.0, %v1540
  %v1542 = vpop.f32.mrf.mxu0
  %v1543 = vadd.f32 0.0, %v1542
  %1544 = vmatprep.mubr.f32.mxu0 0.0
  %1545 = vmatmul.mubr.f32.gmra.mxu0 %v1395
  %v1546 = vpop.f32.mrf.mxu0
  %v1547 = vadd.f32 0.0, %v1546
  %v1548 = vpop.f32.mrf.mxu0
  %v1549 = vadd.f32 0.0, %v1548
  %1550 = vmatprep.mubr.f32.mxu0 0.0
  %1551 = vmatmul.mubr.f32.gmra.mxu0 %v1400
  %v1552 = vpop.f32.mrf.mxu0
  %v1553 = vadd.f32 0.0, %v1552
  %v1554 = vpop.f32.mrf.mxu0
  %v1555 = vadd.f32 0.0, %v1554
  %1556 = vdwg.mxu0
  %1557 = vmatprep.subr.mxu0 %v1467
  %1558 = vmatpush1.msra.mxu0 %v1466
  %1559 = vmatprep.subr.mxu0 %v1463
  %1560 = vmatpush1.msra.mxu0 %v1462
  %1561 = vmatprep.subr.mxu0 %v1459
  %1562 = vmatpush1.msra.mxu0 %v1458
  %1563 = vmatprep.subr.mxu0 %v1455
  %1564 = vmatpush1.msra.mxu0 %v1454
  %1565 = vmatprep.subr.mxu0 %v1451
  %1566 = vmatpush1.msra.mxu0 %v1450
  %1567 = vmatprep.subr.mxu0 %v1447
  %1568 = vmatpush1.msra.mxu0 %v1446
  %1569 = vmatprep.subr.mxu0 %v1443
  %1570 = vmatpush1.msra.mxu0 %v1442
  %1571 = vmatprep.subr.mxu0 %v1439
  %1572 = vmatpush1.msra.mxu0 %v1438
  %1573 = vmatprep.subr.mxu0 %v1435
  %1574 = vmatpush1.msra.mxu0 %v1434
  %1575 = vmatprep.subr.mxu0 %v1431
  %1576 = vmatpush1.msra.mxu0 %v1430
  %1577 = vmatprep.subr.mxu0 %v1427
  %1578 = vmatpush1.msra.mxu0 %v1426
  %1579 = vmatprep.subr.mxu0 %v1423
  %1580 = vmatpush1.msra.mxu0 %v1422
  %1581 = vmatprep.subr.mxu0 %v1419
  %1582 = vmatpush1.msra.mxu0 %v1418
  %1583 = vmatprep.subr.mxu0 %v1415
  %1584 = vmatpush1.msra.mxu0 %v1414
  %1585 = vmatprep.subr.mxu0 %v1411
  %1586 = vmatpush1.msra.mxu0 %v1410
  %1587 = vmatprep.subr.mxu0 %v1407
  %1588 = vmatpush1.msra.mxu0 %v1406
  %1589 = vmatprep.subr.mxu0 0.0
  %1590 = vmatpush2.msra.mxu0 0.0
  %1591 = vmatprep.subr.mxu0 0.0
  %1592 = vmatpush2.msra.mxu0 0.0
  %1593 = vmatprep.subr.mxu0 0.0
  %1594 = vmatpush2.msra.mxu0 0.0
  %1595 = vmatprep.subr.mxu0 0.0
  %1596 = vmatpush2.msra.mxu0 0.0
  %1597 = vmatprep.subr.mxu0 0.0
  %1598 = vmatpush2.msra.mxu0 0.0
  %1599 = vmatprep.subr.mxu0 0.0
  %1600 = vmatpush2.msra.mxu0 0.0
  %1601 = vmatprep.subr.mxu0 0.0
  %1602 = vmatpush2.msra.mxu0 0.0
  %1603 = vmatprep.subr.mxu0 0.0
  %1604 = vmatpush2.msra.mxu0 0.0
  %1605 = vmatprep.subr.mxu0 0.0
  %1606 = vmatpush2.msra.mxu0 0.0
  %1607 = vmatprep.subr.mxu0 0.0
  %1608 = vmatpush2.msra.mxu0 0.0
  %1609 = vmatprep.subr.mxu0 0.0
  %1610 = vmatpush2.msra.mxu0 0.0
  %1611 = vmatprep.subr.mxu0 0.0
  %1612 = vmatpush2.msra.mxu0 0.0
  %1613 = vmatprep.subr.mxu0 0.0
  %1614 = vmatpush2.msra.mxu0 0.0
  %1615 = vmatprep.subr.mxu0 0.0
  %1616 = vmatpush2.msra.mxu0 0.0
  %1617 = vmatprep.subr.mxu0 0.0
  %1618 = vmatpush2.msra.mxu0 0.0
  %1619 = vmatprep.subr.mxu0 0.0
  %1620 = vmatpush2.msra.mxu0 0.0
  %1621 = vmatprep.mubr.f32.mxu0 0.0
  %1622 = vmatmul.mubr.f32.gmra.mxu0 %v1385
  %v1623 = vpop.f32.mrf.mxu0
  %v1624 = vadd.f32 0.0, %v1623
  %v1625 = vpop.f32.mrf.mxu0
  %v1626 = vadd.f32 0.0, %v1625
  %1627 = vmatprep.mubr.f32.mxu0 0.0
  %1628 = vmatmul.mubr.f32.gmra.mxu0 %v1390
  %v1629 = vpop.f32.mrf.mxu0
  %v1630 = vadd.f32 0.0, %v1629
  %v1631 = vpop.f32.mrf.mxu0
  %v1632 = vadd.f32 0.0, %v1631
  %1633 = vmatprep.mubr.f32.mxu0 0.0
  %1634 = vmatmul.mubr.f32.gmra.mxu0 %v1395
  %v1635 = vpop.f32.mrf.mxu0
  %v1636 = vadd.f32 0.0, %v1635
  %v1637 = vpop.f32.mrf.mxu0
  %v1638 = vadd.f32 0.0, %v1637
  %1639 = vmatprep.mubr.f32.mxu0 0.0
  %1640 = vmatmul.mubr.f32.gmra.mxu0 %v1400
  %v1641 = vpop.f32.mrf.mxu0
  %v1642 = vadd.f32 0.0, %v1641
  %v1643 = vpop.f32.mrf.mxu0
  %v1644 = vadd.f32 0.0, %v1643
  %1645 = vdwg.mxu0
  %v1646 = vmul.f32 %v69, %v1535
  %v1647 = vmul.f32 %v70, %v1537
  %v1648 = vmul.f32 %v71, %v1541
  %v1649 = vmul.f32 %v72, %v1543
  %v1650 = vmul.f32 %v73, %v1547
  %v1651 = vmul.f32 %v74, %v1549
  %v1652 = vmul.f32 %v75, %v1553
  %v1653 = vmul.f32 %v76, %v1555
  %v1654 = vadd.f32 %v1646, %v1648
  %v1655 = vadd.f32 %v1654, %v1650
  %v1656 = vadd.f32 %v1655, %v1652
  %v1657 = vrot.slane %v1656, 4
  %v1658 = vadd.f32 %v1656, %v1657
  %v1659 = vrot.slane %v1658, 2
  %v1660 = vadd.f32 %v1658, %v1659
  %v1661 = vrot.slane %v1660, 1
  %v1662 = vadd.f32 %v1660, %v1661
  %v1663 = vadd.f32 %v1647, %v1649
  %v1664 = vadd.f32 %v1663, %v1651
  %v1665 = vadd.f32 %v1664, %v1653
  %v1666 = vrot.slane %v1665, 4
  %v1667 = vadd.f32 %v1665, %v1666
  %v1668 = vrot.slane %v1667, 2
  %v1669 = vadd.f32 %v1667, %v1668
  %v1670 = vrot.slane %v1669, 1
  %v1671 = vadd.f32 %v1669, %v1670
  %v1672 = vadd.f32 %v1662, %v1624
  %v1673 = vadd.f32 %v1671, %v1626
  %v1674 = vadd.f32 %v1662, %v1630
  %v1675 = vadd.f32 %v1671, %v1632
  %v1676 = vadd.f32 %v1662, %v1636
  %v1677 = vadd.f32 %v1671, %v1638
  %v1678 = vadd.f32 %v1662, %v1642
  %v1679 = vadd.f32 %v1671, %v1644
  %s1680 = scalar_lea.vmem %s6, 2
  %v1681 = vld [vmem:[%s1680] sm:$0x3]
  %v1683 = vlaneseq
  %v1684 = vshrl.u32 %v1683, 7
  %v1685 = vsub.s32 0, %v1684
  %v1686 = vrot.slane %v1681, %v1685
  %v1687 = vlaneseq
  %v1688 = vshrl.u32 %v1687, 7
  %v1689 = vsub.s32 1, %v1688
  %v1690 = vrot.slane %v1681, %v1689
  %v1693 = vmul.f32 %v232, %v1686
  %v1694 = vmul.f32 %v233, %v1690
  %v1695 = vmul.f32 %v234, %v1686
  %v1696 = vmul.f32 %v235, %v1690
  %v1697 = vmul.f32 %v236, %v1686
  %v1698 = vmul.f32 %v237, %v1690
  %v1699 = vmul.f32 %v238, %v1686
  %v1700 = vmul.f32 %v239, %v1690
  %v1701 = vadd.f32 %v1672, %v1693
  %v1702 = vadd.f32 %v1673, %v1694
  %v1703 = vadd.f32 %v1674, %v1695
  %v1704 = vadd.f32 %v1675, %v1696
  %v1705 = vadd.f32 %v1676, %v1697
  %v1706 = vadd.f32 %v1677, %v1698
  %v1707 = vadd.f32 %v1678, %v1699
  %v1708 = vadd.f32 %v1679, %v1700
  %vm1709 = vcmp.gt.f32.partialorder %v1701, 0.0
  %vm1710 = vcmp.gt.f32.partialorder %v1702, 0.0
  %vm1711 = vcmp.gt.f32.partialorder %v1703, 0.0
  %vm1712 = vcmp.gt.f32.partialorder %v1704, 0.0
  %vm1713 = vcmp.gt.f32.partialorder %v1705, 0.0
  %vm1714 = vcmp.gt.f32.partialorder %v1706, 0.0
  %vm1715 = vcmp.gt.f32.partialorder %v1707, 0.0
  %vm1716 = vcmp.gt.f32.partialorder %v1708, 0.0
  %v1717 = vmul.f32 %v1701, 0.2
  %v1718 = vmul.f32 %v1702, 0.2
  %v1719 = vmul.f32 %v1703, 0.2
  %v1720 = vmul.f32 %v1704, 0.2
  %v1721 = vmul.f32 %v1705, 0.2
  %v1722 = vmul.f32 %v1706, 0.2
  %v1723 = vmul.f32 %v1707, 0.2
  %v1724 = vmul.f32 %v1708, 0.2
  %v1725 = vsel %vm1709, %v1701, %v1717
  %v1726 = vsel %vm1710, %v1702, %v1718
  %v1727 = vsel %vm1711, %v1703, %v1719
  %v1728 = vsel %vm1712, %v1704, %v1720
  %v1729 = vsel %vm1713, %v1705, %v1721
  %v1730 = vsel %vm1714, %v1706, %v1722
  %v1731 = vsel %vm1715, %v1707, %v1723
  %v1732 = vsel %vm1716, %v1708, %v1724
  %vm1733 = vcmp.gt.f32.partialorder %v223, 0.0
  %vm1734 = vcmp.gt.f32.partialorder %v224, 0.0
  %vm1735 = vcmp.gt.f32.partialorder %v225, 0.0
  %vm1736 = vcmp.gt.f32.partialorder %v226, 0.0
  %vm1737 = vcmp.gt.f32.partialorder %v227, 0.0
  %vm1738 = vcmp.gt.f32.partialorder %v228, 0.0
  %vm1739 = vcmp.gt.f32.partialorder %v229, 0.0
  %vm1740 = vcmp.gt.f32.partialorder %v230, 0.0
  %v1741 = vsel %vm1733, %v1725, -1e+30
  %v1742 = vsel %vm1734, %v1726, -1e+30
  %v1743 = vsel %vm1735, %v1727, -1e+30
  %v1744 = vsel %vm1736, %v1728, -1e+30
  %v1745 = vsel %vm1737, %v1729, -1e+30
  %v1746 = vsel %vm1738, %v1730, -1e+30
  %v1747 = vsel %vm1739, %v1731, -1e+30
  %v1748 = vsel %vm1740, %v1732, -1e+30
  %v1749 = vmax.f32 %v1741, %v1742
  %1750 = vmax.xlane.f32.xlu0 %v1749
  %v1751 = vpop.xlane.xlu0 %1750
  %v1752 = vmax.f32 %v1743, %v1744
  %1753 = vmax.xlane.f32.xlu0 %v1752
  %v1754 = vpop.xlane.xlu0 %1753
  %v1755 = vmax.f32 %v1745, %v1746
  %1756 = vmax.xlane.f32.xlu0 %v1755
  %v1757 = vpop.xlane.xlu0 %1756
  %v1758 = vmax.f32 %v1747, %v1748
  %1759 = vmax.xlane.f32.xlu0 %v1758
  %v1760 = vpop.xlane.xlu0 %1759
  %v1761 = vsub.f32 %v1741, %v1751
  %v1762 = vsub.f32 %v1742, %v1751
  %v1763 = vsub.f32 %v1743, %v1754
  %v1764 = vsub.f32 %v1744, %v1754
  %v1765 = vsub.f32 %v1745, %v1757
  %v1766 = vsub.f32 %v1746, %v1757
  %v1767 = vsub.f32 %v1747, %v1760
  %v1768 = vsub.f32 %v1748, %v1760
  %v1769 = vmul.f32 %v1761, 1.442695
  %v1770 = vpow.pop %v1769
  %v1771 = vmul.f32 %v1762, 1.442695
  %v1772 = vpow.pop %v1771
  %v1773 = vmul.f32 %v1763, 1.442695
  %v1774 = vpow.pop %v1773
  %v1775 = vmul.f32 %v1764, 1.442695
  %v1776 = vpow.pop %v1775
  %v1777 = vmul.f32 %v1765, 1.442695
  %v1778 = vpow.pop %v1777
  %v1779 = vmul.f32 %v1766, 1.442695
  %v1780 = vpow.pop %v1779
  %v1781 = vmul.f32 %v1767, 1.442695
  %v1782 = vpow.pop %v1781
  %v1783 = vmul.f32 %v1768, 1.442695
  %v1784 = vpow.pop %v1783
  %v1785 = vmul.f32 %v1770, %v223
  %v1786 = vmul.f32 %v1772, %v224
  %v1787 = vmul.f32 %v1774, %v225
  %v1788 = vmul.f32 %v1776, %v226
  %v1789 = vmul.f32 %v1778, %v227
  %v1790 = vmul.f32 %v1780, %v228
  %v1791 = vmul.f32 %v1782, %v229
  %v1792 = vmul.f32 %v1784, %v230
  %1793 = vmatprep.subr.mxu0 %v172
  %1794 = vmatpush1.msra.mxu0 %v171
  %1795 = vmatprep.subr.mxu0 %v170
  %1796 = vmatpush1.msra.mxu0 %v169
  %1797 = vmatprep.subr.mxu0 %v168
  %1798 = vmatpush1.msra.mxu0 %v167
  %1799 = vmatprep.subr.mxu0 %v166
  %1800 = vmatpush1.msra.mxu0 %v165
  %1801 = vmatprep.subr.mxu0 %v164
  %1802 = vmatpush1.msra.mxu0 %v163
  %1803 = vmatprep.subr.mxu0 %v162
  %1804 = vmatpush1.msra.mxu0 %v161
  %1805 = vmatprep.subr.mxu0 %v160
  %1806 = vmatpush1.msra.mxu0 %v159
  %1807 = vmatprep.subr.mxu0 %v158
  %1808 = vmatpush1.msra.mxu0 %v157
  %1809 = vmatprep.subr.mxu0 %v156
  %1810 = vmatpush1.msra.mxu0 %v155
  %1811 = vmatprep.subr.mxu0 %v154
  %1812 = vmatpush1.msra.mxu0 %v153
  %1813 = vmatprep.subr.mxu0 %v152
  %1814 = vmatpush1.msra.mxu0 %v151
  %1815 = vmatprep.subr.mxu0 %v150
  %1816 = vmatpush1.msra.mxu0 %v149
  %1817 = vmatprep.subr.mxu0 %v148
  %1818 = vmatpush1.msra.mxu0 %v147
  %1819 = vmatprep.subr.mxu0 %v146
  %1820 = vmatpush1.msra.mxu0 %v145
  %1821 = vmatprep.subr.mxu0 %v144
  %1822 = vmatpush1.msra.mxu0 %v143
  %1823 = vmatprep.subr.mxu0 %v142
  %1824 = vmatpush1.msra.mxu0 %v141
  %1825 = vmatprep.subr.mxu0 %v204
  %1826 = vmatpush2.msra.mxu0 %v203
  %1827 = vmatprep.subr.mxu0 %v202
  %1828 = vmatpush2.msra.mxu0 %v201
  %1829 = vmatprep.subr.mxu0 %v200
  %1830 = vmatpush2.msra.mxu0 %v199
  %1831 = vmatprep.subr.mxu0 %v198
  %1832 = vmatpush2.msra.mxu0 %v197
  %1833 = vmatprep.subr.mxu0 %v196
  %1834 = vmatpush2.msra.mxu0 %v195
  %1835 = vmatprep.subr.mxu0 %v194
  %1836 = vmatpush2.msra.mxu0 %v193
  %1837 = vmatprep.subr.mxu0 %v192
  %1838 = vmatpush2.msra.mxu0 %v191
  %1839 = vmatprep.subr.mxu0 %v190
  %1840 = vmatpush2.msra.mxu0 %v189
  %1841 = vmatprep.subr.mxu0 %v188
  %1842 = vmatpush2.msra.mxu0 %v187
  %1843 = vmatprep.subr.mxu0 %v186
  %1844 = vmatpush2.msra.mxu0 %v185
  %1845 = vmatprep.subr.mxu0 %v184
  %1846 = vmatpush2.msra.mxu0 %v183
  %1847 = vmatprep.subr.mxu0 %v182
  %1848 = vmatpush2.msra.mxu0 %v181
  %1849 = vmatprep.subr.mxu0 %v180
  %1850 = vmatpush2.msra.mxu0 %v179
  %1851 = vmatprep.subr.mxu0 %v178
  %1852 = vmatpush2.msra.mxu0 %v177
  %1853 = vmatprep.subr.mxu0 %v176
  %1854 = vmatpush2.msra.mxu0 %v175
  %1855 = vmatprep.subr.mxu0 %v174
  %1856 = vmatpush2.msra.mxu0 %v173
  %1857 = vmatprep.mubr.f32.mxu0 %v1786
  %1858 = vmatmul.mubr.f32.gmra.mxu0 %v1785
  %v1859 = vpop.f32.mrf.mxu0
  %v1860 = vadd.f32 0.0, %v1859
  %v1861 = vpop.f32.mrf.mxu0
  %v1862 = vadd.f32 0.0, %v1861
  %1863 = vmatprep.mubr.f32.mxu0 %v1788
  %1864 = vmatmul.mubr.f32.gmra.mxu0 %v1787
  %v1865 = vpop.f32.mrf.mxu0
  %v1866 = vadd.f32 0.0, %v1865
  %v1867 = vpop.f32.mrf.mxu0
  %v1868 = vadd.f32 0.0, %v1867
  %1869 = vmatprep.mubr.f32.mxu0 %v1790
  %1870 = vmatmul.mubr.f32.gmra.mxu0 %v1789
  %v1871 = vpop.f32.mrf.mxu0
  %v1872 = vadd.f32 0.0, %v1871
  %v1873 = vpop.f32.mrf.mxu0
  %v1874 = vadd.f32 0.0, %v1873
  %1875 = vmatprep.mubr.f32.mxu0 %v1792
  %1876 = vmatmul.mubr.f32.gmra.mxu0 %v1791
  %v1877 = vpop.f32.mrf.mxu0
  %v1878 = vadd.f32 0.0, %v1877
  %v1879 = vpop.f32.mrf.mxu0
  %v1880 = vadd.f32 0.0, %v1879
  %1881 = vdwg.mxu0
  %v1882 = vmax.f32 %v1860, 1e-16
  %v1883 = vmax.f32 %v1862, 1e-16
  %v1884 = vmax.f32 %v1866, 1e-16
  %v1885 = vmax.f32 %v1868, 1e-16
  %v1886 = vmax.f32 %v1872, 1e-16
  %v1887 = vmax.f32 %v1874, 1e-16
  %v1888 = vmax.f32 %v1878, 1e-16
  %v1889 = vmax.f32 %v1880, 1e-16
  %v1890 = vrcp.pop %v1882
  %v1891 = vmul.f32 1.0, %v1890
  %v1892 = vrcp.pop %v1883
  %v1893 = vmul.f32 1.0, %v1892
  %v1894 = vrcp.pop %v1884
  %v1895 = vmul.f32 1.0, %v1894
  %v1896 = vrcp.pop %v1885
  %v1897 = vmul.f32 1.0, %v1896
  %v1898 = vrcp.pop %v1886
  %v1899 = vmul.f32 1.0, %v1898
  %v1900 = vrcp.pop %v1887
  %v1901 = vmul.f32 1.0, %v1900
  %v1902 = vrcp.pop %v1888
  %v1903 = vmul.f32 1.0, %v1902
  %v1904 = vrcp.pop %v1889
  %v1905 = vmul.f32 1.0, %v1904
  %v1906 = vmul.f32 %v1785, %v1891
  %v1907 = vmul.f32 %v1786, %v1893
  %v1908 = vmul.f32 %v1787, %v1895
  %v1909 = vmul.f32 %v1788, %v1897
  %v1910 = vmul.f32 %v1789, %v1899
  %v1911 = vmul.f32 %v1790, %v1901
  %v1912 = vmul.f32 %v1791, %v1903
  %v1913 = vmul.f32 %v1792, %v1905
  %1914 = vmatprep.subr.mxu0 0.0
  %1915 = vmatpush1.msra.mxu0 0.0
  %1916 = vmatprep.subr.mxu0 0.0
  %1917 = vmatpush1.msra.mxu0 0.0
  %1918 = vmatprep.subr.mxu0 0.0
  %1919 = vmatpush1.msra.mxu0 0.0
  %1920 = vmatprep.subr.mxu0 0.0
  %1921 = vmatpush1.msra.mxu0 0.0
  %1922 = vmatprep.subr.mxu0 0.0
  %1923 = vmatpush1.msra.mxu0 0.0
  %1924 = vmatprep.subr.mxu0 0.0
  %1925 = vmatpush1.msra.mxu0 0.0
  %1926 = vmatprep.subr.mxu0 0.0
  %1927 = vmatpush1.msra.mxu0 0.0
  %1928 = vmatprep.subr.mxu0 0.0
  %1929 = vmatpush1.msra.mxu0 0.0
  %1930 = vmatprep.subr.mxu0 0.0
  %1931 = vmatpush1.msra.mxu0 0.0
  %1932 = vmatprep.subr.mxu0 0.0
  %1933 = vmatpush1.msra.mxu0 0.0
  %1934 = vmatprep.subr.mxu0 0.0
  %1935 = vmatpush1.msra.mxu0 0.0
  %1936 = vmatprep.subr.mxu0 0.0
  %1937 = vmatpush1.msra.mxu0 0.0
  %1938 = vmatprep.subr.mxu0 0.0
  %1939 = vmatpush1.msra.mxu0 %v1400
  %1940 = vmatprep.subr.mxu0 0.0
  %1941 = vmatpush1.msra.mxu0 %v1395
  %1942 = vmatprep.subr.mxu0 0.0
  %1943 = vmatpush1.msra.mxu0 %v1390
  %1944 = vmatprep.subr.mxu0 0.0
  %1945 = vmatpush1.msra.mxu0 %v1385
  %1946 = vmatprep.subr.mxu0 0.0
  %1947 = vmatpush2.msra.mxu0 0.0
  %1948 = vmatprep.subr.mxu0 0.0
  %1949 = vmatpush2.msra.mxu0 0.0
  %1950 = vmatprep.subr.mxu0 0.0
  %1951 = vmatpush2.msra.mxu0 0.0
  %1952 = vmatprep.subr.mxu0 0.0
  %1953 = vmatpush2.msra.mxu0 0.0
  %1954 = vmatprep.subr.mxu0 0.0
  %1955 = vmatpush2.msra.mxu0 0.0
  %1956 = vmatprep.subr.mxu0 0.0
  %1957 = vmatpush2.msra.mxu0 0.0
  %1958 = vmatprep.subr.mxu0 0.0
  %1959 = vmatpush2.msra.mxu0 0.0
  %1960 = vmatprep.subr.mxu0 0.0
  %1961 = vmatpush2.msra.mxu0 0.0
  %1962 = vmatprep.subr.mxu0 0.0
  %1963 = vmatpush2.msra.mxu0 0.0
  %1964 = vmatprep.subr.mxu0 0.0
  %1965 = vmatpush2.msra.mxu0 0.0
  %1966 = vmatprep.subr.mxu0 0.0
  %1967 = vmatpush2.msra.mxu0 0.0
  %1968 = vmatprep.subr.mxu0 0.0
  %1969 = vmatpush2.msra.mxu0 0.0
  %1970 = vmatprep.subr.mxu0 0.0
  %1971 = vmatpush2.msra.mxu0 0.0
  %1972 = vmatprep.subr.mxu0 0.0
  %1973 = vmatpush2.msra.mxu0 0.0
  %1974 = vmatprep.subr.mxu0 0.0
  %1975 = vmatpush2.msra.mxu0 0.0
  %1976 = vmatprep.subr.mxu0 0.0
  %1977 = vmatpush2.msra.mxu0 0.0
  %1978 = vmatprep.mubr.f32.mxu0 0.0
  %1979 = vmatmul.mubr.f32.gmra.mxu0 %v854
  %v1980 = vpop.f32.mrf.mxu0
  %v1981 = vadd.f32 0.0, %v1980
  %v1982 = vpop.f32.mrf.mxu0
  %1983 = vmatprep.mubr.f32.mxu0 0.0
  %1984 = vmatmul.mubr.f32.gmra.mxu0 %v857
  %v1985 = vpop.f32.mrf.mxu0
  %v1986 = vadd.f32 0.0, %v1985
  %v1987 = vpop.f32.mrf.mxu0
  %1988 = vmatprep.mubr.f32.mxu0 0.0
  %1989 = vmatmul.mubr.f32.gmra.mxu0 %v860
  %v1990 = vpop.f32.mrf.mxu0
  %v1991 = vadd.f32 0.0, %v1990
  %v1992 = vpop.f32.mrf.mxu0
  %1993 = vmatprep.mubr.f32.mxu0 0.0
  %1994 = vmatmul.mubr.f32.gmra.mxu0 %v863
  %v1995 = vpop.f32.mrf.mxu0
  %v1996 = vadd.f32 0.0, %v1995
  %v1997 = vpop.f32.mrf.mxu0
  %1998 = vmatprep.mubr.f32.mxu0 0.0
  %1999 = vmatmul.mubr.f32.gmra.mxu0 %v866
  %v2000 = vpop.f32.mrf.mxu0
  %v2001 = vadd.f32 0.0, %v2000
  %v2002 = vpop.f32.mrf.mxu0
  %2003 = vmatprep.mubr.f32.mxu0 0.0
  %2004 = vmatmul.mubr.f32.gmra.mxu0 %v869
  %v2005 = vpop.f32.mrf.mxu0
  %v2006 = vadd.f32 0.0, %v2005
  %v2007 = vpop.f32.mrf.mxu0
  %2008 = vmatprep.mubr.f32.mxu0 0.0
  %2009 = vmatmul.mubr.f32.gmra.mxu0 %v872
  %v2010 = vpop.f32.mrf.mxu0
  %v2011 = vadd.f32 0.0, %v2010
  %v2012 = vpop.f32.mrf.mxu0
  %2013 = vmatprep.mubr.f32.mxu0 0.0
  %2014 = vmatmul.mubr.f32.gmra.mxu0 %v875
  %v2015 = vpop.f32.mrf.mxu0
  %v2016 = vadd.f32 0.0, %v2015
  %v2017 = vpop.f32.mrf.mxu0
  %2018 = vmatprep.mubr.f32.mxu0 0.0
  %2019 = vmatmul.mubr.f32.gmra.mxu0 %v878
  %v2020 = vpop.f32.mrf.mxu0
  %v2021 = vadd.f32 0.0, %v2020
  %v2022 = vpop.f32.mrf.mxu0
  %2023 = vmatprep.mubr.f32.mxu0 0.0
  %2024 = vmatmul.mubr.f32.gmra.mxu0 %v881
  %v2025 = vpop.f32.mrf.mxu0
  %v2026 = vadd.f32 0.0, %v2025
  %v2027 = vpop.f32.mrf.mxu0
  %2028 = vmatprep.mubr.f32.mxu0 0.0
  %2029 = vmatmul.mubr.f32.gmra.mxu0 %v884
  %v2030 = vpop.f32.mrf.mxu0
  %v2031 = vadd.f32 0.0, %v2030
  %v2032 = vpop.f32.mrf.mxu0
  %2033 = vmatprep.mubr.f32.mxu0 0.0
  %2034 = vmatmul.mubr.f32.gmra.mxu0 %v887
  %v2035 = vpop.f32.mrf.mxu0
  %v2036 = vadd.f32 0.0, %v2035
  %v2037 = vpop.f32.mrf.mxu0
  %2038 = vmatprep.mubr.f32.mxu0 0.0
  %2039 = vmatmul.mubr.f32.gmra.mxu0 %v890
  %v2040 = vpop.f32.mrf.mxu0
  %v2041 = vadd.f32 0.0, %v2040
  %v2042 = vpop.f32.mrf.mxu0
  %2043 = vmatprep.mubr.f32.mxu0 0.0
  %2044 = vmatmul.mubr.f32.gmra.mxu0 %v893
  %v2045 = vpop.f32.mrf.mxu0
  %v2046 = vadd.f32 0.0, %v2045
  %v2047 = vpop.f32.mrf.mxu0
  %2048 = vmatprep.mubr.f32.mxu0 0.0
  %2049 = vmatmul.mubr.f32.gmra.mxu0 %v896
  %v2050 = vpop.f32.mrf.mxu0
  %v2051 = vadd.f32 0.0, %v2050
  %v2052 = vpop.f32.mrf.mxu0
  %2053 = vmatprep.mubr.f32.mxu0 0.0
  %2054 = vmatmul.mubr.f32.gmra.mxu0 %v899
  %v2055 = vpop.f32.mrf.mxu0
  %v2056 = vadd.f32 0.0, %v2055
  %v2057 = vpop.f32.mrf.mxu0
  %2058 = vmatprep.mubr.f32.mxu0 0.0
  %2059 = vmatmul.mubr.f32.gmra.mxu0 %v902
  %v2060 = vpop.f32.mrf.mxu0
  %v2061 = vadd.f32 0.0, %v2060
  %v2062 = vpop.f32.mrf.mxu0
  %2063 = vmatprep.mubr.f32.mxu0 0.0
  %2064 = vmatmul.mubr.f32.gmra.mxu0 %v905
  %v2065 = vpop.f32.mrf.mxu0
  %v2066 = vadd.f32 0.0, %v2065
  %v2067 = vpop.f32.mrf.mxu0
  %2068 = vmatprep.mubr.f32.mxu0 0.0
  %2069 = vmatmul.mubr.f32.gmra.mxu0 %v908
  %v2070 = vpop.f32.mrf.mxu0
  %v2071 = vadd.f32 0.0, %v2070
  %v2072 = vpop.f32.mrf.mxu0
  %2073 = vmatprep.mubr.f32.mxu0 0.0
  %2074 = vmatmul.mubr.f32.gmra.mxu0 %v911
  %v2075 = vpop.f32.mrf.mxu0
  %v2076 = vadd.f32 0.0, %v2075
  %v2077 = vpop.f32.mrf.mxu0
  %2078 = vmatprep.mubr.f32.mxu0 0.0
  %2079 = vmatmul.mubr.f32.gmra.mxu0 %v914
  %v2080 = vpop.f32.mrf.mxu0
  %v2081 = vadd.f32 0.0, %v2080
  %v2082 = vpop.f32.mrf.mxu0
  %2083 = vmatprep.mubr.f32.mxu0 0.0
  %2084 = vmatmul.mubr.f32.gmra.mxu0 %v917
  %v2085 = vpop.f32.mrf.mxu0
  %v2086 = vadd.f32 0.0, %v2085
  %v2087 = vpop.f32.mrf.mxu0
  %2088 = vmatprep.mubr.f32.mxu0 0.0
  %2089 = vmatmul.mubr.f32.gmra.mxu0 %v920
  %v2090 = vpop.f32.mrf.mxu0
  %v2091 = vadd.f32 0.0, %v2090
  %v2092 = vpop.f32.mrf.mxu0
  %2093 = vmatprep.mubr.f32.mxu0 0.0
  %2094 = vmatmul.mubr.f32.gmra.mxu0 %v923
  %v2095 = vpop.f32.mrf.mxu0
  %v2096 = vadd.f32 0.0, %v2095
  %v2097 = vpop.f32.mrf.mxu0
  %2098 = vmatprep.mubr.f32.mxu0 0.0
  %2099 = vmatmul.mubr.f32.gmra.mxu0 %v926
  %v2100 = vpop.f32.mrf.mxu0
  %v2101 = vadd.f32 0.0, %v2100
  %v2102 = vpop.f32.mrf.mxu0
  %2103 = vmatprep.mubr.f32.mxu0 0.0
  %2104 = vmatmul.mubr.f32.gmra.mxu0 %v929
  %v2105 = vpop.f32.mrf.mxu0
  %v2106 = vadd.f32 0.0, %v2105
  %v2107 = vpop.f32.mrf.mxu0
  %2108 = vmatprep.mubr.f32.mxu0 0.0
  %2109 = vmatmul.mubr.f32.gmra.mxu0 %v932
  %v2110 = vpop.f32.mrf.mxu0
  %v2111 = vadd.f32 0.0, %v2110
  %v2112 = vpop.f32.mrf.mxu0
  %2113 = vmatprep.mubr.f32.mxu0 0.0
  %2114 = vmatmul.mubr.f32.gmra.mxu0 %v935
  %v2115 = vpop.f32.mrf.mxu0
  %v2116 = vadd.f32 0.0, %v2115
  %v2117 = vpop.f32.mrf.mxu0
  %2118 = vmatprep.mubr.f32.mxu0 0.0
  %2119 = vmatmul.mubr.f32.gmra.mxu0 %v938
  %v2120 = vpop.f32.mrf.mxu0
  %v2121 = vadd.f32 0.0, %v2120
  %v2122 = vpop.f32.mrf.mxu0
  %2123 = vmatprep.mubr.f32.mxu0 0.0
  %2124 = vmatmul.mubr.f32.gmra.mxu0 %v941
  %v2125 = vpop.f32.mrf.mxu0
  %v2126 = vadd.f32 0.0, %v2125
  %v2127 = vpop.f32.mrf.mxu0
  %2128 = vmatprep.mubr.f32.mxu0 0.0
  %2129 = vmatmul.mubr.f32.gmra.mxu0 %v944
  %v2130 = vpop.f32.mrf.mxu0
  %v2131 = vadd.f32 0.0, %v2130
  %v2132 = vpop.f32.mrf.mxu0
  %2133 = vmatprep.mubr.f32.mxu0 0.0
  %2134 = vmatmul.mubr.f32.gmra.mxu0 %v947
  %v2135 = vpop.f32.mrf.mxu0
  %v2136 = vadd.f32 0.0, %v2135
  %v2137 = vpop.f32.mrf.mxu0
  %2138 = vdwg.mxu0
  %v2139 = vmul.f32 %v1981, %v109
  %v2140 = vmul.f32 %v1986, %v110
  %v2141 = vmul.f32 %v1991, %v111
  %v2142 = vmul.f32 %v1996, %v112
  %v2143 = vmul.f32 %v2001, %v113
  %v2144 = vmul.f32 %v2006, %v114
  %v2145 = vmul.f32 %v2011, %v115
  %v2146 = vmul.f32 %v2016, %v116
  %v2147 = vmul.f32 %v2021, %v117
  %v2148 = vmul.f32 %v2026, %v118
  %v2149 = vmul.f32 %v2031, %v119
  %v2150 = vmul.f32 %v2036, %v120
  %v2151 = vmul.f32 %v2041, %v121
  %v2152 = vmul.f32 %v2046, %v122
  %v2153 = vmul.f32 %v2051, %v123
  %v2154 = vmul.f32 %v2056, %v124
  %v2155 = vmul.f32 %v2061, %v125
  %v2156 = vmul.f32 %v2066, %v126
  %v2157 = vmul.f32 %v2071, %v127
  %v2158 = vmul.f32 %v2076, %v128
  %v2159 = vmul.f32 %v2081, %v129
  %v2160 = vmul.f32 %v2086, %v130
  %v2161 = vmul.f32 %v2091, %v131
  %v2162 = vmul.f32 %v2096, %v132
  %v2163 = vmul.f32 %v2101, %v133
  %v2164 = vmul.f32 %v2106, %v134
  %v2165 = vmul.f32 %v2111, %v135
  %v2166 = vmul.f32 %v2116, %v136
  %v2167 = vmul.f32 %v2121, %v137
  %v2168 = vmul.f32 %v2126, %v138
  %v2169 = vmul.f32 %v2131, %v139
  %v2170 = vmul.f32 %v2136, %v140
  %s2171 = scalar_lea.vmem %s7, 1
  %v2172 = vld [vmem:[%s2171] sm:$0x1]
  %v2174 = vlaneseq
  %v2175 = vshrl.u32 %v2174, 7
  %v2176 = vsub.s32 0, %v2175
  %v2177 = vrot.slane %v2172, %v2176
  %2179 = vmatprep.subr.mxu0 0.0
  %2180 = vmatpush1.msra.mxu0 %v2154
  %2181 = vmatprep.subr.mxu0 0.0
  %2182 = vmatpush1.msra.mxu0 %v2153
  %2183 = vmatprep.subr.mxu0 0.0
  %2184 = vmatpush1.msra.mxu0 %v2152
  %2185 = vmatprep.subr.mxu0 0.0
  %2186 = vmatpush1.msra.mxu0 %v2151
  %2187 = vmatprep.subr.mxu0 0.0
  %2188 = vmatpush1.msra.mxu0 %v2150
  %2189 = vmatprep.subr.mxu0 0.0
  %2190 = vmatpush1.msra.mxu0 %v2149
  %2191 = vmatprep.subr.mxu0 0.0
  %2192 = vmatpush1.msra.mxu0 %v2148
  %2193 = vmatprep.subr.mxu0 0.0
  %2194 = vmatpush1.msra.mxu0 %v2147
  %2195 = vmatprep.subr.mxu0 0.0
  %2196 = vmatpush1.msra.mxu0 %v2146
  %2197 = vmatprep.subr.mxu0 0.0
  %2198 = vmatpush1.msra.mxu0 %v2145
  %2199 = vmatprep.subr.mxu0 0.0
  %2200 = vmatpush1.msra.mxu0 %v2144
  %2201 = vmatprep.subr.mxu0 0.0
  %2202 = vmatpush1.msra.mxu0 %v2143
  %2203 = vmatprep.subr.mxu0 0.0
  %2204 = vmatpush1.msra.mxu0 %v2142
  %2205 = vmatprep.subr.mxu0 0.0
  %2206 = vmatpush1.msra.mxu0 %v2141
  %2207 = vmatprep.subr.mxu0 0.0
  %2208 = vmatpush1.msra.mxu0 %v2140
  %2209 = vmatprep.subr.mxu0 0.0
  %2210 = vmatpush1.msra.mxu0 %v2139
  %2211 = vmatprep.subr.mxu0 0.0
  %2212 = vmatpush2.msra.mxu0 %v2170
  %2213 = vmatprep.subr.mxu0 0.0
  %2214 = vmatpush2.msra.mxu0 %v2169
  %2215 = vmatprep.subr.mxu0 0.0
  %2216 = vmatpush2.msra.mxu0 %v2168
  %2217 = vmatprep.subr.mxu0 0.0
  %2218 = vmatpush2.msra.mxu0 %v2167
  %2219 = vmatprep.subr.mxu0 0.0
  %2220 = vmatpush2.msra.mxu0 %v2166
  %2221 = vmatprep.subr.mxu0 0.0
  %2222 = vmatpush2.msra.mxu0 %v2165
  %2223 = vmatprep.subr.mxu0 0.0
  %2224 = vmatpush2.msra.mxu0 %v2164
  %2225 = vmatprep.subr.mxu0 0.0
  %2226 = vmatpush2.msra.mxu0 %v2163
  %2227 = vmatprep.subr.mxu0 0.0
  %2228 = vmatpush2.msra.mxu0 %v2162
  %2229 = vmatprep.subr.mxu0 0.0
  %2230 = vmatpush2.msra.mxu0 %v2161
  %2231 = vmatprep.subr.mxu0 0.0
  %2232 = vmatpush2.msra.mxu0 %v2160
  %2233 = vmatprep.subr.mxu0 0.0
  %2234 = vmatpush2.msra.mxu0 %v2159
  %2235 = vmatprep.subr.mxu0 0.0
  %2236 = vmatpush2.msra.mxu0 %v2158
  %2237 = vmatprep.subr.mxu0 0.0
  %2238 = vmatpush2.msra.mxu0 %v2157
  %2239 = vmatprep.subr.mxu0 0.0
  %2240 = vmatpush2.msra.mxu0 %v2156
  %2241 = vmatprep.subr.mxu0 0.0
  %2242 = vmatpush2.msra.mxu0 %v2155
  %2243 = vmatprep.mubr.f32.mxu0 %v1907
  %2244 = vmatmul.mubr.f32.gmra.mxu0 %v1906
  %v2245 = vpop.f32.mrf.mxu0
  %v2246 = vadd.f32 %v2177, %v2245
  %v2247 = vpop.f32.mrf.mxu0
  %2248 = vmatprep.mubr.f32.mxu0 %v1909
  %2249 = vmatmul.mubr.f32.gmra.mxu0 %v1908
  %v2250 = vpop.f32.mrf.mxu0
  %v2251 = vadd.f32 %v2177, %v2250
  %v2252 = vpop.f32.mrf.mxu0
  %2253 = vmatprep.mubr.f32.mxu0 %v1911
  %2254 = vmatmul.mubr.f32.gmra.mxu0 %v1910
  %v2255 = vpop.f32.mrf.mxu0
  %v2256 = vadd.f32 %v2177, %v2255
  %v2257 = vpop.f32.mrf.mxu0
  %2258 = vmatprep.mubr.f32.mxu0 %v1913
  %2259 = vmatmul.mubr.f32.gmra.mxu0 %v1912
  %v2260 = vpop.f32.mrf.mxu0
  %v2261 = vadd.f32 %v2177, %v2260
  %v2262 = vpop.f32.mrf.mxu0
  %2263 = vdwg.mxu0
  %v2264 = vmax.f32 %v2246, 0.0
  %v2265 = vmax.f32 %v2251, 0.0
  %v2266 = vmax.f32 %v2256, 0.0
  %v2267 = vmax.f32 %v2261, 0.0
  %s2268 = scalar_lea.vmem %s4, 128
  %v2269 = vld [vmem:[%s2268] sm:$0xff]
  %v2270 = vld [vmem:[%s2268 + $0x8] sm:$0xff]
  %v2271 = vld [vmem:[%s2268 + $0x10] sm:$0xff]
  %v2272 = vld [vmem:[%s2268 + $0x18] sm:$0xff]
  %v2273 = vld [vmem:[%s2268 + $0x20] sm:$0xff]
  %v2274 = vld [vmem:[%s2268 + $0x28] sm:$0xff]
  %v2275 = vld [vmem:[%s2268 + $0x30] sm:$0xff]
  %v2276 = vld [vmem:[%s2268 + $0x38] sm:$0xff]
  %v2277 = vld [vmem:[%s2268 + $0x40] sm:$0xff]
  %v2278 = vld [vmem:[%s2268 + $0x48] sm:$0xff]
  %v2279 = vld [vmem:[%s2268 + $0x50] sm:$0xff]
  %v2280 = vld [vmem:[%s2268 + $0x58] sm:$0xff]
  %v2281 = vld [vmem:[%s2268 + $0x60] sm:$0xff]
  %v2282 = vld [vmem:[%s2268 + $0x68] sm:$0xff]
  %v2283 = vld [vmem:[%s2268 + $0x70] sm:$0xff]
  %v2284 = vld [vmem:[%s2268 + $0x78] sm:$0xff]
  %2285 = vmatprep.subr.mxu0 0.0
  %2286 = vmatpush1.msra.mxu0 %v2284
  %2287 = vmatprep.subr.mxu0 0.0
  %2288 = vmatpush1.msra.mxu0 %v2283
  %2289 = vmatprep.subr.mxu0 0.0
  %2290 = vmatpush1.msra.mxu0 %v2282
  %2291 = vmatprep.subr.mxu0 0.0
  %2292 = vmatpush1.msra.mxu0 %v2281
  %2293 = vmatprep.subr.mxu0 0.0
  %2294 = vmatpush1.msra.mxu0 %v2280
  %2295 = vmatprep.subr.mxu0 0.0
  %2296 = vmatpush1.msra.mxu0 %v2279
  %2297 = vmatprep.subr.mxu0 0.0
  %2298 = vmatpush1.msra.mxu0 %v2278
  %2299 = vmatprep.subr.mxu0 0.0
  %2300 = vmatpush1.msra.mxu0 %v2277
  %2301 = vmatprep.subr.mxu0 0.0
  %2302 = vmatpush1.msra.mxu0 %v2276
  %2303 = vmatprep.subr.mxu0 0.0
  %2304 = vmatpush1.msra.mxu0 %v2275
  %2305 = vmatprep.subr.mxu0 0.0
  %2306 = vmatpush1.msra.mxu0 %v2274
  %2307 = vmatprep.subr.mxu0 0.0
  %2308 = vmatpush1.msra.mxu0 %v2273
  %2309 = vmatprep.subr.mxu0 0.0
  %2310 = vmatpush1.msra.mxu0 %v2272
  %2311 = vmatprep.subr.mxu0 0.0
  %2312 = vmatpush1.msra.mxu0 %v2271
  %2313 = vmatprep.subr.mxu0 0.0
  %2314 = vmatpush1.msra.mxu0 %v2270
  %2315 = vmatprep.subr.mxu0 0.0
  %2316 = vmatpush1.msra.mxu0 %v2269
  %2317 = vmatprep.subr.mxu0 0.0
  %2318 = vmatpush2.msra.mxu0 0.0
  %2319 = vmatprep.subr.mxu0 0.0
  %2320 = vmatpush2.msra.mxu0 0.0
  %2321 = vmatprep.subr.mxu0 0.0
  %2322 = vmatpush2.msra.mxu0 0.0
  %2323 = vmatprep.subr.mxu0 0.0
  %2324 = vmatpush2.msra.mxu0 0.0
  %2325 = vmatprep.subr.mxu0 0.0
  %2326 = vmatpush2.msra.mxu0 0.0
  %2327 = vmatprep.subr.mxu0 0.0
  %2328 = vmatpush2.msra.mxu0 0.0
  %2329 = vmatprep.subr.mxu0 0.0
  %2330 = vmatpush2.msra.mxu0 0.0
  %2331 = vmatprep.subr.mxu0 0.0
  %2332 = vmatpush2.msra.mxu0 0.0
  %2333 = vmatprep.subr.mxu0 0.0
  %2334 = vmatpush2.msra.mxu0 0.0
  %2335 = vmatprep.subr.mxu0 0.0
  %2336 = vmatpush2.msra.mxu0 0.0
  %2337 = vmatprep.subr.mxu0 0.0
  %2338 = vmatpush2.msra.mxu0 0.0
  %2339 = vmatprep.subr.mxu0 0.0
  %2340 = vmatpush2.msra.mxu0 0.0
  %2341 = vmatprep.subr.mxu0 0.0
  %2342 = vmatpush2.msra.mxu0 0.0
  %2343 = vmatprep.subr.mxu0 0.0
  %2344 = vmatpush2.msra.mxu0 0.0
  %2345 = vmatprep.subr.mxu0 0.0
  %2346 = vmatpush2.msra.mxu0 0.0
  %2347 = vmatprep.subr.mxu0 0.0
  %2348 = vmatpush2.msra.mxu0 0.0
  %2349 = vmatprep.mubr.f32.mxu0 0.0
  %2350 = vmatmul.mubr.f32.gmra.mxu0 %v2264
  %v2351 = vpop.f32.mrf.mxu0
  %v2352 = vadd.f32 0.0, %v2351
  %v2353 = vpop.f32.mrf.mxu0
  %2354 = vmatprep.mubr.f32.mxu0 0.0
  %2355 = vmatmul.mubr.f32.gmra.mxu0 %v2265
  %v2356 = vpop.f32.mrf.mxu0
  %v2357 = vadd.f32 0.0, %v2356
  %v2358 = vpop.f32.mrf.mxu0
  %2359 = vmatprep.mubr.f32.mxu0 0.0
  %2360 = vmatmul.mubr.f32.gmra.mxu0 %v2266
  %v2361 = vpop.f32.mrf.mxu0
  %v2362 = vadd.f32 0.0, %v2361
  %v2363 = vpop.f32.mrf.mxu0
  %2364 = vmatprep.mubr.f32.mxu0 0.0
  %2365 = vmatmul.mubr.f32.gmra.mxu0 %v2267
  %v2366 = vpop.f32.mrf.mxu0
  %v2367 = vadd.f32 0.0, %v2366
  %v2368 = vpop.f32.mrf.mxu0
  %2369 = vdwg.mxu0
  %s2370 = scalar_lea.vmem %s5, 1024
  %v2371 = vld [vmem:[%s2370] sm:$0xff]
  %v2372 = vld [vmem:[%s2370 + $0x8] sm:$0xff]
  %v2373 = vld [vmem:[%s2370 + $0x10] sm:$0xff]
  %v2374 = vld [vmem:[%s2370 + $0x18] sm:$0xff]
  %v2375 = vld [vmem:[%s2370 + $0x20] sm:$0xff]
  %v2376 = vld [vmem:[%s2370 + $0x28] sm:$0xff]
  %v2377 = vld [vmem:[%s2370 + $0x30] sm:$0xff]
  %v2378 = vld [vmem:[%s2370 + $0x38] sm:$0xff]
  %v2379 = vld [vmem:[%s2370 + $0x40] sm:$0xff]
  %v2380 = vld [vmem:[%s2370 + $0x48] sm:$0xff]
  %v2381 = vld [vmem:[%s2370 + $0x50] sm:$0xff]
  %v2382 = vld [vmem:[%s2370 + $0x58] sm:$0xff]
  %v2383 = vld [vmem:[%s2370 + $0x60] sm:$0xff]
  %v2384 = vld [vmem:[%s2370 + $0x68] sm:$0xff]
  %v2385 = vld [vmem:[%s2370 + $0x70] sm:$0xff]
  %v2386 = vld [vmem:[%s2370 + $0x78] sm:$0xff]
  %v2387 = vld [vmem:[%s2370 + $0x80] sm:$0xff]
  %v2388 = vld [vmem:[%s2370 + $0x88] sm:$0xff]
  %v2389 = vld [vmem:[%s2370 + $0x90] sm:$0xff]
  %v2390 = vld [vmem:[%s2370 + $0x98] sm:$0xff]
  %v2391 = vld [vmem:[%s2370 + $0xa0] sm:$0xff]
  %v2392 = vld [vmem:[%s2370 + $0xa8] sm:$0xff]
  %v2393 = vld [vmem:[%s2370 + $0xb0] sm:$0xff]
  %v2394 = vld [vmem:[%s2370 + $0xb8] sm:$0xff]
  %v2395 = vld [vmem:[%s2370 + $0xc0] sm:$0xff]
  %v2396 = vld [vmem:[%s2370 + $0xc8] sm:$0xff]
  %v2397 = vld [vmem:[%s2370 + $0xd0] sm:$0xff]
  %v2398 = vld [vmem:[%s2370 + $0xd8] sm:$0xff]
  %v2399 = vld [vmem:[%s2370 + $0xe0] sm:$0xff]
  %v2400 = vld [vmem:[%s2370 + $0xe8] sm:$0xff]
  %v2401 = vld [vmem:[%s2370 + $0xf0] sm:$0xff]
  %v2402 = vld [vmem:[%s2370 + $0xf8] sm:$0xff]
  %v2403 = vld [vmem:[%s2370 + $0x100] sm:$0xff]
  %v2404 = vld [vmem:[%s2370 + $0x108] sm:$0xff]
  %v2405 = vld [vmem:[%s2370 + $0x110] sm:$0xff]
  %v2406 = vld [vmem:[%s2370 + $0x118] sm:$0xff]
  %v2407 = vld [vmem:[%s2370 + $0x120] sm:$0xff]
  %v2408 = vld [vmem:[%s2370 + $0x128] sm:$0xff]
  %v2409 = vld [vmem:[%s2370 + $0x130] sm:$0xff]
  %v2410 = vld [vmem:[%s2370 + $0x138] sm:$0xff]
  %v2411 = vld [vmem:[%s2370 + $0x140] sm:$0xff]
  %v2412 = vld [vmem:[%s2370 + $0x148] sm:$0xff]
  %v2413 = vld [vmem:[%s2370 + $0x150] sm:$0xff]
  %v2414 = vld [vmem:[%s2370 + $0x158] sm:$0xff]
  %v2415 = vld [vmem:[%s2370 + $0x160] sm:$0xff]
  %v2416 = vld [vmem:[%s2370 + $0x168] sm:$0xff]
  %v2417 = vld [vmem:[%s2370 + $0x170] sm:$0xff]
  %v2418 = vld [vmem:[%s2370 + $0x178] sm:$0xff]
  %v2419 = vld [vmem:[%s2370 + $0x180] sm:$0xff]
  %v2420 = vld [vmem:[%s2370 + $0x188] sm:$0xff]
  %v2421 = vld [vmem:[%s2370 + $0x190] sm:$0xff]
  %v2422 = vld [vmem:[%s2370 + $0x198] sm:$0xff]
  %v2423 = vld [vmem:[%s2370 + $0x1a0] sm:$0xff]
  %v2424 = vld [vmem:[%s2370 + $0x1a8] sm:$0xff]
  %v2425 = vld [vmem:[%s2370 + $0x1b0] sm:$0xff]
  %v2426 = vld [vmem:[%s2370 + $0x1b8] sm:$0xff]
  %v2427 = vld [vmem:[%s2370 + $0x1c0] sm:$0xff]
  %v2428 = vld [vmem:[%s2370 + $0x1c8] sm:$0xff]
  %v2429 = vld [vmem:[%s2370 + $0x1d0] sm:$0xff]
  %v2430 = vld [vmem:[%s2370 + $0x1d8] sm:$0xff]
  %v2431 = vld [vmem:[%s2370 + $0x1e0] sm:$0xff]
  %v2432 = vld [vmem:[%s2370 + $0x1e8] sm:$0xff]
  %v2433 = vld [vmem:[%s2370 + $0x1f0] sm:$0xff]
  %v2434 = vld [vmem:[%s2370 + $0x1f8] sm:$0xff]
  %2435 = vmatprep.subr.mxu0 %v2432
  %2436 = vmatpush1.msra.mxu0 %v2431
  %2437 = vmatprep.subr.mxu0 %v2428
  %2438 = vmatpush1.msra.mxu0 %v2427
  %2439 = vmatprep.subr.mxu0 %v2424
  %2440 = vmatpush1.msra.mxu0 %v2423
  %2441 = vmatprep.subr.mxu0 %v2420
  %2442 = vmatpush1.msra.mxu0 %v2419
  %2443 = vmatprep.subr.mxu0 %v2416
  %2444 = vmatpush1.msra.mxu0 %v2415
  %2445 = vmatprep.subr.mxu0 %v2412
  %2446 = vmatpush1.msra.mxu0 %v2411
  %2447 = vmatprep.subr.mxu0 %v2408
  %2448 = vmatpush1.msra.mxu0 %v2407
  %2449 = vmatprep.subr.mxu0 %v2404
  %2450 = vmatpush1.msra.mxu0 %v2403
  %2451 = vmatprep.subr.mxu0 %v2400
  %2452 = vmatpush1.msra.mxu0 %v2399
  %2453 = vmatprep.subr.mxu0 %v2396
  %2454 = vmatpush1.msra.mxu0 %v2395
  %2455 = vmatprep.subr.mxu0 %v2392
  %2456 = vmatpush1.msra.mxu0 %v2391
  %2457 = vmatprep.subr.mxu0 %v2388
  %2458 = vmatpush1.msra.mxu0 %v2387
  %2459 = vmatprep.subr.mxu0 %v2384
  %2460 = vmatpush1.msra.mxu0 %v2383
  %2461 = vmatprep.subr.mxu0 %v2380
  %2462 = vmatpush1.msra.mxu0 %v2379
  %2463 = vmatprep.subr.mxu0 %v2376
  %2464 = vmatpush1.msra.mxu0 %v2375
  %2465 = vmatprep.subr.mxu0 %v2372
  %2466 = vmatpush1.msra.mxu0 %v2371
  %2467 = vmatprep.subr.mxu0 0.0
  %2468 = vmatpush2.msra.mxu0 0.0
  %2469 = vmatprep.subr.mxu0 0.0
  %2470 = vmatpush2.msra.mxu0 0.0
  %2471 = vmatprep.subr.mxu0 0.0
  %2472 = vmatpush2.msra.mxu0 0.0
  %2473 = vmatprep.subr.mxu0 0.0
  %2474 = vmatpush2.msra.mxu0 0.0
  %2475 = vmatprep.subr.mxu0 0.0
  %2476 = vmatpush2.msra.mxu0 0.0
  %2477 = vmatprep.subr.mxu0 0.0
  %2478 = vmatpush2.msra.mxu0 0.0
  %2479 = vmatprep.subr.mxu0 0.0
  %2480 = vmatpush2.msra.mxu0 0.0
  %2481 = vmatprep.subr.mxu0 0.0
  %2482 = vmatpush2.msra.mxu0 0.0
  %2483 = vmatprep.subr.mxu0 0.0
  %2484 = vmatpush2.msra.mxu0 0.0
  %2485 = vmatprep.subr.mxu0 0.0
  %2486 = vmatpush2.msra.mxu0 0.0
  %2487 = vmatprep.subr.mxu0 0.0
  %2488 = vmatpush2.msra.mxu0 0.0
  %2489 = vmatprep.subr.mxu0 0.0
  %2490 = vmatpush2.msra.mxu0 0.0
  %2491 = vmatprep.subr.mxu0 0.0
  %2492 = vmatpush2.msra.mxu0 0.0
  %2493 = vmatprep.subr.mxu0 0.0
  %2494 = vmatpush2.msra.mxu0 0.0
  %2495 = vmatprep.subr.mxu0 0.0
  %2496 = vmatpush2.msra.mxu0 0.0
  %2497 = vmatprep.subr.mxu0 0.0
  %2498 = vmatpush2.msra.mxu0 0.0
  %2499 = vmatprep.mubr.f32.mxu0 0.0
  %2500 = vmatmul.mubr.f32.gmra.mxu0 %v2352
  %v2501 = vpop.f32.mrf.mxu0
  %v2502 = vadd.f32 0.0, %v2501
  %v2503 = vpop.f32.mrf.mxu0
  %v2504 = vadd.f32 0.0, %v2503
  %2505 = vmatprep.mubr.f32.mxu0 0.0
  %2506 = vmatmul.mubr.f32.gmra.mxu0 %v2357
  %v2507 = vpop.f32.mrf.mxu0
  %v2508 = vadd.f32 0.0, %v2507
  %v2509 = vpop.f32.mrf.mxu0
  %v2510 = vadd.f32 0.0, %v2509
  %2511 = vmatprep.mubr.f32.mxu0 0.0
  %2512 = vmatmul.mubr.f32.gmra.mxu0 %v2362
  %v2513 = vpop.f32.mrf.mxu0
  %v2514 = vadd.f32 0.0, %v2513
  %v2515 = vpop.f32.mrf.mxu0
  %v2516 = vadd.f32 0.0, %v2515
  %2517 = vmatprep.mubr.f32.mxu0 0.0
  %2518 = vmatmul.mubr.f32.gmra.mxu0 %v2367
  %v2519 = vpop.f32.mrf.mxu0
  %v2520 = vadd.f32 0.0, %v2519
  %v2521 = vpop.f32.mrf.mxu0
  %v2522 = vadd.f32 0.0, %v2521
  %2523 = vdwg.mxu0
  %2524 = vmatprep.subr.mxu0 %v2434
  %2525 = vmatpush1.msra.mxu0 %v2433
  %2526 = vmatprep.subr.mxu0 %v2430
  %2527 = vmatpush1.msra.mxu0 %v2429
  %2528 = vmatprep.subr.mxu0 %v2426
  %2529 = vmatpush1.msra.mxu0 %v2425
  %2530 = vmatprep.subr.mxu0 %v2422
  %2531 = vmatpush1.msra.mxu0 %v2421
  %2532 = vmatprep.subr.mxu0 %v2418
  %2533 = vmatpush1.msra.mxu0 %v2417
  %2534 = vmatprep.subr.mxu0 %v2414
  %2535 = vmatpush1.msra.mxu0 %v2413
  %2536 = vmatprep.subr.mxu0 %v2410
  %2537 = vmatpush1.msra.mxu0 %v2409
  %2538 = vmatprep.subr.mxu0 %v2406
  %2539 = vmatpush1.msra.mxu0 %v2405
  %2540 = vmatprep.subr.mxu0 %v2402
  %2541 = vmatpush1.msra.mxu0 %v2401
  %2542 = vmatprep.subr.mxu0 %v2398
  %2543 = vmatpush1.msra.mxu0 %v2397
  %2544 = vmatprep.subr.mxu0 %v2394
  %2545 = vmatpush1.msra.mxu0 %v2393
  %2546 = vmatprep.subr.mxu0 %v2390
  %2547 = vmatpush1.msra.mxu0 %v2389
  %2548 = vmatprep.subr.mxu0 %v2386
  %2549 = vmatpush1.msra.mxu0 %v2385
  %2550 = vmatprep.subr.mxu0 %v2382
  %2551 = vmatpush1.msra.mxu0 %v2381
  %2552 = vmatprep.subr.mxu0 %v2378
  %2553 = vmatpush1.msra.mxu0 %v2377
  %2554 = vmatprep.subr.mxu0 %v2374
  %2555 = vmatpush1.msra.mxu0 %v2373
  %2556 = vmatprep.subr.mxu0 0.0
  %2557 = vmatpush2.msra.mxu0 0.0
  %2558 = vmatprep.subr.mxu0 0.0
  %2559 = vmatpush2.msra.mxu0 0.0
  %2560 = vmatprep.subr.mxu0 0.0
  %2561 = vmatpush2.msra.mxu0 0.0
  %2562 = vmatprep.subr.mxu0 0.0
  %2563 = vmatpush2.msra.mxu0 0.0
  %2564 = vmatprep.subr.mxu0 0.0
  %2565 = vmatpush2.msra.mxu0 0.0
  %2566 = vmatprep.subr.mxu0 0.0
  %2567 = vmatpush2.msra.mxu0 0.0
  %2568 = vmatprep.subr.mxu0 0.0
  %2569 = vmatpush2.msra.mxu0 0.0
  %2570 = vmatprep.subr.mxu0 0.0
  %2571 = vmatpush2.msra.mxu0 0.0
  %2572 = vmatprep.subr.mxu0 0.0
  %2573 = vmatpush2.msra.mxu0 0.0
  %2574 = vmatprep.subr.mxu0 0.0
  %2575 = vmatpush2.msra.mxu0 0.0
  %2576 = vmatprep.subr.mxu0 0.0
  %2577 = vmatpush2.msra.mxu0 0.0
  %2578 = vmatprep.subr.mxu0 0.0
  %2579 = vmatpush2.msra.mxu0 0.0
  %2580 = vmatprep.subr.mxu0 0.0
  %2581 = vmatpush2.msra.mxu0 0.0
  %2582 = vmatprep.subr.mxu0 0.0
  %2583 = vmatpush2.msra.mxu0 0.0
  %2584 = vmatprep.subr.mxu0 0.0
  %2585 = vmatpush2.msra.mxu0 0.0
  %2586 = vmatprep.subr.mxu0 0.0
  %2587 = vmatpush2.msra.mxu0 0.0
  %2588 = vmatprep.mubr.f32.mxu0 0.0
  %2589 = vmatmul.mubr.f32.gmra.mxu0 %v2352
  %v2590 = vpop.f32.mrf.mxu0
  %v2591 = vadd.f32 0.0, %v2590
  %v2592 = vpop.f32.mrf.mxu0
  %v2593 = vadd.f32 0.0, %v2592
  %2594 = vmatprep.mubr.f32.mxu0 0.0
  %2595 = vmatmul.mubr.f32.gmra.mxu0 %v2357
  %v2596 = vpop.f32.mrf.mxu0
  %v2597 = vadd.f32 0.0, %v2596
  %v2598 = vpop.f32.mrf.mxu0
  %v2599 = vadd.f32 0.0, %v2598
  %2600 = vmatprep.mubr.f32.mxu0 0.0
  %2601 = vmatmul.mubr.f32.gmra.mxu0 %v2362
  %v2602 = vpop.f32.mrf.mxu0
  %v2603 = vadd.f32 0.0, %v2602
  %v2604 = vpop.f32.mrf.mxu0
  %v2605 = vadd.f32 0.0, %v2604
  %2606 = vmatprep.mubr.f32.mxu0 0.0
  %2607 = vmatmul.mubr.f32.gmra.mxu0 %v2367
  %v2608 = vpop.f32.mrf.mxu0
  %v2609 = vadd.f32 0.0, %v2608
  %v2610 = vpop.f32.mrf.mxu0
  %v2611 = vadd.f32 0.0, %v2610
  %2612 = vdwg.mxu0
  %v2613 = vmul.f32 %v69, %v2502
  %v2614 = vmul.f32 %v70, %v2504
  %v2615 = vmul.f32 %v71, %v2508
  %v2616 = vmul.f32 %v72, %v2510
  %v2617 = vmul.f32 %v73, %v2514
  %v2618 = vmul.f32 %v74, %v2516
  %v2619 = vmul.f32 %v75, %v2520
  %v2620 = vmul.f32 %v76, %v2522
  %v2621 = vadd.f32 %v2613, %v2615
  %v2622 = vadd.f32 %v2621, %v2617
  %v2623 = vadd.f32 %v2622, %v2619
  %v2624 = vrot.slane %v2623, 4
  %v2625 = vadd.f32 %v2623, %v2624
  %v2626 = vrot.slane %v2625, 2
  %v2627 = vadd.f32 %v2625, %v2626
  %v2628 = vrot.slane %v2627, 1
  %v2629 = vadd.f32 %v2627, %v2628
  %v2630 = vadd.f32 %v2614, %v2616
  %v2631 = vadd.f32 %v2630, %v2618
  %v2632 = vadd.f32 %v2631, %v2620
  %v2633 = vrot.slane %v2632, 4
  %v2634 = vadd.f32 %v2632, %v2633
  %v2635 = vrot.slane %v2634, 2
  %v2636 = vadd.f32 %v2634, %v2635
  %v2637 = vrot.slane %v2636, 1
  %v2638 = vadd.f32 %v2636, %v2637
  %v2639 = vadd.f32 %v2629, %v2591
  %v2640 = vadd.f32 %v2638, %v2593
  %v2641 = vadd.f32 %v2629, %v2597
  %v2642 = vadd.f32 %v2638, %v2599
  %v2643 = vadd.f32 %v2629, %v2603
  %v2644 = vadd.f32 %v2638, %v2605
  %v2645 = vadd.f32 %v2629, %v2609
  %v2646 = vadd.f32 %v2638, %v2611
  %s2647 = scalar_lea.vmem %s6, 4
  %v2648 = vld [vmem:[%s2647] sm:$0x3]
  %v2650 = vlaneseq
  %v2651 = vshrl.u32 %v2650, 7
  %v2652 = vsub.s32 0, %v2651
  %v2653 = vrot.slane %v2648, %v2652
  %v2654 = vlaneseq
  %v2655 = vshrl.u32 %v2654, 7
  %v2656 = vsub.s32 1, %v2655
  %v2657 = vrot.slane %v2648, %v2656
  %v2660 = vmul.f32 %v232, %v2653
  %v2661 = vmul.f32 %v233, %v2657
  %v2662 = vmul.f32 %v234, %v2653
  %v2663 = vmul.f32 %v235, %v2657
  %v2664 = vmul.f32 %v236, %v2653
  %v2665 = vmul.f32 %v237, %v2657
  %v2666 = vmul.f32 %v238, %v2653
  %v2667 = vmul.f32 %v239, %v2657
  %v2668 = vadd.f32 %v2639, %v2660
  %v2669 = vadd.f32 %v2640, %v2661
  %v2670 = vadd.f32 %v2641, %v2662
  %v2671 = vadd.f32 %v2642, %v2663
  %v2672 = vadd.f32 %v2643, %v2664
  %v2673 = vadd.f32 %v2644, %v2665
  %v2674 = vadd.f32 %v2645, %v2666
  %v2675 = vadd.f32 %v2646, %v2667
  %vm2676 = vcmp.gt.f32.partialorder %v2668, 0.0
  %vm2677 = vcmp.gt.f32.partialorder %v2669, 0.0
  %vm2678 = vcmp.gt.f32.partialorder %v2670, 0.0
  %vm2679 = vcmp.gt.f32.partialorder %v2671, 0.0
  %vm2680 = vcmp.gt.f32.partialorder %v2672, 0.0
  %vm2681 = vcmp.gt.f32.partialorder %v2673, 0.0
  %vm2682 = vcmp.gt.f32.partialorder %v2674, 0.0
  %vm2683 = vcmp.gt.f32.partialorder %v2675, 0.0
  %v2684 = vmul.f32 %v2668, 0.2
  %v2685 = vmul.f32 %v2669, 0.2
  %v2686 = vmul.f32 %v2670, 0.2
  %v2687 = vmul.f32 %v2671, 0.2
  %v2688 = vmul.f32 %v2672, 0.2
  %v2689 = vmul.f32 %v2673, 0.2
  %v2690 = vmul.f32 %v2674, 0.2
  %v2691 = vmul.f32 %v2675, 0.2
  %v2692 = vsel %vm2676, %v2668, %v2684
  %v2693 = vsel %vm2677, %v2669, %v2685
  %v2694 = vsel %vm2678, %v2670, %v2686
  %v2695 = vsel %vm2679, %v2671, %v2687
  %v2696 = vsel %vm2680, %v2672, %v2688
  %v2697 = vsel %vm2681, %v2673, %v2689
  %v2698 = vsel %vm2682, %v2674, %v2690
  %v2699 = vsel %vm2683, %v2675, %v2691
  %v2700 = vsel %vm1733, %v2692, -1e+30
  %v2701 = vsel %vm1734, %v2693, -1e+30
  %v2702 = vsel %vm1735, %v2694, -1e+30
  %v2703 = vsel %vm1736, %v2695, -1e+30
  %v2704 = vsel %vm1737, %v2696, -1e+30
  %v2705 = vsel %vm1738, %v2697, -1e+30
  %v2706 = vsel %vm1739, %v2698, -1e+30
  %v2707 = vsel %vm1740, %v2699, -1e+30
  %v2708 = vmax.f32 %v2700, %v2701
  %2709 = vmax.xlane.f32.xlu0 %v2708
  %v2710 = vpop.xlane.xlu0 %2709
  %v2711 = vmax.f32 %v2702, %v2703
  %2712 = vmax.xlane.f32.xlu0 %v2711
  %v2713 = vpop.xlane.xlu0 %2712
  %v2714 = vmax.f32 %v2704, %v2705
  %2715 = vmax.xlane.f32.xlu0 %v2714
  %v2716 = vpop.xlane.xlu0 %2715
  %v2717 = vmax.f32 %v2706, %v2707
  %2718 = vmax.xlane.f32.xlu0 %v2717
  %v2719 = vpop.xlane.xlu0 %2718
  %v2720 = vsub.f32 %v2700, %v2710
  %v2721 = vsub.f32 %v2701, %v2710
  %v2722 = vsub.f32 %v2702, %v2713
  %v2723 = vsub.f32 %v2703, %v2713
  %v2724 = vsub.f32 %v2704, %v2716
  %v2725 = vsub.f32 %v2705, %v2716
  %v2726 = vsub.f32 %v2706, %v2719
  %v2727 = vsub.f32 %v2707, %v2719
  %v2728 = vmul.f32 %v2720, 1.442695
  %v2729 = vpow.pop %v2728
  %v2730 = vmul.f32 %v2721, 1.442695
  %v2731 = vpow.pop %v2730
  %v2732 = vmul.f32 %v2722, 1.442695
  %v2733 = vpow.pop %v2732
  %v2734 = vmul.f32 %v2723, 1.442695
  %v2735 = vpow.pop %v2734
  %v2736 = vmul.f32 %v2724, 1.442695
  %v2737 = vpow.pop %v2736
  %v2738 = vmul.f32 %v2725, 1.442695
  %v2739 = vpow.pop %v2738
  %v2740 = vmul.f32 %v2726, 1.442695
  %v2741 = vpow.pop %v2740
  %v2742 = vmul.f32 %v2727, 1.442695
  %v2743 = vpow.pop %v2742
  %v2744 = vmul.f32 %v2729, %v223
  %v2745 = vmul.f32 %v2731, %v224
  %v2746 = vmul.f32 %v2733, %v225
  %v2747 = vmul.f32 %v2735, %v226
  %v2748 = vmul.f32 %v2737, %v227
  %v2749 = vmul.f32 %v2739, %v228
  %v2750 = vmul.f32 %v2741, %v229
  %v2751 = vmul.f32 %v2743, %v230
  %2752 = vmatprep.subr.mxu0 %v172
  %2753 = vmatpush1.msra.mxu0 %v171
  %2754 = vmatprep.subr.mxu0 %v170
  %2755 = vmatpush1.msra.mxu0 %v169
  %2756 = vmatprep.subr.mxu0 %v168
  %2757 = vmatpush1.msra.mxu0 %v167
  %2758 = vmatprep.subr.mxu0 %v166
  %2759 = vmatpush1.msra.mxu0 %v165
  %2760 = vmatprep.subr.mxu0 %v164
  %2761 = vmatpush1.msra.mxu0 %v163
  %2762 = vmatprep.subr.mxu0 %v162
  %2763 = vmatpush1.msra.mxu0 %v161
  %2764 = vmatprep.subr.mxu0 %v160
  %2765 = vmatpush1.msra.mxu0 %v159
  %2766 = vmatprep.subr.mxu0 %v158
  %2767 = vmatpush1.msra.mxu0 %v157
  %2768 = vmatprep.subr.mxu0 %v156
  %2769 = vmatpush1.msra.mxu0 %v155
  %2770 = vmatprep.subr.mxu0 %v154
  %2771 = vmatpush1.msra.mxu0 %v153
  %2772 = vmatprep.subr.mxu0 %v152
  %2773 = vmatpush1.msra.mxu0 %v151
  %2774 = vmatprep.subr.mxu0 %v150
  %2775 = vmatpush1.msra.mxu0 %v149
  %2776 = vmatprep.subr.mxu0 %v148
  %2777 = vmatpush1.msra.mxu0 %v147
  %2778 = vmatprep.subr.mxu0 %v146
  %2779 = vmatpush1.msra.mxu0 %v145
  %2780 = vmatprep.subr.mxu0 %v144
  %2781 = vmatpush1.msra.mxu0 %v143
  %2782 = vmatprep.subr.mxu0 %v142
  %2783 = vmatpush1.msra.mxu0 %v141
  %2784 = vmatprep.subr.mxu0 %v204
  %2785 = vmatpush2.msra.mxu0 %v203
  %2786 = vmatprep.subr.mxu0 %v202
  %2787 = vmatpush2.msra.mxu0 %v201
  %2788 = vmatprep.subr.mxu0 %v200
  %2789 = vmatpush2.msra.mxu0 %v199
  %2790 = vmatprep.subr.mxu0 %v198
  %2791 = vmatpush2.msra.mxu0 %v197
  %2792 = vmatprep.subr.mxu0 %v196
  %2793 = vmatpush2.msra.mxu0 %v195
  %2794 = vmatprep.subr.mxu0 %v194
  %2795 = vmatpush2.msra.mxu0 %v193
  %2796 = vmatprep.subr.mxu0 %v192
  %2797 = vmatpush2.msra.mxu0 %v191
  %2798 = vmatprep.subr.mxu0 %v190
  %2799 = vmatpush2.msra.mxu0 %v189
  %2800 = vmatprep.subr.mxu0 %v188
  %2801 = vmatpush2.msra.mxu0 %v187
  %2802 = vmatprep.subr.mxu0 %v186
  %2803 = vmatpush2.msra.mxu0 %v185
  %2804 = vmatprep.subr.mxu0 %v184
  %2805 = vmatpush2.msra.mxu0 %v183
  %2806 = vmatprep.subr.mxu0 %v182
  %2807 = vmatpush2.msra.mxu0 %v181
  %2808 = vmatprep.subr.mxu0 %v180
  %2809 = vmatpush2.msra.mxu0 %v179
  %2810 = vmatprep.subr.mxu0 %v178
  %2811 = vmatpush2.msra.mxu0 %v177
  %2812 = vmatprep.subr.mxu0 %v176
  %2813 = vmatpush2.msra.mxu0 %v175
  %2814 = vmatprep.subr.mxu0 %v174
  %2815 = vmatpush2.msra.mxu0 %v173
  %2816 = vmatprep.mubr.f32.mxu0 %v2745
  %2817 = vmatmul.mubr.f32.gmra.mxu0 %v2744
  %v2818 = vpop.f32.mrf.mxu0
  %v2819 = vadd.f32 0.0, %v2818
  %v2820 = vpop.f32.mrf.mxu0
  %v2821 = vadd.f32 0.0, %v2820
  %2822 = vmatprep.mubr.f32.mxu0 %v2747
  %2823 = vmatmul.mubr.f32.gmra.mxu0 %v2746
  %v2824 = vpop.f32.mrf.mxu0
  %v2825 = vadd.f32 0.0, %v2824
  %v2826 = vpop.f32.mrf.mxu0
  %v2827 = vadd.f32 0.0, %v2826
  %2828 = vmatprep.mubr.f32.mxu0 %v2749
  %2829 = vmatmul.mubr.f32.gmra.mxu0 %v2748
  %v2830 = vpop.f32.mrf.mxu0
  %v2831 = vadd.f32 0.0, %v2830
  %v2832 = vpop.f32.mrf.mxu0
  %v2833 = vadd.f32 0.0, %v2832
  %2834 = vmatprep.mubr.f32.mxu0 %v2751
  %2835 = vmatmul.mubr.f32.gmra.mxu0 %v2750
  %v2836 = vpop.f32.mrf.mxu0
  %v2837 = vadd.f32 0.0, %v2836
  %v2838 = vpop.f32.mrf.mxu0
  %v2839 = vadd.f32 0.0, %v2838
  %2840 = vdwg.mxu0
  %v2841 = vmax.f32 %v2819, 1e-16
  %v2842 = vmax.f32 %v2821, 1e-16
  %v2843 = vmax.f32 %v2825, 1e-16
  %v2844 = vmax.f32 %v2827, 1e-16
  %v2845 = vmax.f32 %v2831, 1e-16
  %v2846 = vmax.f32 %v2833, 1e-16
  %v2847 = vmax.f32 %v2837, 1e-16
  %v2848 = vmax.f32 %v2839, 1e-16
  %v2849 = vrcp.pop %v2841
  %v2850 = vmul.f32 1.0, %v2849
  %v2851 = vrcp.pop %v2842
  %v2852 = vmul.f32 1.0, %v2851
  %v2853 = vrcp.pop %v2843
  %v2854 = vmul.f32 1.0, %v2853
  %v2855 = vrcp.pop %v2844
  %v2856 = vmul.f32 1.0, %v2855
  %v2857 = vrcp.pop %v2845
  %v2858 = vmul.f32 1.0, %v2857
  %v2859 = vrcp.pop %v2846
  %v2860 = vmul.f32 1.0, %v2859
  %v2861 = vrcp.pop %v2847
  %v2862 = vmul.f32 1.0, %v2861
  %v2863 = vrcp.pop %v2848
  %v2864 = vmul.f32 1.0, %v2863
  %v2865 = vmul.f32 %v2744, %v2850
  %v2866 = vmul.f32 %v2745, %v2852
  %v2867 = vmul.f32 %v2746, %v2854
  %v2868 = vmul.f32 %v2747, %v2856
  %v2869 = vmul.f32 %v2748, %v2858
  %v2870 = vmul.f32 %v2749, %v2860
  %v2871 = vmul.f32 %v2750, %v2862
  %v2872 = vmul.f32 %v2751, %v2864
  %2873 = vmatprep.subr.mxu0 0.0
  %2874 = vmatpush1.msra.mxu0 0.0
  %2875 = vmatprep.subr.mxu0 0.0
  %2876 = vmatpush1.msra.mxu0 0.0
  %2877 = vmatprep.subr.mxu0 0.0
  %2878 = vmatpush1.msra.mxu0 0.0
  %2879 = vmatprep.subr.mxu0 0.0
  %2880 = vmatpush1.msra.mxu0 0.0
  %2881 = vmatprep.subr.mxu0 0.0
  %2882 = vmatpush1.msra.mxu0 0.0
  %2883 = vmatprep.subr.mxu0 0.0
  %2884 = vmatpush1.msra.mxu0 0.0
  %2885 = vmatprep.subr.mxu0 0.0
  %2886 = vmatpush1.msra.mxu0 0.0
  %2887 = vmatprep.subr.mxu0 0.0
  %2888 = vmatpush1.msra.mxu0 0.0
  %2889 = vmatprep.subr.mxu0 0.0
  %2890 = vmatpush1.msra.mxu0 0.0
  %2891 = vmatprep.subr.mxu0 0.0
  %2892 = vmatpush1.msra.mxu0 0.0
  %2893 = vmatprep.subr.mxu0 0.0
  %2894 = vmatpush1.msra.mxu0 0.0
  %2895 = vmatprep.subr.mxu0 0.0
  %2896 = vmatpush1.msra.mxu0 0.0
  %2897 = vmatprep.subr.mxu0 0.0
  %2898 = vmatpush1.msra.mxu0 %v2367
  %2899 = vmatprep.subr.mxu0 0.0
  %2900 = vmatpush1.msra.mxu0 %v2362
  %2901 = vmatprep.subr.mxu0 0.0
  %2902 = vmatpush1.msra.mxu0 %v2357
  %2903 = vmatprep.subr.mxu0 0.0
  %2904 = vmatpush1.msra.mxu0 %v2352
  %2905 = vmatprep.subr.mxu0 0.0
  %2906 = vmatpush2.msra.mxu0 0.0
  %2907 = vmatprep.subr.mxu0 0.0
  %2908 = vmatpush2.msra.mxu0 0.0
  %2909 = vmatprep.subr.mxu0 0.0
  %2910 = vmatpush2.msra.mxu0 0.0
  %2911 = vmatprep.subr.mxu0 0.0
  %2912 = vmatpush2.msra.mxu0 0.0
  %2913 = vmatprep.subr.mxu0 0.0
  %2914 = vmatpush2.msra.mxu0 0.0
  %2915 = vmatprep.subr.mxu0 0.0
  %2916 = vmatpush2.msra.mxu0 0.0
  %2917 = vmatprep.subr.mxu0 0.0
  %2918 = vmatpush2.msra.mxu0 0.0
  %2919 = vmatprep.subr.mxu0 0.0
  %2920 = vmatpush2.msra.mxu0 0.0
  %2921 = vmatprep.subr.mxu0 0.0
  %2922 = vmatpush2.msra.mxu0 0.0
  %2923 = vmatprep.subr.mxu0 0.0
  %2924 = vmatpush2.msra.mxu0 0.0
  %2925 = vmatprep.subr.mxu0 0.0
  %2926 = vmatpush2.msra.mxu0 0.0
  %2927 = vmatprep.subr.mxu0 0.0
  %2928 = vmatpush2.msra.mxu0 0.0
  %2929 = vmatprep.subr.mxu0 0.0
  %2930 = vmatpush2.msra.mxu0 0.0
  %2931 = vmatprep.subr.mxu0 0.0
  %2932 = vmatpush2.msra.mxu0 0.0
  %2933 = vmatprep.subr.mxu0 0.0
  %2934 = vmatpush2.msra.mxu0 0.0
  %2935 = vmatprep.subr.mxu0 0.0
  %2936 = vmatpush2.msra.mxu0 0.0
  %2937 = vmatprep.mubr.f32.mxu0 0.0
  %2938 = vmatmul.mubr.f32.gmra.mxu0 %v854
  %v2939 = vpop.f32.mrf.mxu0
  %v2940 = vadd.f32 0.0, %v2939
  %v2941 = vpop.f32.mrf.mxu0
  %2942 = vmatprep.mubr.f32.mxu0 0.0
  %2943 = vmatmul.mubr.f32.gmra.mxu0 %v857
  %v2944 = vpop.f32.mrf.mxu0
  %v2945 = vadd.f32 0.0, %v2944
  %v2946 = vpop.f32.mrf.mxu0
  %2947 = vmatprep.mubr.f32.mxu0 0.0
  %2948 = vmatmul.mubr.f32.gmra.mxu0 %v860
  %v2949 = vpop.f32.mrf.mxu0
  %v2950 = vadd.f32 0.0, %v2949
  %v2951 = vpop.f32.mrf.mxu0
  %2952 = vmatprep.mubr.f32.mxu0 0.0
  %2953 = vmatmul.mubr.f32.gmra.mxu0 %v863
  %v2954 = vpop.f32.mrf.mxu0
  %v2955 = vadd.f32 0.0, %v2954
  %v2956 = vpop.f32.mrf.mxu0
  %2957 = vmatprep.mubr.f32.mxu0 0.0
  %2958 = vmatmul.mubr.f32.gmra.mxu0 %v866
  %v2959 = vpop.f32.mrf.mxu0
  %v2960 = vadd.f32 0.0, %v2959
  %v2961 = vpop.f32.mrf.mxu0
  %2962 = vmatprep.mubr.f32.mxu0 0.0
  %2963 = vmatmul.mubr.f32.gmra.mxu0 %v869
  %v2964 = vpop.f32.mrf.mxu0
  %v2965 = vadd.f32 0.0, %v2964
  %v2966 = vpop.f32.mrf.mxu0
  %2967 = vmatprep.mubr.f32.mxu0 0.0
  %2968 = vmatmul.mubr.f32.gmra.mxu0 %v872
  %v2969 = vpop.f32.mrf.mxu0
  %v2970 = vadd.f32 0.0, %v2969
  %v2971 = vpop.f32.mrf.mxu0
  %2972 = vmatprep.mubr.f32.mxu0 0.0
  %2973 = vmatmul.mubr.f32.gmra.mxu0 %v875
  %v2974 = vpop.f32.mrf.mxu0
  %v2975 = vadd.f32 0.0, %v2974
  %v2976 = vpop.f32.mrf.mxu0
  %2977 = vmatprep.mubr.f32.mxu0 0.0
  %2978 = vmatmul.mubr.f32.gmra.mxu0 %v878
  %v2979 = vpop.f32.mrf.mxu0
  %v2980 = vadd.f32 0.0, %v2979
  %v2981 = vpop.f32.mrf.mxu0
  %2982 = vmatprep.mubr.f32.mxu0 0.0
  %2983 = vmatmul.mubr.f32.gmra.mxu0 %v881
  %v2984 = vpop.f32.mrf.mxu0
  %v2985 = vadd.f32 0.0, %v2984
  %v2986 = vpop.f32.mrf.mxu0
  %2987 = vmatprep.mubr.f32.mxu0 0.0
  %2988 = vmatmul.mubr.f32.gmra.mxu0 %v884
  %v2989 = vpop.f32.mrf.mxu0
  %v2990 = vadd.f32 0.0, %v2989
  %v2991 = vpop.f32.mrf.mxu0
  %2992 = vmatprep.mubr.f32.mxu0 0.0
  %2993 = vmatmul.mubr.f32.gmra.mxu0 %v887
  %v2994 = vpop.f32.mrf.mxu0
  %v2995 = vadd.f32 0.0, %v2994
  %v2996 = vpop.f32.mrf.mxu0
  %2997 = vmatprep.mubr.f32.mxu0 0.0
  %2998 = vmatmul.mubr.f32.gmra.mxu0 %v890
  %v2999 = vpop.f32.mrf.mxu0
  %v3000 = vadd.f32 0.0, %v2999
  %v3001 = vpop.f32.mrf.mxu0
  %3002 = vmatprep.mubr.f32.mxu0 0.0
  %3003 = vmatmul.mubr.f32.gmra.mxu0 %v893
  %v3004 = vpop.f32.mrf.mxu0
  %v3005 = vadd.f32 0.0, %v3004
  %v3006 = vpop.f32.mrf.mxu0
  %3007 = vmatprep.mubr.f32.mxu0 0.0
  %3008 = vmatmul.mubr.f32.gmra.mxu0 %v896
  %v3009 = vpop.f32.mrf.mxu0
  %v3010 = vadd.f32 0.0, %v3009
  %v3011 = vpop.f32.mrf.mxu0
  %3012 = vmatprep.mubr.f32.mxu0 0.0
  %3013 = vmatmul.mubr.f32.gmra.mxu0 %v899
  %v3014 = vpop.f32.mrf.mxu0
  %v3015 = vadd.f32 0.0, %v3014
  %v3016 = vpop.f32.mrf.mxu0
  %3017 = vmatprep.mubr.f32.mxu0 0.0
  %3018 = vmatmul.mubr.f32.gmra.mxu0 %v902
  %v3019 = vpop.f32.mrf.mxu0
  %v3020 = vadd.f32 0.0, %v3019
  %v3021 = vpop.f32.mrf.mxu0
  %3022 = vmatprep.mubr.f32.mxu0 0.0
  %3023 = vmatmul.mubr.f32.gmra.mxu0 %v905
  %v3024 = vpop.f32.mrf.mxu0
  %v3025 = vadd.f32 0.0, %v3024
  %v3026 = vpop.f32.mrf.mxu0
  %3027 = vmatprep.mubr.f32.mxu0 0.0
  %3028 = vmatmul.mubr.f32.gmra.mxu0 %v908
  %v3029 = vpop.f32.mrf.mxu0
  %v3030 = vadd.f32 0.0, %v3029
  %v3031 = vpop.f32.mrf.mxu0
  %3032 = vmatprep.mubr.f32.mxu0 0.0
  %3033 = vmatmul.mubr.f32.gmra.mxu0 %v911
  %v3034 = vpop.f32.mrf.mxu0
  %v3035 = vadd.f32 0.0, %v3034
  %v3036 = vpop.f32.mrf.mxu0
  %3037 = vmatprep.mubr.f32.mxu0 0.0
  %3038 = vmatmul.mubr.f32.gmra.mxu0 %v914
  %v3039 = vpop.f32.mrf.mxu0
  %v3040 = vadd.f32 0.0, %v3039
  %v3041 = vpop.f32.mrf.mxu0
  %3042 = vmatprep.mubr.f32.mxu0 0.0
  %3043 = vmatmul.mubr.f32.gmra.mxu0 %v917
  %v3044 = vpop.f32.mrf.mxu0
  %v3045 = vadd.f32 0.0, %v3044
  %v3046 = vpop.f32.mrf.mxu0
  %3047 = vmatprep.mubr.f32.mxu0 0.0
  %3048 = vmatmul.mubr.f32.gmra.mxu0 %v920
  %v3049 = vpop.f32.mrf.mxu0
  %v3050 = vadd.f32 0.0, %v3049
  %v3051 = vpop.f32.mrf.mxu0
  %3052 = vmatprep.mubr.f32.mxu0 0.0
  %3053 = vmatmul.mubr.f32.gmra.mxu0 %v923
  %v3054 = vpop.f32.mrf.mxu0
  %v3055 = vadd.f32 0.0, %v3054
  %v3056 = vpop.f32.mrf.mxu0
  %3057 = vmatprep.mubr.f32.mxu0 0.0
  %3058 = vmatmul.mubr.f32.gmra.mxu0 %v926
  %v3059 = vpop.f32.mrf.mxu0
  %v3060 = vadd.f32 0.0, %v3059
  %v3061 = vpop.f32.mrf.mxu0
  %3062 = vmatprep.mubr.f32.mxu0 0.0
  %3063 = vmatmul.mubr.f32.gmra.mxu0 %v929
  %v3064 = vpop.f32.mrf.mxu0
  %v3065 = vadd.f32 0.0, %v3064
  %v3066 = vpop.f32.mrf.mxu0
  %3067 = vmatprep.mubr.f32.mxu0 0.0
  %3068 = vmatmul.mubr.f32.gmra.mxu0 %v932
  %v3069 = vpop.f32.mrf.mxu0
  %v3070 = vadd.f32 0.0, %v3069
  %v3071 = vpop.f32.mrf.mxu0
  %3072 = vmatprep.mubr.f32.mxu0 0.0
  %3073 = vmatmul.mubr.f32.gmra.mxu0 %v935
  %v3074 = vpop.f32.mrf.mxu0
  %v3075 = vadd.f32 0.0, %v3074
  %v3076 = vpop.f32.mrf.mxu0
  %3077 = vmatprep.mubr.f32.mxu0 0.0
  %3078 = vmatmul.mubr.f32.gmra.mxu0 %v938
  %v3079 = vpop.f32.mrf.mxu0
  %v3080 = vadd.f32 0.0, %v3079
  %v3081 = vpop.f32.mrf.mxu0
  %3082 = vmatprep.mubr.f32.mxu0 0.0
  %3083 = vmatmul.mubr.f32.gmra.mxu0 %v941
  %v3084 = vpop.f32.mrf.mxu0
  %v3085 = vadd.f32 0.0, %v3084
  %v3086 = vpop.f32.mrf.mxu0
  %3087 = vmatprep.mubr.f32.mxu0 0.0
  %3088 = vmatmul.mubr.f32.gmra.mxu0 %v944
  %v3089 = vpop.f32.mrf.mxu0
  %v3090 = vadd.f32 0.0, %v3089
  %v3091 = vpop.f32.mrf.mxu0
  %3092 = vmatprep.mubr.f32.mxu0 0.0
  %3093 = vmatmul.mubr.f32.gmra.mxu0 %v947
  %v3094 = vpop.f32.mrf.mxu0
  %v3095 = vadd.f32 0.0, %v3094
  %v3096 = vpop.f32.mrf.mxu0
  %3097 = vdwg.mxu0
  %v3098 = vmul.f32 %v2940, %v109
  %v3099 = vmul.f32 %v2945, %v110
  %v3100 = vmul.f32 %v2950, %v111
  %v3101 = vmul.f32 %v2955, %v112
  %v3102 = vmul.f32 %v2960, %v113
  %v3103 = vmul.f32 %v2965, %v114
  %v3104 = vmul.f32 %v2970, %v115
  %v3105 = vmul.f32 %v2975, %v116
  %v3106 = vmul.f32 %v2980, %v117
  %v3107 = vmul.f32 %v2985, %v118
  %v3108 = vmul.f32 %v2990, %v119
  %v3109 = vmul.f32 %v2995, %v120
  %v3110 = vmul.f32 %v3000, %v121
  %v3111 = vmul.f32 %v3005, %v122
  %v3112 = vmul.f32 %v3010, %v123
  %v3113 = vmul.f32 %v3015, %v124
  %v3114 = vmul.f32 %v3020, %v125
  %v3115 = vmul.f32 %v3025, %v126
  %v3116 = vmul.f32 %v3030, %v127
  %v3117 = vmul.f32 %v3035, %v128
  %v3118 = vmul.f32 %v3040, %v129
  %v3119 = vmul.f32 %v3045, %v130
  %v3120 = vmul.f32 %v3050, %v131
  %v3121 = vmul.f32 %v3055, %v132
  %v3122 = vmul.f32 %v3060, %v133
  %v3123 = vmul.f32 %v3065, %v134
  %v3124 = vmul.f32 %v3070, %v135
  %v3125 = vmul.f32 %v3075, %v136
  %v3126 = vmul.f32 %v3080, %v137
  %v3127 = vmul.f32 %v3085, %v138
  %v3128 = vmul.f32 %v3090, %v139
  %v3129 = vmul.f32 %v3095, %v140
  %s3130 = scalar_lea.vmem %s7, 2
  %v3131 = vld [vmem:[%s3130] sm:$0x1]
  %v3133 = vlaneseq
  %v3134 = vshrl.u32 %v3133, 7
  %v3135 = vsub.s32 0, %v3134
  %v3136 = vrot.slane %v3131, %v3135
  %3138 = vmatprep.subr.mxu0 0.0
  %3139 = vmatpush1.msra.mxu0 %v3113
  %3140 = vmatprep.subr.mxu0 0.0
  %3141 = vmatpush1.msra.mxu0 %v3112
  %3142 = vmatprep.subr.mxu0 0.0
  %3143 = vmatpush1.msra.mxu0 %v3111
  %3144 = vmatprep.subr.mxu0 0.0
  %3145 = vmatpush1.msra.mxu0 %v3110
  %3146 = vmatprep.subr.mxu0 0.0
  %3147 = vmatpush1.msra.mxu0 %v3109
  %3148 = vmatprep.subr.mxu0 0.0
  %3149 = vmatpush1.msra.mxu0 %v3108
  %3150 = vmatprep.subr.mxu0 0.0
  %3151 = vmatpush1.msra.mxu0 %v3107
  %3152 = vmatprep.subr.mxu0 0.0
  %3153 = vmatpush1.msra.mxu0 %v3106
  %3154 = vmatprep.subr.mxu0 0.0
  %3155 = vmatpush1.msra.mxu0 %v3105
  %3156 = vmatprep.subr.mxu0 0.0
  %3157 = vmatpush1.msra.mxu0 %v3104
  %3158 = vmatprep.subr.mxu0 0.0
  %3159 = vmatpush1.msra.mxu0 %v3103
  %3160 = vmatprep.subr.mxu0 0.0
  %3161 = vmatpush1.msra.mxu0 %v3102
  %3162 = vmatprep.subr.mxu0 0.0
  %3163 = vmatpush1.msra.mxu0 %v3101
  %3164 = vmatprep.subr.mxu0 0.0
  %3165 = vmatpush1.msra.mxu0 %v3100
  %3166 = vmatprep.subr.mxu0 0.0
  %3167 = vmatpush1.msra.mxu0 %v3099
  %3168 = vmatprep.subr.mxu0 0.0
  %3169 = vmatpush1.msra.mxu0 %v3098
  %3170 = vmatprep.subr.mxu0 0.0
  %3171 = vmatpush2.msra.mxu0 %v3129
  %3172 = vmatprep.subr.mxu0 0.0
  %3173 = vmatpush2.msra.mxu0 %v3128
  %3174 = vmatprep.subr.mxu0 0.0
  %3175 = vmatpush2.msra.mxu0 %v3127
  %3176 = vmatprep.subr.mxu0 0.0
  %3177 = vmatpush2.msra.mxu0 %v3126
  %3178 = vmatprep.subr.mxu0 0.0
  %3179 = vmatpush2.msra.mxu0 %v3125
  %3180 = vmatprep.subr.mxu0 0.0
  %3181 = vmatpush2.msra.mxu0 %v3124
  %3182 = vmatprep.subr.mxu0 0.0
  %3183 = vmatpush2.msra.mxu0 %v3123
  %3184 = vmatprep.subr.mxu0 0.0
  %3185 = vmatpush2.msra.mxu0 %v3122
  %3186 = vmatprep.subr.mxu0 0.0
  %3187 = vmatpush2.msra.mxu0 %v3121
  %3188 = vmatprep.subr.mxu0 0.0
  %3189 = vmatpush2.msra.mxu0 %v3120
  %3190 = vmatprep.subr.mxu0 0.0
  %3191 = vmatpush2.msra.mxu0 %v3119
  %3192 = vmatprep.subr.mxu0 0.0
  %3193 = vmatpush2.msra.mxu0 %v3118
  %3194 = vmatprep.subr.mxu0 0.0
  %3195 = vmatpush2.msra.mxu0 %v3117
  %3196 = vmatprep.subr.mxu0 0.0
  %3197 = vmatpush2.msra.mxu0 %v3116
  %3198 = vmatprep.subr.mxu0 0.0
  %3199 = vmatpush2.msra.mxu0 %v3115
  %3200 = vmatprep.subr.mxu0 0.0
  %3201 = vmatpush2.msra.mxu0 %v3114
  %3202 = vmatprep.mubr.f32.mxu0 %v2866
  %3203 = vmatmul.mubr.f32.gmra.mxu0 %v2865
  %v3204 = vpop.f32.mrf.mxu0
  %v3205 = vadd.f32 %v3136, %v3204
  %v3206 = vpop.f32.mrf.mxu0
  %3207 = vmatprep.mubr.f32.mxu0 %v2868
  %3208 = vmatmul.mubr.f32.gmra.mxu0 %v2867
  %v3209 = vpop.f32.mrf.mxu0
  %v3210 = vadd.f32 %v3136, %v3209
  %v3211 = vpop.f32.mrf.mxu0
  %3212 = vmatprep.mubr.f32.mxu0 %v2870
  %3213 = vmatmul.mubr.f32.gmra.mxu0 %v2869
  %v3214 = vpop.f32.mrf.mxu0
  %v3215 = vadd.f32 %v3136, %v3214
  %v3216 = vpop.f32.mrf.mxu0
  %3217 = vmatprep.mubr.f32.mxu0 %v2872
  %3218 = vmatmul.mubr.f32.gmra.mxu0 %v2871
  %v3219 = vpop.f32.mrf.mxu0
  %v3220 = vadd.f32 %v3136, %v3219
  %v3221 = vpop.f32.mrf.mxu0
  %3222 = vdwg.mxu0
  %v3223 = vmax.f32 %v3205, 0.0
  %v3224 = vmax.f32 %v3210, 0.0
  %v3225 = vmax.f32 %v3215, 0.0
  %v3226 = vmax.f32 %v3220, 0.0
  %v3227 = vld [vmem:[%s18] sm:$0xff]
  %v3228 = vld [vmem:[%s18 + $0x8] sm:$0xff]
  %v3229 = vld [vmem:[%s18 + $0x10] sm:$0xff]
  %v3231 = vsel %vm852, %v3227, 0
  %v3234 = vsel %vm852, %v3228, 0
  %v3237 = vsel %vm852, %v3229, 0
  %3239 = vmatprep.subr.mxu0 0.0
  %3240 = vmatpush1.msra.mxu0 0.0
  %3241 = vmatprep.subr.mxu0 0.0
  %3242 = vmatpush1.msra.mxu0 0.0
  %3243 = vmatprep.subr.mxu0 0.0
  %3244 = vmatpush1.msra.mxu0 0.0
  %3245 = vmatprep.subr.mxu0 0.0
  %3246 = vmatpush1.msra.mxu0 0.0
  %3247 = vmatprep.subr.mxu0 0.0
  %3248 = vmatpush1.msra.mxu0 0.0
  %3249 = vmatprep.subr.mxu0 0.0
  %3250 = vmatpush1.msra.mxu0 0.0
  %3251 = vmatprep.subr.mxu0 0.0
  %3252 = vmatpush1.msra.mxu0 0.0
  %3253 = vmatprep.subr.mxu0 0.0
  %3254 = vmatpush1.msra.mxu0 0.0
  %3255 = vmatprep.subr.mxu0 0.0
  %3256 = vmatpush1.msra.mxu0 0.0
  %3257 = vmatprep.subr.mxu0 0.0
  %3258 = vmatpush1.msra.mxu0 0.0
  %3259 = vmatprep.subr.mxu0 0.0
  %3260 = vmatpush1.msra.mxu0 0.0
  %3261 = vmatprep.subr.mxu0 0.0
  %3262 = vmatpush1.msra.mxu0 0.0
  %3263 = vmatprep.subr.mxu0 0.0
  %3264 = vmatpush1.msra.mxu0 %v3226
  %3265 = vmatprep.subr.mxu0 0.0
  %3266 = vmatpush1.msra.mxu0 %v3225
  %3267 = vmatprep.subr.mxu0 0.0
  %3268 = vmatpush1.msra.mxu0 %v3224
  %3269 = vmatprep.subr.mxu0 0.0
  %3270 = vmatpush1.msra.mxu0 %v3223
  %3271 = vmatprep.subr.mxu0 0.0
  %3272 = vmatpush2.msra.mxu0 0.0
  %3273 = vmatprep.subr.mxu0 0.0
  %3274 = vmatpush2.msra.mxu0 0.0
  %3275 = vmatprep.subr.mxu0 0.0
  %3276 = vmatpush2.msra.mxu0 0.0
  %3277 = vmatprep.subr.mxu0 0.0
  %3278 = vmatpush2.msra.mxu0 0.0
  %3279 = vmatprep.subr.mxu0 0.0
  %3280 = vmatpush2.msra.mxu0 0.0
  %3281 = vmatprep.subr.mxu0 0.0
  %3282 = vmatpush2.msra.mxu0 0.0
  %3283 = vmatprep.subr.mxu0 0.0
  %3284 = vmatpush2.msra.mxu0 0.0
  %3285 = vmatprep.subr.mxu0 0.0
  %3286 = vmatpush2.msra.mxu0 0.0
  %3287 = vmatprep.subr.mxu0 0.0
  %3288 = vmatpush2.msra.mxu0 0.0
  %3289 = vmatprep.subr.mxu0 0.0
  %3290 = vmatpush2.msra.mxu0 0.0
  %3291 = vmatprep.subr.mxu0 0.0
  %3292 = vmatpush2.msra.mxu0 0.0
  %3293 = vmatprep.subr.mxu0 0.0
  %3294 = vmatpush2.msra.mxu0 0.0
  %3295 = vmatprep.subr.mxu0 0.0
  %3296 = vmatpush2.msra.mxu0 0.0
  %3297 = vmatprep.subr.mxu0 0.0
  %3298 = vmatpush2.msra.mxu0 0.0
  %3299 = vmatprep.subr.mxu0 0.0
  %3300 = vmatpush2.msra.mxu0 0.0
  %3301 = vmatprep.subr.mxu0 0.0
  %3302 = vmatpush2.msra.mxu0 0.0
  %3303 = vmatprep.mubr.f32.mxu0 0.0
  %3304 = vmatmul.mubr.f32.gmra.mxu0 %v3231
  %v3305 = vpop.f32.mrf.mxu0
  %v3306 = vadd.f32 0.0, %v3305
  %v3307 = vpop.f32.mrf.mxu0
  %3308 = vmatprep.mubr.f32.mxu0 0.0
  %3309 = vmatmul.mubr.f32.gmra.mxu0 %v3234
  %v3310 = vpop.f32.mrf.mxu0
  %v3311 = vadd.f32 0.0, %v3310
  %v3312 = vpop.f32.mrf.mxu0
  %3313 = vmatprep.mubr.f32.mxu0 0.0
  %3314 = vmatmul.mubr.f32.gmra.mxu0 %v3237
  %v3315 = vpop.f32.mrf.mxu0
  %v3316 = vadd.f32 0.0, %v3315
  %v3317 = vpop.f32.mrf.mxu0
  %3318 = vdwg.mxu0
  %v3319 = vld [vmem:[%s9] sm:$0xff]
  %v3320 = vld [vmem:[%s9 + $0x8] sm:$0xff]
  %v3321 = vld [vmem:[%s9 + $0x10] sm:$0xff]
  %v3322 = vld [vmem:[%s9 + $0x18] sm:$0xff]
  %v3323 = vld [vmem:[%s9 + $0x20] sm:$0xff]
  %v3324 = vld [vmem:[%s9 + $0x28] sm:$0xff]
  %v3325 = vld [vmem:[%s9 + $0x30] sm:$0xff]
  %v3326 = vld [vmem:[%s9 + $0x38] sm:$0xff]
  %v3327 = vld [vmem:[%s9 + $0x40] sm:$0xff]
  %v3328 = vld [vmem:[%s9 + $0x48] sm:$0xff]
  %v3329 = vld [vmem:[%s9 + $0x50] sm:$0xff]
  %v3330 = vld [vmem:[%s9 + $0x58] sm:$0xff]
  %v3331 = vld [vmem:[%s9 + $0x60] sm:$0xff]
  %v3332 = vld [vmem:[%s9 + $0x68] sm:$0xff]
  %v3333 = vld [vmem:[%s9 + $0x70] sm:$0xff]
  %v3334 = vld [vmem:[%s9 + $0x78] sm:$0xff]
  %v3335 = vld [vmem:[%s10] sm:$0xff]
  %v3336 = vld [vmem:[%s10 + $0x8] sm:$0xff]
  %vm3337 = vcmask 130048
  %v3339 = vsel %vm3337, %v68, 0
  %3341 = vmatprep.subr.mxu0 0.0
  %3342 = vmatpush1.msra.mxu0 0.0
  %3343 = vmatprep.subr.mxu0 0.0
  %3344 = vmatpush1.msra.mxu0 0.0
  %3345 = vmatprep.subr.mxu0 0.0
  %3346 = vmatpush1.msra.mxu0 0.0
  %3347 = vmatprep.subr.mxu0 0.0
  %3348 = vmatpush1.msra.mxu0 0.0
  %3349 = vmatprep.subr.mxu0 0.0
  %3350 = vmatpush1.msra.mxu0 0.0
  %3351 = vmatprep.subr.mxu0 0.0
  %3352 = vmatpush1.msra.mxu0 0.0
  %3353 = vmatprep.subr.mxu0 0.0
  %3354 = vmatpush1.msra.mxu0 0.0
  %3355 = vmatprep.subr.mxu0 0.0
  %3356 = vmatpush1.msra.mxu0 0.0
  %3357 = vmatprep.subr.mxu0 0.0
  %3358 = vmatpush1.msra.mxu0 0.0
  %3359 = vmatprep.subr.mxu0 0.0
  %3360 = vmatpush1.msra.mxu0 0.0
  %3361 = vmatprep.subr.mxu0 0.0
  %3362 = vmatpush1.msra.mxu0 0.0
  %3363 = vmatprep.subr.mxu0 0.0
  %3364 = vmatpush1.msra.mxu0 0.0
  %3365 = vmatprep.subr.mxu0 0.0
  %3366 = vmatpush1.msra.mxu0 0.0
  %3367 = vmatprep.subr.mxu0 0.0
  %3368 = vmatpush1.msra.mxu0 0.0
  %3369 = vmatprep.subr.mxu0 0.0
  %3370 = vmatpush1.msra.mxu0 %v3336
  %3371 = vmatprep.subr.mxu0 0.0
  %3372 = vmatpush1.msra.mxu0 %v3335
  %3373 = vmatprep.subr.mxu0 0.0
  %3374 = vmatpush2.msra.mxu0 0.0
  %3375 = vmatprep.subr.mxu0 0.0
  %3376 = vmatpush2.msra.mxu0 0.0
  %3377 = vmatprep.subr.mxu0 0.0
  %3378 = vmatpush2.msra.mxu0 0.0
  %3379 = vmatprep.subr.mxu0 0.0
  %3380 = vmatpush2.msra.mxu0 0.0
  %3381 = vmatprep.subr.mxu0 0.0
  %3382 = vmatpush2.msra.mxu0 0.0
  %3383 = vmatprep.subr.mxu0 0.0
  %3384 = vmatpush2.msra.mxu0 0.0
  %3385 = vmatprep.subr.mxu0 0.0
  %3386 = vmatpush2.msra.mxu0 0.0
  %3387 = vmatprep.subr.mxu0 0.0
  %3388 = vmatpush2.msra.mxu0 0.0
  %3389 = vmatprep.subr.mxu0 0.0
  %3390 = vmatpush2.msra.mxu0 0.0
  %3391 = vmatprep.subr.mxu0 0.0
  %3392 = vmatpush2.msra.mxu0 0.0
  %3393 = vmatprep.subr.mxu0 0.0
  %3394 = vmatpush2.msra.mxu0 0.0
  %3395 = vmatprep.subr.mxu0 0.0
  %3396 = vmatpush2.msra.mxu0 0.0
  %3397 = vmatprep.subr.mxu0 0.0
  %3398 = vmatpush2.msra.mxu0 0.0
  %3399 = vmatprep.subr.mxu0 0.0
  %3400 = vmatpush2.msra.mxu0 0.0
  %3401 = vmatprep.subr.mxu0 0.0
  %3402 = vmatpush2.msra.mxu0 0.0
  %3403 = vmatprep.subr.mxu0 0.0
  %3404 = vmatpush2.msra.mxu0 0.0
  %3405 = vmatprep.mubr.f32.mxu0 0.0
  %3406 = vmatmul.mubr.f32.gmra.mxu0 %v3339
  %v3407 = vpop.f32.mrf.mxu0
  %v3408 = vadd.f32 0.0, %v3407
  %v3409 = vpop.f32.mrf.mxu0
  %3410 = vdwg.mxu0
  %3411 = vmatprep.subr.mxu0 0.0
  %3412 = vmatpush1.msra.mxu0 %v3334
  %3413 = vmatprep.subr.mxu0 0.0
  %3414 = vmatpush1.msra.mxu0 %v3333
  %3415 = vmatprep.subr.mxu0 0.0
  %3416 = vmatpush1.msra.mxu0 %v3332
  %3417 = vmatprep.subr.mxu0 0.0
  %3418 = vmatpush1.msra.mxu0 %v3331
  %3419 = vmatprep.subr.mxu0 0.0
  %3420 = vmatpush1.msra.mxu0 %v3330
  %3421 = vmatprep.subr.mxu0 0.0
  %3422 = vmatpush1.msra.mxu0 %v3329
  %3423 = vmatprep.subr.mxu0 0.0
  %3424 = vmatpush1.msra.mxu0 %v3328
  %3425 = vmatprep.subr.mxu0 0.0
  %3426 = vmatpush1.msra.mxu0 %v3327
  %3427 = vmatprep.subr.mxu0 0.0
  %3428 = vmatpush1.msra.mxu0 %v3326
  %3429 = vmatprep.subr.mxu0 0.0
  %3430 = vmatpush1.msra.mxu0 %v3325
  %3431 = vmatprep.subr.mxu0 0.0
  %3432 = vmatpush1.msra.mxu0 %v3324
  %3433 = vmatprep.subr.mxu0 0.0
  %3434 = vmatpush1.msra.mxu0 %v3323
  %3435 = vmatprep.subr.mxu0 0.0
  %3436 = vmatpush1.msra.mxu0 %v3322
  %3437 = vmatprep.subr.mxu0 0.0
  %3438 = vmatpush1.msra.mxu0 %v3321
  %3439 = vmatprep.subr.mxu0 0.0
  %3440 = vmatpush1.msra.mxu0 %v3320
  %3441 = vmatprep.subr.mxu0 0.0
  %3442 = vmatpush1.msra.mxu0 %v3319
  %3443 = vmatprep.subr.mxu0 0.0
  %3444 = vmatpush2.msra.mxu0 0.0
  %3445 = vmatprep.subr.mxu0 0.0
  %3446 = vmatpush2.msra.mxu0 0.0
  %3447 = vmatprep.subr.mxu0 0.0
  %3448 = vmatpush2.msra.mxu0 0.0
  %3449 = vmatprep.subr.mxu0 0.0
  %3450 = vmatpush2.msra.mxu0 0.0
  %3451 = vmatprep.subr.mxu0 0.0
  %3452 = vmatpush2.msra.mxu0 0.0
  %3453 = vmatprep.subr.mxu0 0.0
  %3454 = vmatpush2.msra.mxu0 0.0
  %3455 = vmatprep.subr.mxu0 0.0
  %3456 = vmatpush2.msra.mxu0 0.0
  %3457 = vmatprep.subr.mxu0 0.0
  %3458 = vmatpush2.msra.mxu0 0.0
  %3459 = vmatprep.subr.mxu0 0.0
  %3460 = vmatpush2.msra.mxu0 0.0
  %3461 = vmatprep.subr.mxu0 0.0
  %3462 = vmatpush2.msra.mxu0 0.0
  %3463 = vmatprep.subr.mxu0 0.0
  %3464 = vmatpush2.msra.mxu0 0.0
  %3465 = vmatprep.subr.mxu0 0.0
  %3466 = vmatpush2.msra.mxu0 0.0
  %3467 = vmatprep.subr.mxu0 0.0
  %3468 = vmatpush2.msra.mxu0 0.0
  %3469 = vmatprep.subr.mxu0 0.0
  %3470 = vmatpush2.msra.mxu0 0.0
  %3471 = vmatprep.subr.mxu0 0.0
  %3472 = vmatpush2.msra.mxu0 0.0
  %3473 = vmatprep.subr.mxu0 0.0
  %3474 = vmatpush2.msra.mxu0 0.0
  %3475 = vmatprep.mubr.f32.mxu0 0.0
  %3476 = vmatmul.mubr.f32.gmra.mxu0 %v3306
  %v3477 = vpop.f32.mrf.mxu0
  %v3478 = vadd.f32 %v3408, %v3477
  %v3479 = vpop.f32.mrf.mxu0
  %3480 = vdwg.mxu0
  %v3481 = vld [vmem:[%s11] sm:$0x1]
  %v3483 = vlaneseq
  %v3484 = vshrl.u32 %v3483, 7
  %v3485 = vsub.s32 0, %v3484
  %v3486 = vrot.slane %v3481, %v3485
  %v3488 = vadd.f32 %v3478, %v3486
  %v3489 = vld [vmem:[%s8] sm:$0xff]
  %v3490 = vld [vmem:[%s8 + $0x8] sm:$0xff]
  %v3491 = vld [vmem:[%s8 + $0x10] sm:$0xff]
  %v3492 = vld [vmem:[%s8 + $0x18] sm:$0xff]
  %v3493 = vld [vmem:[%s8 + $0x20] sm:$0xff]
  %v3494 = vld [vmem:[%s8 + $0x28] sm:$0xff]
  %v3495 = vld [vmem:[%s8 + $0x30] sm:$0xff]
  %v3496 = vld [vmem:[%s8 + $0x38] sm:$0xff]
  %v3497 = vld [vmem:[%s8 + $0x40] sm:$0xff]
  %v3498 = vld [vmem:[%s8 + $0x48] sm:$0xff]
  %v3499 = vld [vmem:[%s8 + $0x50] sm:$0xff]
  %v3500 = vld [vmem:[%s8 + $0x58] sm:$0xff]
  %v3501 = vld [vmem:[%s8 + $0x60] sm:$0xff]
  %v3502 = vld [vmem:[%s8 + $0x68] sm:$0xff]
  %v3503 = vld [vmem:[%s8 + $0x70] sm:$0xff]
  %v3504 = vld [vmem:[%s8 + $0x78] sm:$0xff]
  %s3505 = scalar_lea.vmem %s8, 128
  %v3506 = vld [vmem:[%s3505] sm:$0xff]
  %v3507 = vld [vmem:[%s3505 + $0x8] sm:$0xff]
  %v3508 = vld [vmem:[%s3505 + $0x10] sm:$0xff]
  %v3509 = vld [vmem:[%s3505 + $0x18] sm:$0xff]
  %v3510 = vld [vmem:[%s3505 + $0x20] sm:$0xff]
  %v3511 = vld [vmem:[%s3505 + $0x28] sm:$0xff]
  %v3512 = vld [vmem:[%s3505 + $0x30] sm:$0xff]
  %v3513 = vld [vmem:[%s3505 + $0x38] sm:$0xff]
  %v3514 = vld [vmem:[%s3505 + $0x40] sm:$0xff]
  %v3515 = vld [vmem:[%s3505 + $0x48] sm:$0xff]
  %v3516 = vld [vmem:[%s3505 + $0x50] sm:$0xff]
  %v3517 = vld [vmem:[%s3505 + $0x58] sm:$0xff]
  %v3518 = vld [vmem:[%s3505 + $0x60] sm:$0xff]
  %v3519 = vld [vmem:[%s3505 + $0x68] sm:$0xff]
  %v3520 = vld [vmem:[%s3505 + $0x70] sm:$0xff]
  %v3521 = vld [vmem:[%s3505 + $0x78] sm:$0xff]
  %3522 = vmatprep.subr.mxu0 0.0
  %3523 = vmatpush1.msra.mxu0 %v3521
  %3524 = vmatprep.subr.mxu0 0.0
  %3525 = vmatpush1.msra.mxu0 %v3520
  %3526 = vmatprep.subr.mxu0 0.0
  %3527 = vmatpush1.msra.mxu0 %v3519
  %3528 = vmatprep.subr.mxu0 0.0
  %3529 = vmatpush1.msra.mxu0 %v3518
  %3530 = vmatprep.subr.mxu0 0.0
  %3531 = vmatpush1.msra.mxu0 %v3517
  %3532 = vmatprep.subr.mxu0 0.0
  %3533 = vmatpush1.msra.mxu0 %v3516
  %3534 = vmatprep.subr.mxu0 0.0
  %3535 = vmatpush1.msra.mxu0 %v3515
  %3536 = vmatprep.subr.mxu0 0.0
  %3537 = vmatpush1.msra.mxu0 %v3514
  %3538 = vmatprep.subr.mxu0 0.0
  %3539 = vmatpush1.msra.mxu0 %v3513
  %3540 = vmatprep.subr.mxu0 0.0
  %3541 = vmatpush1.msra.mxu0 %v3512
  %3542 = vmatprep.subr.mxu0 0.0
  %3543 = vmatpush1.msra.mxu0 %v3511
  %3544 = vmatprep.subr.mxu0 0.0
  %3545 = vmatpush1.msra.mxu0 %v3510
  %3546 = vmatprep.subr.mxu0 0.0
  %3547 = vmatpush1.msra.mxu0 %v3509
  %3548 = vmatprep.subr.mxu0 0.0
  %3549 = vmatpush1.msra.mxu0 %v3508
  %3550 = vmatprep.subr.mxu0 0.0
  %3551 = vmatpush1.msra.mxu0 %v3507
  %3552 = vmatprep.subr.mxu0 0.0
  %3553 = vmatpush1.msra.mxu0 %v3506
  %3554 = vmatprep.subr.mxu0 0.0
  %3555 = vmatpush2.msra.mxu0 0.0
  %3556 = vmatprep.subr.mxu0 0.0
  %3557 = vmatpush2.msra.mxu0 0.0
  %3558 = vmatprep.subr.mxu0 0.0
  %3559 = vmatpush2.msra.mxu0 0.0
  %3560 = vmatprep.subr.mxu0 0.0
  %3561 = vmatpush2.msra.mxu0 0.0
  %3562 = vmatprep.subr.mxu0 0.0
  %3563 = vmatpush2.msra.mxu0 0.0
  %3564 = vmatprep.subr.mxu0 0.0
  %3565 = vmatpush2.msra.mxu0 0.0
  %3566 = vmatprep.subr.mxu0 0.0
  %3567 = vmatpush2.msra.mxu0 0.0
  %3568 = vmatprep.subr.mxu0 0.0
  %3569 = vmatpush2.msra.mxu0 0.0
  %3570 = vmatprep.subr.mxu0 0.0
  %3571 = vmatpush2.msra.mxu0 0.0
  %3572 = vmatprep.subr.mxu0 0.0
  %3573 = vmatpush2.msra.mxu0 0.0
  %3574 = vmatprep.subr.mxu0 0.0
  %3575 = vmatpush2.msra.mxu0 0.0
  %3576 = vmatprep.subr.mxu0 0.0
  %3577 = vmatpush2.msra.mxu0 0.0
  %3578 = vmatprep.subr.mxu0 0.0
  %3579 = vmatpush2.msra.mxu0 0.0
  %3580 = vmatprep.subr.mxu0 0.0
  %3581 = vmatpush2.msra.mxu0 0.0
  %3582 = vmatprep.subr.mxu0 0.0
  %3583 = vmatpush2.msra.mxu0 0.0
  %3584 = vmatprep.subr.mxu0 0.0
  %3585 = vmatpush2.msra.mxu0 0.0
  %3586 = vmatprep.mubr.f32.mxu0 0.0
  %3587 = vmatmul.mubr.f32.gmra.mxu0 %v3311
  %v3588 = vpop.f32.mrf.mxu0
  %v3589 = vadd.f32 0.0, %v3588
  %v3590 = vpop.f32.mrf.mxu0
  %3591 = vdwg.mxu0
  %s3592 = scalar_lea.vmem %s8, 256
  %v3593 = vld [vmem:[%s3592] sm:$0xff]
  %v3594 = vld [vmem:[%s3592 + $0x8] sm:$0xff]
  %v3595 = vld [vmem:[%s3592 + $0x10] sm:$0xff]
  %v3596 = vld [vmem:[%s3592 + $0x18] sm:$0xff]
  %v3597 = vld [vmem:[%s3592 + $0x20] sm:$0xff]
  %v3598 = vld [vmem:[%s3592 + $0x28] sm:$0xff]
  %v3599 = vld [vmem:[%s3592 + $0x30] sm:$0xff]
  %v3600 = vld [vmem:[%s3592 + $0x38] sm:$0xff]
  %v3601 = vld [vmem:[%s3592 + $0x40] sm:$0xff]
  %v3602 = vld [vmem:[%s3592 + $0x48] sm:$0xff]
  %v3603 = vld [vmem:[%s3592 + $0x50] sm:$0xff]
  %v3604 = vld [vmem:[%s3592 + $0x58] sm:$0xff]
  %v3605 = vld [vmem:[%s3592 + $0x60] sm:$0xff]
  %v3606 = vld [vmem:[%s3592 + $0x68] sm:$0xff]
  %v3607 = vld [vmem:[%s3592 + $0x70] sm:$0xff]
  %v3608 = vld [vmem:[%s3592 + $0x78] sm:$0xff]
  %s3609 = scalar_lea.vmem %s8, 384
  %v3610 = vld [vmem:[%s3609] sm:$0xff]
  %v3611 = vld [vmem:[%s3609 + $0x8] sm:$0xff]
  %v3612 = vld [vmem:[%s3609 + $0x10] sm:$0xff]
  %v3613 = vld [vmem:[%s3609 + $0x18] sm:$0xff]
  %v3614 = vld [vmem:[%s3609 + $0x20] sm:$0xff]
  %v3615 = vld [vmem:[%s3609 + $0x28] sm:$0xff]
  %v3616 = vld [vmem:[%s3609 + $0x30] sm:$0xff]
  %v3617 = vld [vmem:[%s3609 + $0x38] sm:$0xff]
  %v3618 = vld [vmem:[%s3609 + $0x40] sm:$0xff]
  %v3619 = vld [vmem:[%s3609 + $0x48] sm:$0xff]
  %v3620 = vld [vmem:[%s3609 + $0x50] sm:$0xff]
  %v3621 = vld [vmem:[%s3609 + $0x58] sm:$0xff]
  %v3622 = vld [vmem:[%s3609 + $0x60] sm:$0xff]
  %v3623 = vld [vmem:[%s3609 + $0x68] sm:$0xff]
  %v3624 = vld [vmem:[%s3609 + $0x70] sm:$0xff]
  %v3625 = vld [vmem:[%s3609 + $0x78] sm:$0xff]
  %3626 = vmatprep.subr.mxu0 0.0
  %3627 = vmatpush1.msra.mxu0 %v3625
  %3628 = vmatprep.subr.mxu0 0.0
  %3629 = vmatpush1.msra.mxu0 %v3624
  %3630 = vmatprep.subr.mxu0 0.0
  %3631 = vmatpush1.msra.mxu0 %v3623
  %3632 = vmatprep.subr.mxu0 0.0
  %3633 = vmatpush1.msra.mxu0 %v3622
  %3634 = vmatprep.subr.mxu0 0.0
  %3635 = vmatpush1.msra.mxu0 %v3621
  %3636 = vmatprep.subr.mxu0 0.0
  %3637 = vmatpush1.msra.mxu0 %v3620
  %3638 = vmatprep.subr.mxu0 0.0
  %3639 = vmatpush1.msra.mxu0 %v3619
  %3640 = vmatprep.subr.mxu0 0.0
  %3641 = vmatpush1.msra.mxu0 %v3618
  %3642 = vmatprep.subr.mxu0 0.0
  %3643 = vmatpush1.msra.mxu0 %v3617
  %3644 = vmatprep.subr.mxu0 0.0
  %3645 = vmatpush1.msra.mxu0 %v3616
  %3646 = vmatprep.subr.mxu0 0.0
  %3647 = vmatpush1.msra.mxu0 %v3615
  %3648 = vmatprep.subr.mxu0 0.0
  %3649 = vmatpush1.msra.mxu0 %v3614
  %3650 = vmatprep.subr.mxu0 0.0
  %3651 = vmatpush1.msra.mxu0 %v3613
  %3652 = vmatprep.subr.mxu0 0.0
  %3653 = vmatpush1.msra.mxu0 %v3612
  %3654 = vmatprep.subr.mxu0 0.0
  %3655 = vmatpush1.msra.mxu0 %v3611
  %3656 = vmatprep.subr.mxu0 0.0
  %3657 = vmatpush1.msra.mxu0 %v3610
  %3658 = vmatprep.subr.mxu0 0.0
  %3659 = vmatpush2.msra.mxu0 0.0
  %3660 = vmatprep.subr.mxu0 0.0
  %3661 = vmatpush2.msra.mxu0 0.0
  %3662 = vmatprep.subr.mxu0 0.0
  %3663 = vmatpush2.msra.mxu0 0.0
  %3664 = vmatprep.subr.mxu0 0.0
  %3665 = vmatpush2.msra.mxu0 0.0
  %3666 = vmatprep.subr.mxu0 0.0
  %3667 = vmatpush2.msra.mxu0 0.0
  %3668 = vmatprep.subr.mxu0 0.0
  %3669 = vmatpush2.msra.mxu0 0.0
  %3670 = vmatprep.subr.mxu0 0.0
  %3671 = vmatpush2.msra.mxu0 0.0
  %3672 = vmatprep.subr.mxu0 0.0
  %3673 = vmatpush2.msra.mxu0 0.0
  %3674 = vmatprep.subr.mxu0 0.0
  %3675 = vmatpush2.msra.mxu0 0.0
  %3676 = vmatprep.subr.mxu0 0.0
  %3677 = vmatpush2.msra.mxu0 0.0
  %3678 = vmatprep.subr.mxu0 0.0
  %3679 = vmatpush2.msra.mxu0 0.0
  %3680 = vmatprep.subr.mxu0 0.0
  %3681 = vmatpush2.msra.mxu0 0.0
  %3682 = vmatprep.subr.mxu0 0.0
  %3683 = vmatpush2.msra.mxu0 0.0
  %3684 = vmatprep.subr.mxu0 0.0
  %3685 = vmatpush2.msra.mxu0 0.0
  %3686 = vmatprep.subr.mxu0 0.0
  %3687 = vmatpush2.msra.mxu0 0.0
  %3688 = vmatprep.subr.mxu0 0.0
  %3689 = vmatpush2.msra.mxu0 0.0
  %3690 = vmatprep.mubr.f32.mxu0 0.0
  %3691 = vmatmul.mubr.f32.gmra.mxu0 %v3316
  %v3692 = vpop.f32.mrf.mxu0
  %v3693 = vadd.f32 0.0, %v3692
  %v3694 = vpop.f32.mrf.mxu0
  %3695 = vdwg.mxu0
  %s3696 = scalar_lea.vmem %s8, 512
  %v3697 = vld [vmem:[%s3696] sm:$0xff]
  %v3698 = vld [vmem:[%s3696 + $0x8] sm:$0xff]
  %v3699 = vld [vmem:[%s3696 + $0x10] sm:$0xff]
  %v3700 = vld [vmem:[%s3696 + $0x18] sm:$0xff]
  %v3701 = vld [vmem:[%s3696 + $0x20] sm:$0xff]
  %v3702 = vld [vmem:[%s3696 + $0x28] sm:$0xff]
  %v3703 = vld [vmem:[%s3696 + $0x30] sm:$0xff]
  %v3704 = vld [vmem:[%s3696 + $0x38] sm:$0xff]
  %v3705 = vld [vmem:[%s3696 + $0x40] sm:$0xff]
  %v3706 = vld [vmem:[%s3696 + $0x48] sm:$0xff]
  %v3707 = vld [vmem:[%s3696 + $0x50] sm:$0xff]
  %v3708 = vld [vmem:[%s3696 + $0x58] sm:$0xff]
  %v3709 = vld [vmem:[%s3696 + $0x60] sm:$0xff]
  %v3710 = vld [vmem:[%s3696 + $0x68] sm:$0xff]
  %v3711 = vld [vmem:[%s3696 + $0x70] sm:$0xff]
  %v3712 = vld [vmem:[%s3696 + $0x78] sm:$0xff]
  %v3714 = vrot.slane %v3316, 4
  %3716 = vmatprep.subr.mxu0 0.0
  %3717 = vmatpush1.msra.mxu0 %v3712
  %3718 = vmatprep.subr.mxu0 0.0
  %3719 = vmatpush1.msra.mxu0 %v3711
  %3720 = vmatprep.subr.mxu0 0.0
  %3721 = vmatpush1.msra.mxu0 %v3710
  %3722 = vmatprep.subr.mxu0 0.0
  %3723 = vmatpush1.msra.mxu0 %v3709
  %3724 = vmatprep.subr.mxu0 0.0
  %3725 = vmatpush1.msra.mxu0 %v3708
  %3726 = vmatprep.subr.mxu0 0.0
  %3727 = vmatpush1.msra.mxu0 %v3707
  %3728 = vmatprep.subr.mxu0 0.0
  %3729 = vmatpush1.msra.mxu0 %v3706
  %3730 = vmatprep.subr.mxu0 0.0
  %3731 = vmatpush1.msra.mxu0 %v3705
  %3732 = vmatprep.subr.mxu0 0.0
  %3733 = vmatpush1.msra.mxu0 %v3704
  %3734 = vmatprep.subr.mxu0 0.0
  %3735 = vmatpush1.msra.mxu0 %v3703
  %3736 = vmatprep.subr.mxu0 0.0
  %3737 = vmatpush1.msra.mxu0 %v3702
  %3738 = vmatprep.subr.mxu0 0.0
  %3739 = vmatpush1.msra.mxu0 %v3701
  %3740 = vmatprep.subr.mxu0 0.0
  %3741 = vmatpush1.msra.mxu0 %v3700
  %3742 = vmatprep.subr.mxu0 0.0
  %3743 = vmatpush1.msra.mxu0 %v3699
  %3744 = vmatprep.subr.mxu0 0.0
  %3745 = vmatpush1.msra.mxu0 %v3698
  %3746 = vmatprep.subr.mxu0 0.0
  %3747 = vmatpush1.msra.mxu0 %v3697
  %3748 = vmatprep.subr.mxu0 0.0
  %3749 = vmatpush2.msra.mxu0 0.0
  %3750 = vmatprep.subr.mxu0 0.0
  %3751 = vmatpush2.msra.mxu0 0.0
  %3752 = vmatprep.subr.mxu0 0.0
  %3753 = vmatpush2.msra.mxu0 0.0
  %3754 = vmatprep.subr.mxu0 0.0
  %3755 = vmatpush2.msra.mxu0 0.0
  %3756 = vmatprep.subr.mxu0 0.0
  %3757 = vmatpush2.msra.mxu0 0.0
  %3758 = vmatprep.subr.mxu0 0.0
  %3759 = vmatpush2.msra.mxu0 0.0
  %3760 = vmatprep.subr.mxu0 0.0
  %3761 = vmatpush2.msra.mxu0 0.0
  %3762 = vmatprep.subr.mxu0 0.0
  %3763 = vmatpush2.msra.mxu0 0.0
  %3764 = vmatprep.subr.mxu0 0.0
  %3765 = vmatpush2.msra.mxu0 0.0
  %3766 = vmatprep.subr.mxu0 0.0
  %3767 = vmatpush2.msra.mxu0 0.0
  %3768 = vmatprep.subr.mxu0 0.0
  %3769 = vmatpush2.msra.mxu0 0.0
  %3770 = vmatprep.subr.mxu0 0.0
  %3771 = vmatpush2.msra.mxu0 0.0
  %3772 = vmatprep.subr.mxu0 0.0
  %3773 = vmatpush2.msra.mxu0 0.0
  %3774 = vmatprep.subr.mxu0 0.0
  %3775 = vmatpush2.msra.mxu0 0.0
  %3776 = vmatprep.subr.mxu0 0.0
  %3777 = vmatpush2.msra.mxu0 0.0
  %3778 = vmatprep.subr.mxu0 0.0
  %3779 = vmatpush2.msra.mxu0 0.0
  %3780 = vmatprep.mubr.f32.mxu0 0.0
  %3781 = vmatmul.mubr.f32.gmra.mxu0 %v3714
  %v3782 = vpop.f32.mrf.mxu0
  %v3783 = vadd.f32 0.0, %v3782
  %v3784 = vpop.f32.mrf.mxu0
  %3785 = vdwg.mxu0
  %v3787 = vrot.slane %v3306, 4
  %3789 = vmatprep.subr.mxu0 0.0
  %3790 = vmatpush1.msra.mxu0 %v3504
  %3791 = vmatprep.subr.mxu0 0.0
  %3792 = vmatpush1.msra.mxu0 %v3503
  %3793 = vmatprep.subr.mxu0 0.0
  %3794 = vmatpush1.msra.mxu0 %v3502
  %3795 = vmatprep.subr.mxu0 0.0
  %3796 = vmatpush1.msra.mxu0 %v3501
  %3797 = vmatprep.subr.mxu0 0.0
  %3798 = vmatpush1.msra.mxu0 %v3500
  %3799 = vmatprep.subr.mxu0 0.0
  %3800 = vmatpush1.msra.mxu0 %v3499
  %3801 = vmatprep.subr.mxu0 0.0
  %3802 = vmatpush1.msra.mxu0 %v3498
  %3803 = vmatprep.subr.mxu0 0.0
  %3804 = vmatpush1.msra.mxu0 %v3497
  %3805 = vmatprep.subr.mxu0 0.0
  %3806 = vmatpush1.msra.mxu0 %v3496
  %3807 = vmatprep.subr.mxu0 0.0
  %3808 = vmatpush1.msra.mxu0 %v3495
  %3809 = vmatprep.subr.mxu0 0.0
  %3810 = vmatpush1.msra.mxu0 %v3494
  %3811 = vmatprep.subr.mxu0 0.0
  %3812 = vmatpush1.msra.mxu0 %v3493
  %3813 = vmatprep.subr.mxu0 0.0
  %3814 = vmatpush1.msra.mxu0 %v3492
  %3815 = vmatprep.subr.mxu0 0.0
  %3816 = vmatpush1.msra.mxu0 %v3491
  %3817 = vmatprep.subr.mxu0 0.0
  %3818 = vmatpush1.msra.mxu0 %v3490
  %3819 = vmatprep.subr.mxu0 0.0
  %3820 = vmatpush1.msra.mxu0 %v3489
  %3821 = vmatprep.subr.mxu0 0.0
  %3822 = vmatpush2.msra.mxu0 0.0
  %3823 = vmatprep.subr.mxu0 0.0
  %3824 = vmatpush2.msra.mxu0 0.0
  %3825 = vmatprep.subr.mxu0 0.0
  %3826 = vmatpush2.msra.mxu0 0.0
  %3827 = vmatprep.subr.mxu0 0.0
  %3828 = vmatpush2.msra.mxu0 0.0
  %3829 = vmatprep.subr.mxu0 0.0
  %3830 = vmatpush2.msra.mxu0 0.0
  %3831 = vmatprep.subr.mxu0 0.0
  %3832 = vmatpush2.msra.mxu0 0.0
  %3833 = vmatprep.subr.mxu0 0.0
  %3834 = vmatpush2.msra.mxu0 0.0
  %3835 = vmatprep.subr.mxu0 0.0
  %3836 = vmatpush2.msra.mxu0 0.0
  %3837 = vmatprep.subr.mxu0 0.0
  %3838 = vmatpush2.msra.mxu0 0.0
  %3839 = vmatprep.subr.mxu0 0.0
  %3840 = vmatpush2.msra.mxu0 0.0
  %3841 = vmatprep.subr.mxu0 0.0
  %3842 = vmatpush2.msra.mxu0 0.0
  %3843 = vmatprep.subr.mxu0 0.0
  %3844 = vmatpush2.msra.mxu0 0.0
  %3845 = vmatprep.subr.mxu0 0.0
  %3846 = vmatpush2.msra.mxu0 0.0
  %3847 = vmatprep.subr.mxu0 0.0
  %3848 = vmatpush2.msra.mxu0 0.0
  %3849 = vmatprep.subr.mxu0 0.0
  %3850 = vmatpush2.msra.mxu0 0.0
  %3851 = vmatprep.subr.mxu0 0.0
  %3852 = vmatpush2.msra.mxu0 0.0
  %3853 = vmatprep.mubr.f32.mxu0 0.0
  %3854 = vmatmul.mubr.f32.gmra.mxu0 %v3787
  %v3855 = vpop.f32.mrf.mxu0
  %v3856 = vadd.f32 %v3589, %v3855
  %v3857 = vpop.f32.mrf.mxu0
  %3858 = vdwg.mxu0
  %v3860 = vrot.slane %v3311, 4
  %3862 = vmatprep.subr.mxu0 0.0
  %3863 = vmatpush1.msra.mxu0 %v3608
  %3864 = vmatprep.subr.mxu0 0.0
  %3865 = vmatpush1.msra.mxu0 %v3607
  %3866 = vmatprep.subr.mxu0 0.0
  %3867 = vmatpush1.msra.mxu0 %v3606
  %3868 = vmatprep.subr.mxu0 0.0
  %3869 = vmatpush1.msra.mxu0 %v3605
  %3870 = vmatprep.subr.mxu0 0.0
  %3871 = vmatpush1.msra.mxu0 %v3604
  %3872 = vmatprep.subr.mxu0 0.0
  %3873 = vmatpush1.msra.mxu0 %v3603
  %3874 = vmatprep.subr.mxu0 0.0
  %3875 = vmatpush1.msra.mxu0 %v3602
  %3876 = vmatprep.subr.mxu0 0.0
  %3877 = vmatpush1.msra.mxu0 %v3601
  %3878 = vmatprep.subr.mxu0 0.0
  %3879 = vmatpush1.msra.mxu0 %v3600
  %3880 = vmatprep.subr.mxu0 0.0
  %3881 = vmatpush1.msra.mxu0 %v3599
  %3882 = vmatprep.subr.mxu0 0.0
  %3883 = vmatpush1.msra.mxu0 %v3598
  %3884 = vmatprep.subr.mxu0 0.0
  %3885 = vmatpush1.msra.mxu0 %v3597
  %3886 = vmatprep.subr.mxu0 0.0
  %3887 = vmatpush1.msra.mxu0 %v3596
  %3888 = vmatprep.subr.mxu0 0.0
  %3889 = vmatpush1.msra.mxu0 %v3595
  %3890 = vmatprep.subr.mxu0 0.0
  %3891 = vmatpush1.msra.mxu0 %v3594
  %3892 = vmatprep.subr.mxu0 0.0
  %3893 = vmatpush1.msra.mxu0 %v3593
  %3894 = vmatprep.subr.mxu0 0.0
  %3895 = vmatpush2.msra.mxu0 0.0
  %3896 = vmatprep.subr.mxu0 0.0
  %3897 = vmatpush2.msra.mxu0 0.0
  %3898 = vmatprep.subr.mxu0 0.0
  %3899 = vmatpush2.msra.mxu0 0.0
  %3900 = vmatprep.subr.mxu0 0.0
  %3901 = vmatpush2.msra.mxu0 0.0
  %3902 = vmatprep.subr.mxu0 0.0
  %3903 = vmatpush2.msra.mxu0 0.0
  %3904 = vmatprep.subr.mxu0 0.0
  %3905 = vmatpush2.msra.mxu0 0.0
  %3906 = vmatprep.subr.mxu0 0.0
  %3907 = vmatpush2.msra.mxu0 0.0
  %3908 = vmatprep.subr.mxu0 0.0
  %3909 = vmatpush2.msra.mxu0 0.0
  %3910 = vmatprep.subr.mxu0 0.0
  %3911 = vmatpush2.msra.mxu0 0.0
  %3912 = vmatprep.subr.mxu0 0.0
  %3913 = vmatpush2.msra.mxu0 0.0
  %3914 = vmatprep.subr.mxu0 0.0
  %3915 = vmatpush2.msra.mxu0 0.0
  %3916 = vmatprep.subr.mxu0 0.0
  %3917 = vmatpush2.msra.mxu0 0.0
  %3918 = vmatprep.subr.mxu0 0.0
  %3919 = vmatpush2.msra.mxu0 0.0
  %3920 = vmatprep.subr.mxu0 0.0
  %3921 = vmatpush2.msra.mxu0 0.0
  %3922 = vmatprep.subr.mxu0 0.0
  %3923 = vmatpush2.msra.mxu0 0.0
  %3924 = vmatprep.subr.mxu0 0.0
  %3925 = vmatpush2.msra.mxu0 0.0
  %3926 = vmatprep.mubr.f32.mxu0 0.0
  %3927 = vmatmul.mubr.f32.gmra.mxu0 %v3860
  %v3928 = vpop.f32.mrf.mxu0
  %v3929 = vadd.f32 %v3693, %v3928
  %v3930 = vpop.f32.mrf.mxu0
  %3931 = vdwg.mxu0
  %v3932 = vadd.f32 %v3856, %v3929
  %v3933 = vadd.f32 %v3932, %v3783
  %v3934 = vadd.f32 %v3488, %v3933
  %v3935 = vmax.f32 %v3934, 0.0
  %v3936 = vld [vmem:[%s12] sm:$0xff]
  %v3937 = vld [vmem:[%s12 + $0x8] sm:$0xff]
  %v3938 = vld [vmem:[%s12 + $0x10] sm:$0xff]
  %v3939 = vld [vmem:[%s12 + $0x18] sm:$0xff]
  %v3940 = vld [vmem:[%s12 + $0x20] sm:$0xff]
  %v3941 = vld [vmem:[%s12 + $0x28] sm:$0xff]
  %v3942 = vld [vmem:[%s12 + $0x30] sm:$0xff]
  %v3943 = vld [vmem:[%s12 + $0x38] sm:$0xff]
  %v3944 = vld [vmem:[#allocation2] sm:$0x1]
  %v3946 = vlaneseq
  %v3947 = vshrl.u32 %v3946, 7
  %v3948 = vsub.s32 0, %v3947
  %v3949 = vrot.slane %v3944, %v3948
  %vm3951 = vcmask 523264
  %v3953 = vsel %vm3951, %v3935, 0
  %3955 = vmatprep.subr.mxu0 0.0
  %3956 = vmatpush1.msra.mxu0 0.0
  %3957 = vmatprep.subr.mxu0 0.0
  %3958 = vmatpush1.msra.mxu0 0.0
  %3959 = vmatprep.subr.mxu0 0.0
  %3960 = vmatpush1.msra.mxu0 0.0
  %3961 = vmatprep.subr.mxu0 0.0
  %3962 = vmatpush1.msra.mxu0 0.0
  %3963 = vmatprep.subr.mxu0 0.0
  %3964 = vmatpush1.msra.mxu0 0.0
  %3965 = vmatprep.subr.mxu0 0.0
  %3966 = vmatpush1.msra.mxu0 0.0
  %3967 = vmatprep.subr.mxu0 0.0
  %3968 = vmatpush1.msra.mxu0 0.0
  %3969 = vmatprep.subr.mxu0 0.0
  %3970 = vmatpush1.msra.mxu0 0.0
  %3971 = vmatprep.subr.mxu0 0.0
  %3972 = vmatpush1.msra.mxu0 %v3943
  %3973 = vmatprep.subr.mxu0 0.0
  %3974 = vmatpush1.msra.mxu0 %v3942
  %3975 = vmatprep.subr.mxu0 0.0
  %3976 = vmatpush1.msra.mxu0 %v3941
  %3977 = vmatprep.subr.mxu0 0.0
  %3978 = vmatpush1.msra.mxu0 %v3940
  %3979 = vmatprep.subr.mxu0 0.0
  %3980 = vmatpush1.msra.mxu0 %v3939
  %3981 = vmatprep.subr.mxu0 0.0
  %3982 = vmatpush1.msra.mxu0 %v3938
  %3983 = vmatprep.subr.mxu0 0.0
  %3984 = vmatpush1.msra.mxu0 %v3937
  %3985 = vmatprep.subr.mxu0 0.0
  %3986 = vmatpush1.msra.mxu0 %v3936
  %3987 = vmatprep.subr.mxu0 0.0
  %3988 = vmatpush2.msra.mxu0 0.0
  %3989 = vmatprep.subr.mxu0 0.0
  %3990 = vmatpush2.msra.mxu0 0.0
  %3991 = vmatprep.subr.mxu0 0.0
  %3992 = vmatpush2.msra.mxu0 0.0
  %3993 = vmatprep.subr.mxu0 0.0
  %3994 = vmatpush2.msra.mxu0 0.0
  %3995 = vmatprep.subr.mxu0 0.0
  %3996 = vmatpush2.msra.mxu0 0.0
  %3997 = vmatprep.subr.mxu0 0.0
  %3998 = vmatpush2.msra.mxu0 0.0
  %3999 = vmatprep.subr.mxu0 0.0
  %4000 = vmatpush2.msra.mxu0 0.0
  %4001 = vmatprep.subr.mxu0 0.0
  %4002 = vmatpush2.msra.mxu0 0.0
  %4003 = vmatprep.subr.mxu0 0.0
  %4004 = vmatpush2.msra.mxu0 0.0
  %4005 = vmatprep.subr.mxu0 0.0
  %4006 = vmatpush2.msra.mxu0 0.0
  %4007 = vmatprep.subr.mxu0 0.0
  %4008 = vmatpush2.msra.mxu0 0.0
  %4009 = vmatprep.subr.mxu0 0.0
  %4010 = vmatpush2.msra.mxu0 0.0
  %4011 = vmatprep.subr.mxu0 0.0
  %4012 = vmatpush2.msra.mxu0 0.0
  %4013 = vmatprep.subr.mxu0 0.0
  %4014 = vmatpush2.msra.mxu0 0.0
  %4015 = vmatprep.subr.mxu0 0.0
  %4016 = vmatpush2.msra.mxu0 0.0
  %4017 = vmatprep.subr.mxu0 0.0
  %4018 = vmatpush2.msra.mxu0 0.0
  %4019 = vmatprep.mubr.f32.mxu0 0.0
  %4020 = vmatmul.mubr.f32.gmra.mxu0 %v3953
  %v4021 = vpop.f32.mrf.mxu0
  %v4022 = vadd.f32 %v3949, %v4021
  %v4023 = vpop.f32.mrf.mxu0
  %4024 = vdwg.mxu0
  %vm4025 = vcmask 3072
  %4026 = vst.msk [vmem:[%s19] sm:$0xf] %vm4025, %v4022
  // Predicated region
  $region78: #{gat_critic_forward.1} parent=0 // pred_check
    _
  $region79: #{gat_critic_forward.1} parent=0 // pred_check_branch
    %4028 = sbr.rel (0) target = $region81
  $region80: #{gat_critic_forward.1} parent=0 // pred_region
    _
  $region81: #{gat_critic_forward.1} parent=0 // pred_fallthru
    _
  // Predicated region
  $region82: #{gat_critic_forward.1} parent=0 // pred_check
    _
  $region83: #{gat_critic_forward.1} parent=0 // pred_check_branch
    %4030 = sbr.rel (0) target = $region85
  $region84: #{gat_critic_forward.1} parent=0 // pred_region
    _
  $region85: #{gat_critic_forward.1} parent=0 // pred_fallthru
    _

</llo_original>
